<compile_context>
chip_gen: v7x
topology: tpu7x:2x2x1
jax: 0.10.0
libtpu: 0.0.40
codegen_flags: <defaults>
</compile_context>

<pallas_src>
import functools

import jax
import jax.numpy as jnp
from jax.experimental import pallas as pl
from jax.experimental.pallas import tpu as pltpu


# ----------------------------------------------------------------------------
# helpers
# ----------------------------------------------------------------------------
def _round_up(x, m):
    return ((x + m - 1) // m) * m


def _mosaic(sem):
    return pltpu.CompilerParams(
        dimension_semantics=(sem,),
        vmem_limit_bytes=48 * 1024 * 1024,
    )


# ----------------------------------------------------------------------------
# Pallas kernels
# ----------------------------------------------------------------------------
def _conv_lrelu_kernel(p_ref, w_ref, o_ref):
    # p_ref: [TM, K] bf16, w_ref: [K, Cpad] bf16, o_ref: [TM, Cpad] bf16
    y = jnp.dot(p_ref[...], w_ref[...], preferred_element_type=jnp.float32)
    y = jnp.where(y > 0, y, 0.2 * y)
    o_ref[...] = y.astype(o_ref.dtype)


def _conv_stats_kernel(p_ref, w_ref, y_ref, sum_ref, sq_ref):
    # Pass 1 of BN layers: matmul + per-channel sum / sum-of-squares.
    # sum_ref / sq_ref have a constant index map -> resident accumulators.
    y = jnp.dot(p_ref[...], w_ref[...], preferred_element_type=jnp.float32)

    @pl.when(pl.program_id(0) == 0)
    def _():
        sum_ref[...] = jnp.zeros_like(sum_ref)
        sq_ref[...] = jnp.zeros_like(sq_ref)

    sum_ref[...] += jnp.sum(y, axis=0, keepdims=True)
    sq_ref[...] += jnp.sum(y * y, axis=0, keepdims=True)
    y_ref[...] = y.astype(y_ref.dtype)


def _scale_shift_lrelu_kernel(y_ref, sc_ref, sh_ref, o_ref):
    # Pass 2 of BN layers: y*scale + shift, then LeakyReLU(0.2). f32 math.
    y = y_ref[...].astype(jnp.float32) * sc_ref[...] + sh_ref[...]
    o_ref[...] = jnp.where(y > 0, y, 0.2 * y).astype(o_ref.dtype)


# ----------------------------------------------------------------------------
# pallas_call wrappers (tiled over M)
# ----------------------------------------------------------------------------
def conv_lrelu_layer(patches, w_mat, tm):
    m_pad, k = patches.shape
    c_pad = w_mat.shape[1]
    return pl.pallas_call(
        _conv_lrelu_kernel,
        out_shape=jax.ShapeDtypeStruct((m_pad, c_pad), jnp.bfloat16),
        grid=(m_pad // tm,),
        in_specs=[
            pl.BlockSpec((tm, k), lambda i: (i, 0)),
            pl.BlockSpec((k, c_pad), lambda i: (0, 0)),  # weights stay resident
        ],
        out_specs=pl.BlockSpec((tm, c_pad), lambda i: (i, 0)),
        compiler_params=_mosaic("parallel"),
    )(patches, w_mat)


def conv_stats_layer(patches, w_mat, tm):
    m_pad, k = patches.shape
    c_pad = w_mat.shape[1]
    return pl.pallas_call(
        _conv_stats_kernel,
        out_shape=(
            jax.ShapeDtypeStruct((m_pad, c_pad), jnp.bfloat16),
            jax.ShapeDtypeStruct((1, c_pad), jnp.float32),
            jax.ShapeDtypeStruct((1, c_pad), jnp.float32),
        ),
        grid=(m_pad // tm,),
        in_specs=[
            pl.BlockSpec((tm, k), lambda i: (i, 0)),
            pl.BlockSpec((k, c_pad), lambda i: (0, 0)),
        ],
        out_specs=(
            pl.BlockSpec((tm, c_pad), lambda i: (i, 0)),
            pl.BlockSpec((1, c_pad), lambda i: (0, 0)),  # cross-grid accumulator
            pl.BlockSpec((1, c_pad), lambda i: (0, 0)),
        ),
        compiler_params=_mosaic("arbitrary"),  # reduction across the grid
    )(patches, w_mat)


def bn_act_layer(y, scale, shift, tm):
    m_pad, c_pad = y.shape
    return pl.pallas_call(
        _scale_shift_lrelu_kernel,
        out_shape=jax.ShapeDtypeStruct((m_pad, c_pad), jnp.bfloat16),
        grid=(m_pad // tm,),
        in_specs=[
            pl.BlockSpec((tm, c_pad), lambda i: (i, 0)),
            pl.BlockSpec((1, c_pad), lambda i: (0, 0)),
            pl.BlockSpec((1, c_pad), lambda i: (0, 0)),
        ],
        out_specs=pl.BlockSpec((tm, c_pad), lambda i: (i, 0)),
        compiler_params=_mosaic("parallel"),
    )(y, scale, shift)


# ----------------------------------------------------------------------------
# XLA glue: im2col (kept in bf16), weight layout conversion
# ----------------------------------------------------------------------------
def im2col(x_nhwc, k, stride, pad):
    """[N,H,W,C] -> patches [N*Ho*Wo, k*k*C], patch dim ordered (kh, kw, cin)."""
    x = jnp.pad(x_nhwc, ((0, 0), (pad, pad), (pad, pad), (0, 0)))
    n, h, w, c = x.shape
    ho = (h - k) // stride + 1
    wo = (w - k) // stride + 1
    parts = []
    for i in range(k):
        for j in range(k):
            parts.append(
                x[:, i : i + stride * ho : stride, j : j + stride * wo : stride, :]
            )
    p = jnp.stack(parts, axis=3)  # [N, Ho, Wo, k*k, C]
    return p.reshape(n * ho * wo, k * k * c), (n, ho, wo)


def conv_weight_to_mat(w_oihw, c_out_pad):
    """PyTorch [Cout,Cin,Kh,Kw] -> bf16 [Kh*Kw*Cin, Cout_pad] (zero-padded)."""
    c_out, c_in, kh, kw = w_oihw.shape
    w = jnp.transpose(w_oihw, (2, 3, 1, 0)).reshape(kh * kw * c_in, c_out)
    if c_out_pad > c_out:
        w = jnp.pad(w, ((0, 0), (0, c_out_pad - c_out)))
    return w.astype(jnp.bfloat16)


def _pad_cols(a, c_pad):
    return jnp.pad(a.astype(jnp.float32), ((0, 0), (0, c_pad - a.shape[1])))


# ----------------------------------------------------------------------------
# Parameters (fresh-module semantics: BN gamma=1, beta=0)
# ----------------------------------------------------------------------------
def init_params(key, model_cfg):
    img_channel = model_cfg["img_channel"]
    ndf = model_cfg["ndf"]
    shapes = [
        (ndf, img_channel, 4, 4),
        (ndf * 2, ndf, 4, 4),
        (ndf * 4, ndf * 2, 4, 4),
        (ndf * 8, ndf * 4, 4, 4),
        (1, ndf * 8, 4, 4),
    ]
    keys = jax.random.split(key, len(shapes))
    params = {}
    for i, s in enumerate(shapes):
        params[f"conv{i + 1}_w"] = 0.02 * jax.random.normal(keys[i], s, jnp.float32)
    for name, c in (("bn2", ndf * 2), ("bn3", ndf * 4), ("bn4", ndf * 8)):
        params[f"{name}_gamma"] = jnp.ones((1, c), jnp.float32)
        params[f"{name}_beta"] = jnp.zeros((1, c), jnp.float32)
    return params


# ----------------------------------------------------------------------------
# Forward pass
# ----------------------------------------------------------------------------
def discriminator_forward(x_nchw, params):
    # NCHW -> NHWC, bf16 feed for the MXU / to halve im2col HBM traffic.
    x = jnp.transpose(x_nchw, (0, 2, 3, 1)).astype(jnp.bfloat16)

    layer_cfg = [
        # (weight, gamma, beta, use_bn)
        ("conv1_w", None, None, False),
        ("conv2_w", "bn2_gamma", "bn2_beta", True),
        ("conv3_w", "bn3_gamma", "bn3_beta", True),
        ("conv4_w", "bn4_gamma", "bn4_beta", True),
    ]

    for w_name, g_name, b_name, use_bn in layer_cfg:
        w = params[w_name]
        c_out = w.shape[0]
        c_pad = _round_up(c_out, 128)          # lane-dense output stores

        patches, (n, ho, wo) = im2col(x, k=4, stride=2, pad=1)
        m = patches.shape[0]
        tm = min(512, _round_up(m, 16))        # bf16 sublane-aligned tile
        m_pad = _round_up(m, tm)
        if m_pad > m:                          # zero rows: contribute 0 to stats
            patches = jnp.pad(patches, ((0, m_pad - m), (0, 0)))
        w_mat = conv_weight_to_mat(w, c_pad)

        if use_bn:
            y, ssum, ssq = conv_stats_layer(patches, w_mat, tm)
            # BatchNorm2d training-mode batch stats (biased var), f32, tiny [1,C].
            mean = ssum / m
            var = jnp.maximum(ssq / m - mean * mean, 0.0)
            gamma = _pad_cols(params[g_name], c_pad)
            beta = _pad_cols(params[b_name], c_pad)
            scale = gamma * jax.lax.rsqrt(var + 1e-5)
            shift = beta - mean * scale
            y = bn_act_layer(y, scale, shift, tm)
        else:
            y = conv_lrelu_layer(patches, w_mat, tm)

        # Drop the M/channel padding; back to NHWC for the next layer.
        x = y[:m, :c_out].reshape(n, ho, wo, c_out)

    # conv5: 4x4 valid conv -> [N,1,1,1]. Tiny matvec (Cout=1, M=batch):
    # plain JAX + sigmoid; a Pallas launch here would be pure overhead.
    n = x.shape[0]
    w5 = params["conv5_w"]
    w5_mat = jnp.transpose(w5, (2, 3, 1, 0)).reshape(-1, 1).astype(jnp.float32)
    logits = x.reshape(n, -1).astype(jnp.float32) @ w5_mat
    return jax.nn.sigmoid(logits)              # == torch x.view(-1, 1)


# ----------------------------------------------------------------------------
# Pure-JAX reference (f32) for a sanity check
# ----------------------------------------------------------------------------
def _reference_forward(x_nchw, params):
    x = jnp.transpose(x_nchw, (0, 2, 3, 1)).astype(jnp.float32)

    def conv(x, w, stride, pad):
        return jax.lax.conv_general_dilated(
            x, jnp.transpose(w, (2, 3, 1, 0)),
            window_strides=(stride, stride),
            padding=[(pad, pad), (pad, pad)],
            dimension_numbers=("NHWC", "HWIO", "NHWC"))

    def lrelu(v):
        return jnp.where(v > 0, v, 0.2 * v)

    def bn(v, g, b):
        mean = jnp.mean(v, axis=(0, 1, 2), keepdims=True)
        var = jnp.var(v, axis=(0, 1, 2), keepdims=True)
        return (v - mean) * jax.lax.rsqrt(var + 1e-5) * g.reshape(1, 1, 1, -1) \
            + b.reshape(1, 1, 1, -1)

    x = lrelu(conv(x, params["conv1_w"], 2, 1))
    x = lrelu(bn(conv(x, params["conv2_w"], 2, 1), params["bn2_gamma"], params["bn2_beta"]))
    x = lrelu(bn(conv(x, params["conv3_w"], 2, 1), params["bn3_gamma"], params["bn3_beta"]))
    x = lrelu(bn(conv(x, params["conv4_w"], 2, 1), params["bn4_gamma"], params["bn4_beta"]))
    x = jax.nn.sigmoid(conv(x, params["conv5_w"], 1, 0))
    return x.reshape(-1, 1)


if __name__ == "__main__":
    # Small config (architecture needs 64x64 input so conv5 reduces 4x4 -> 1x1).
    model_cfg = {"nz": 100, "ngf": 8, "ndf": 8, "img_channel": 3}
    batch = 2

    key = jax.random.PRNGKey(0)
    pkey, xkey = jax.random.split(key)
    params = init_params(pkey, model_cfg)
    x = jax.random.normal(
        xkey, (batch, model_cfg["img_channel"], 64, 64), jnp.float32
    )

    out = jax.jit(discriminator_forward)(x, params)
    out = jax.block_until_ready(out)

    assert out.shape == (batch, 1), out.shape
    assert bool(jnp.all(jnp.isfinite(out)))
    assert bool(jnp.all((out >= 0.0) & (out <= 1.0)))  # sigmoid range

    ref = jax.jit(_reference_forward)(x, params)
    ref = jax.block_until_ready(ref)
    max_diff = float(jnp.max(jnp.abs(out.astype(jnp.float32) - ref)))
    assert max_diff < 0.1, f"mismatch vs reference: {max_diff}"

    print("KERNEL_OK")
</pallas_src>

<mosaic_0001>
module attributes {stable_mosaic.version = 11 : i64} {
  func.func @_conv_lrelu_kernel(%arg0: i32, %arg1: memref<512x48xbf16, #tpu.memory_space<vmem>>, %arg2: memref<48x128xbf16, #tpu.memory_space<vmem>>, %arg3: memref<512x128xbf16, #tpu.memory_space<vmem>>) attributes {dimension_semantics = [#tpu.dimension_semantics<parallel>], iteration_bounds = array<i64: 4>, scalar_prefetch = 0 : i64, scratch_operands = 0 : i64, tpu.core_type = #tpu.core_type<tc>, window_params = [{transform_indices = @transform_0, window_bounds = array<i64: 512, 48>}, {pipeline_mode = #tpu.pipeline_mode<synchronous>, transform_indices = @transform_1, window_bounds = array<i64: 48, 128>}, {transform_indices = @transform_2, window_bounds = array<i64: 512, 128>}]} {
    %c0 = arith.constant 0 : index
    %c0_0 = arith.constant 0 : index
    %0 = vector.load %arg1[%c0, %c0_0] : memref<512x48xbf16, #tpu.memory_space<vmem>>, vector<512x48xbf16>
    %c0_1 = arith.constant 0 : index
    %c0_2 = arith.constant 0 : index
    %1 = vector.load %arg2[%c0_1, %c0_2] : memref<48x128xbf16, #tpu.memory_space<vmem>>, vector<48x128xbf16>
    %cst = arith.constant dense<0.000000e+00> : vector<512x128xf32>
    %2 = tpu.matmul %0, %1, %cst {dimension_numbers = #tpu.dot_dimension_numbers<[1], [0], [0], [1], [0, 0, 1, 1], [], []>} : vector<512x48xbf16>, vector<48x128xbf16>, vector<512x128xf32> -> vector<512x128xf32>
    %cst_3 = arith.constant 0.000000e+00 : f32
    %3 = vector.broadcast %cst_3 : f32 to vector<512x128xf32>
    %4 = arith.cmpf ogt, %2, %3 : vector<512x128xf32>
    %cst_4 = arith.constant 2.000000e-01 : f32
    %5 = vector.broadcast %cst_4 : f32 to vector<512x128xf32>
    %6 = arith.mulf %5, %2 : vector<512x128xf32>
    %7 = arith.select %4, %2, %6 : vector<512x128xi1>, vector<512x128xf32>
    %8 = arith.truncf %7 : vector<512x128xf32> to vector<512x128xbf16>
    %c0_5 = arith.constant 0 : index
    %c0_6 = arith.constant 0 : index
    %9 = vector.load %arg3[%c0_5, %c0_6] : memref<512x128xbf16, #tpu.memory_space<vmem>>, vector<512x128xbf16>
    tpu.vector_store %arg3[%c0_5, %c0_6], %8 {strides = array<i32>} : memref<512x128xbf16, #tpu.memory_space<vmem>>, vector<512x128xbf16>,
    return
  }
  func.func @transform_0(%arg0: i32) -> (i32, i32) {
    %c0_i32 = arith.constant 0 : i32
    %c0_i32_0 = arith.constant 0 : i32
    return %arg0, %c0_i32 : i32, i32
  }
  func.func @transform_1(%arg0: i32) -> (i32, i32) {
    %c0_i32 = arith.constant 0 : i32
    %c0_i32_0 = arith.constant 0 : i32
    %c0_i32_1 = arith.constant 0 : i32
    return %c0_i32, %c0_i32_0 : i32, i32
  }
  func.func @transform_2(%arg0: i32) -> (i32, i32) {
    %c0_i32 = arith.constant 0 : i32
    %c0_i32_0 = arith.constant 0 : i32
    return %arg0, %c0_i32 : i32, i32
  }
}

module attributes {stable_mosaic.version = 11 : i64} {
  func.func @_conv_stats_kernel(%arg0: i32, %arg1: memref<512x128xbf16, #tpu.memory_space<vmem>>, %arg2: memref<128x128xbf16, #tpu.memory_space<vmem>>, %arg3: memref<512x128xbf16, #tpu.memory_space<vmem>>, %arg4: memref<1x128xf32, #tpu.memory_space<vmem>>, %arg5: memref<1x128xf32, #tpu.memory_space<vmem>>) attributes {dimension_semantics = [#tpu.dimension_semantics<arbitrary>], iteration_bounds = array<i64: 1>, scalar_prefetch = 0 : i64, scratch_operands = 0 : i64, tpu.core_type = #tpu.core_type<tc>, window_params = [{transform_indices = @transform_0, window_bounds = array<i64: 512, 128>}, {pipeline_mode = #tpu.pipeline_mode<synchronous>, transform_indices = @transform_1, window_bounds = array<i64: 128, 128>}, {transform_indices = @transform_2, window_bounds = array<i64: 512, 128>}, {pipeline_mode = #tpu.pipeline_mode<synchronous>, transform_indices = @transform_3, window_bounds = array<i64: 1, 128>}, {pipeline_mode = #tpu.pipeline_mode<synchronous>, transform_indices = @transform_4, window_bounds = array<i64: 1, 128>}]} {
    %c0 = arith.constant 0 : index
    %c0_0 = arith.constant 0 : index
    %0 = vector.load %arg1[%c0, %c0_0] : memref<512x128xbf16, #tpu.memory_space<vmem>>, vector<512x128xbf16>
    %c0_1 = arith.constant 0 : index
    %c0_2 = arith.constant 0 : index
    %1 = vector.load %arg2[%c0_1, %c0_2] : memref<128x128xbf16, #tpu.memory_space<vmem>>, vector<128x128xbf16>
    %cst = arith.constant dense<0.000000e+00> : vector<512x128xf32>
    %2 = tpu.matmul %0, %1, %cst {dimension_numbers = #tpu.dot_dimension_numbers<[1], [0], [0], [1], [0, 0, 1, 1], [], []>} : vector<512x128xbf16>, vector<128x128xbf16>, vector<512x128xf32> -> vector<512x128xf32>
    %c0_i32 = arith.constant 0 : i32
    %3 = arith.cmpi eq, %arg0, %c0_i32 : i32
    %4 = arith.extui %3 : i1 to i32
    %c0_i32_3 = arith.constant 0 : i32
    %5 = arith.cmpi ne, %4, %c0_i32_3 : i32
    scf.if %5 {
      %cst_16 = arith.constant 0.000000e+00 : f32
      %19 = vector.broadcast %cst_16 : f32 to vector<1x128xf32>
      %c0_17 = arith.constant 0 : index
      %c0_18 = arith.constant 0 : index
      %20 = vector.load %arg4[%c0_17, %c0_18] : memref<1x128xf32, #tpu.memory_space<vmem>>, vector<1x128xf32>
      tpu.vector_store %arg4[%c0_17, %c0_18], %19 {strides = array<i32>} : memref<1x128xf32, #tpu.memory_space<vmem>>, vector<1x128xf32>,
      %cst_19 = arith.constant 0.000000e+00 : f32
      %21 = vector.broadcast %cst_19 : f32 to vector<1x128xf32>
      %c0_20 = arith.constant 0 : index
      %c0_21 = arith.constant 0 : index
      %22 = vector.load %arg5[%c0_20, %c0_21] : memref<1x128xf32, #tpu.memory_space<vmem>>, vector<1x128xf32>
      tpu.vector_store %arg5[%c0_20, %c0_21], %21 {strides = array<i32>} : memref<1x128xf32, #tpu.memory_space<vmem>>, vector<1x128xf32>,
    } else {
    }
    %c0_4 = arith.constant 0 : index
    %c0_5 = arith.constant 0 : index
    %6 = vector.load %arg4[%c0_4, %c0_5] : memref<1x128xf32, #tpu.memory_space<vmem>>, vector<1x128xf32>
    %cst_6 = arith.constant dense<0.000000e+00> : vector<128xf32>
    %7 = vector.multi_reduction <add>, %2, %cst_6 [0] : vector<512x128xf32> to vector<128xf32>
    %8 = vector.shape_cast %7 : vector<128xf32> to vector<1x128xf32>
    %9 = arith.addf %6, %8 : vector<1x128xf32>
    %c0_7 = arith.constant 0 : index
    %c0_8 = arith.constant 0 : index
    %10 = vector.load %arg4[%c0_7, %c0_8] : memref<1x128xf32, #tpu.memory_space<vmem>>, vector<1x128xf32>
    tpu.vector_store %arg4[%c0_7, %c0_8], %9 {strides = array<i32>} : memref<1x128xf32, #tpu.memory_space<vmem>>, vector<1x128xf32>,
    %c0_9 = arith.constant 0 : index
    %c0_10 = arith.constant 0 : index
    %11 = vector.load %arg5[%c0_9, %c0_10] : memref<1x128xf32, #tpu.memory_space<vmem>>, vector<1x128xf32>
    %12 = arith.mulf %2, %2 : vector<512x128xf32>
    %cst_11 = arith.constant dense<0.000000e+00> : vector<128xf32>
    %13 = vector.multi_reduction <add>, %12, %cst_11 [0] : vector<512x128xf32> to vector<128xf32>
    %14 = vector.shape_cast %13 : vector<128xf32> to vector<1x128xf32>
    %15 = arith.addf %11, %14 : vector<1x128xf32>
    %c0_12 = arith.constant 0 : index
    %c0_13 = arith.constant 0 : index
    %16 = vector.load %arg5[%c0_12, %c0_13] : memref<1x128xf32, #tpu.memory_space<vmem>>, vector<1x128xf32>
    tpu.vector_store %arg5[%c0_12, %c0_13], %15 {strides = array<i32>} : memref<1x128xf32, #tpu.memory_space<vmem>>, vector<1x128xf32>,
    %17 = arith.truncf %2 : vector<512x128xf32> to vector<512x128xbf16>
    %c0_14 = arith.constant 0 : index
    %c0_15 = arith.constant 0 : index
    %18 = vector.load %arg3[%c0_14, %c0_15] : memref<512x128xbf16, #tpu.memory_space<vmem>>, vector<512x128xbf16>
    tpu.vector_store %arg3[%c0_14, %c0_15], %17 {strides = array<i32>} : memref<512x128xbf16, #tpu.memory_space<vmem>>, vector<512x128xbf16>,
    return
  }
  func.func @transform_0(%arg0: i32) -> (i32, i32) {
    %c0_i32 = arith.constant 0 : i32
    %c0_i32_0 = arith.constant 0 : i32
    return %arg0, %c0_i32 : i32, i32
  }
  func.func @transform_1(%arg0: i32) -> (i32, i32) {
    %c0_i32 = arith.constant 0 : i32
    %c0_i32_0 = arith.constant 0 : i32
    %c0_i32_1 = arith.constant 0 : i32
    return %c0_i32, %c0_i32_0 : i32, i32
  }
  func.func @transform_2(%arg0: i32) -> (i32, i32) {
    %c0_i32 = arith.constant 0 : i32
    %c0_i32_0 = arith.constant 0 : i32
    return %arg0, %c0_i32 : i32, i32
  }
  func.func @transform_3(%arg0: i32) -> (i32, i32) {
    %c0_i32 = arith.constant 0 : i32
    %c0_i32_0 = arith.constant 0 : i32
    %c0_i32_1 = arith.constant 0 : i32
    return %c0_i32, %c0_i32_0 : i32, i32
  }
  func.func @transform_4(%arg0: i32) -> (i32, i32) {
    %c0_i32 = arith.constant 0 : i32
    %c0_i32_0 = arith.constant 0 : i32
    %c0_i32_1 = arith.constant 0 : i32
    return %c0_i32, %c0_i32_0 : i32, i32
  }
}

module attributes {stable_mosaic.version = 11 : i64} {
  func.func @_scale_shift_lrelu_kernel(%arg0: i32, %arg1: memref<512x128xbf16, #tpu.memory_space<vmem>>, %arg2: memref<1x128xf32, #tpu.memory_space<vmem>>, %arg3: memref<1x128xf32, #tpu.memory_space<vmem>>, %arg4: memref<512x128xbf16, #tpu.memory_space<vmem>>) attributes {dimension_semantics = [#tpu.dimension_semantics<parallel>], iteration_bounds = array<i64: 1>, scalar_prefetch = 0 : i64, scratch_operands = 0 : i64, tpu.core_type = #tpu.core_type<tc>, window_params = [{transform_indices = @transform_0, window_bounds = array<i64: 512, 128>}, {pipeline_mode = #tpu.pipeline_mode<synchronous>, transform_indices = @transform_1, window_bounds = array<i64: 1, 128>}, {pipeline_mode = #tpu.pipeline_mode<synchronous>, transform_indices = @transform_2, window_bounds = array<i64: 1, 128>}, {transform_indices = @transform_3, window_bounds = array<i64: 512, 128>}]} {
    %c0 = arith.constant 0 : index
    %c0_0 = arith.constant 0 : index
    %0 = vector.load %arg1[%c0, %c0_0] : memref<512x128xbf16, #tpu.memory_space<vmem>>, vector<512x128xbf16>
    %1 = arith.extf %0 : vector<512x128xbf16> to vector<512x128xf32>
    %c0_1 = arith.constant 0 : index
    %c0_2 = arith.constant 0 : index
    %2 = vector.load %arg2[%c0_1, %c0_2] : memref<1x128xf32, #tpu.memory_space<vmem>>, vector<1x128xf32>
    %3 = vector.broadcast %2 : vector<1x128xf32> to vector<512x128xf32>
    %4 = arith.mulf %1, %3 : vector<512x128xf32>
    %c0_3 = arith.constant 0 : index
    %c0_4 = arith.constant 0 : index
    %5 = vector.load %arg3[%c0_3, %c0_4] : memref<1x128xf32, #tpu.memory_space<vmem>>, vector<1x128xf32>
    %6 = vector.broadcast %5 : vector<1x128xf32> to vector<512x128xf32>
    %7 = arith.addf %4, %6 : vector<512x128xf32>
    %cst = arith.constant 0.000000e+00 : f32
    %8 = vector.broadcast %cst : f32 to vector<512x128xf32>
    %9 = arith.cmpf ogt, %7, %8 : vector<512x128xf32>
    %cst_5 = arith.constant 2.000000e-01 : f32
    %10 = vector.broadcast %cst_5 : f32 to vector<512x128xf32>
    %11 = arith.mulf %10, %7 : vector<512x128xf32>
    %12 = arith.select %9, %7, %11 : vector<512x128xi1>, vector<512x128xf32>
    %13 = arith.truncf %12 : vector<512x128xf32> to vector<512x128xbf16>
    %c0_6 = arith.constant 0 : index
    %c0_7 = arith.constant 0 : index
    %14 = vector.load %arg4[%c0_6, %c0_7] : memref<512x128xbf16, #tpu.memory_space<vmem>>, vector<512x128xbf16>
    tpu.vector_store %arg4[%c0_6, %c0_7], %13 {strides = array<i32>} : memref<512x128xbf16, #tpu.memory_space<vmem>>, vector<512x128xbf16>,
    return
  }
  func.func @transform_0(%arg0: i32) -> (i32, i32) {
    %c0_i32 = arith.constant 0 : i32
    %c0_i32_0 = arith.constant 0 : i32
    return %arg0, %c0_i32 : i32, i32
  }
  func.func @transform_1(%arg0: i32) -> (i32, i32) {
    %c0_i32 = arith.constant 0 : i32
    %c0_i32_0 = arith.constant 0 : i32
    %c0_i32_1 = arith.constant 0 : i32
    return %c0_i32, %c0_i32_0 : i32, i32
  }
  func.func @transform_2(%arg0: i32) -> (i32, i32) {
    %c0_i32 = arith.constant 0 : i32
    %c0_i32_0 = arith.constant 0 : i32
    %c0_i32_1 = arith.constant 0 : i32
    return %c0_i32, %c0_i32_0 : i32, i32
  }
  func.func @transform_3(%arg0: i32) -> (i32, i32) {
    %c0_i32 = arith.constant 0 : i32
    %c0_i32_0 = arith.constant 0 : i32
    return %arg0, %c0_i32 : i32, i32
  }
}

module attributes {stable_mosaic.version = 11 : i64} {
  func.func @_conv_stats_kernel(%arg0: i32, %arg1: memref<128x256xbf16, #tpu.memory_space<vmem>>, %arg2: memref<256x128xbf16, #tpu.memory_space<vmem>>, %arg3: memref<128x128xbf16, #tpu.memory_space<vmem>>, %arg4: memref<1x128xf32, #tpu.memory_space<vmem>>, %arg5: memref<1x128xf32, #tpu.memory_space<vmem>>) attributes {dimension_semantics = [#tpu.dimension_semantics<arbitrary>], iteration_bounds = array<i64: 1>, scalar_prefetch = 0 : i64, scratch_operands = 0 : i64, tpu.core_type = #tpu.core_type<tc>, window_params = [{transform_indices = @transform_0, window_bounds = array<i64: 128, 256>}, {pipeline_mode = #tpu.pipeline_mode<synchronous>, transform_indices = @transform_1, window_bounds = array<i64: 256, 128>}, {transform_indices = @transform_2, window_bounds = array<i64: 128, 128>}, {pipeline_mode = #tpu.pipeline_mode<synchronous>, transform_indices = @transform_3, window_bounds = array<i64: 1, 128>}, {pipeline_mode = #tpu.pipeline_mode<synchronous>, transform_indices = @transform_4, window_bounds = array<i64: 1, 128>}]} {
    %c0 = arith.constant 0 : index
    %c0_0 = arith.constant 0 : index
    %0 = vector.load %arg1[%c0, %c0_0] : memref<128x256xbf16, #tpu.memory_space<vmem>>, vector<128x256xbf16>
    %c0_1 = arith.constant 0 : index
    %c0_2 = arith.constant 0 : index
    %1 = vector.load %arg2[%c0_1, %c0_2] : memref<256x128xbf16, #tpu.memory_space<vmem>>, vector<256x128xbf16>
    %cst = arith.constant dense<0.000000e+00> : vector<128x128xf32>
    %2 = tpu.matmul %0, %1, %cst {dimension_numbers = #tpu.dot_dimension_numbers<[1], [0], [0], [1], [0, 0, 1, 1], [], []>} : vector<128x256xbf16>, vector<256x128xbf16>, vector<128x128xf32> -> vector<128x128xf32>
    %c0_i32 = arith.constant 0 : i32
    %3 = arith.cmpi eq, %arg0, %c0_i32 : i32
    %4 = arith.extui %3 : i1 to i32
    %c0_i32_3 = arith.constant 0 : i32
    %5 = arith.cmpi ne, %4, %c0_i32_3 : i32
    scf.if %5 {
      %cst_16 = arith.constant 0.000000e+00 : f32
      %19 = vector.broadcast %cst_16 : f32 to vector<1x128xf32>
      %c0_17 = arith.constant 0 : index
      %c0_18 = arith.constant 0 : index
      %20 = vector.load %arg4[%c0_17, %c0_18] : memref<1x128xf32, #tpu.memory_space<vmem>>, vector<1x128xf32>
      tpu.vector_store %arg4[%c0_17, %c0_18], %19 {strides = array<i32>} : memref<1x128xf32, #tpu.memory_space<vmem>>, vector<1x128xf32>,
      %cst_19 = arith.constant 0.000000e+00 : f32
      %21 = vector.broadcast %cst_19 : f32 to vector<1x128xf32>
      %c0_20 = arith.constant 0 : index
      %c0_21 = arith.constant 0 : index
      %22 = vector.load %arg5[%c0_20, %c0_21] : memref<1x128xf32, #tpu.memory_space<vmem>>, vector<1x128xf32>
      tpu.vector_store %arg5[%c0_20, %c0_21], %21 {strides = array<i32>} : memref<1x128xf32, #tpu.memory_space<vmem>>, vector<1x128xf32>,
    } else {
    }
    %c0_4 = arith.constant 0 : index
    %c0_5 = arith.constant 0 : index
    %6 = vector.load %arg4[%c0_4, %c0_5] : memref<1x128xf32, #tpu.memory_space<vmem>>, vector<1x128xf32>
    %cst_6 = arith.constant dense<0.000000e+00> : vector<128xf32>
    %7 = vector.multi_reduction <add>, %2, %cst_6 [0] : vector<128x128xf32> to vector<128xf32>
    %8 = vector.shape_cast %7 : vector<128xf32> to vector<1x128xf32>
    %9 = arith.addf %6, %8 : vector<1x128xf32>
    %c0_7 = arith.constant 0 : index
    %c0_8 = arith.constant 0 : index
    %10 = vector.load %arg4[%c0_7, %c0_8] : memref<1x128xf32, #tpu.memory_space<vmem>>, vector<1x128xf32>
    tpu.vector_store %arg4[%c0_7, %c0_8], %9 {strides = array<i32>} : memref<1x128xf32, #tpu.memory_space<vmem>>, vector<1x128xf32>,
    %c0_9 = arith.constant 0 : index
    %c0_10 = arith.constant 0 : index
    %11 = vector.load %arg5[%c0_9, %c0_10] : memref<1x128xf32, #tpu.memory_space<vmem>>, vector<1x128xf32>
    %12 = arith.mulf %2, %2 : vector<128x128xf32>
    %cst_11 = arith.constant dense<0.000000e+00> : vector<128xf32>
    %13 = vector.multi_reduction <add>, %12, %cst_11 [0] : vector<128x128xf32> to vector<128xf32>
    %14 = vector.shape_cast %13 : vector<128xf32> to vector<1x128xf32>
    %15 = arith.addf %11, %14 : vector<1x128xf32>
    %c0_12 = arith.constant 0 : index
    %c0_13 = arith.constant 0 : index
    %16 = vector.load %arg5[%c0_12, %c0_13] : memref<1x128xf32, #tpu.memory_space<vmem>>, vector<1x128xf32>
    tpu.vector_store %arg5[%c0_12, %c0_13], %15 {strides = array<i32>} : memref<1x128xf32, #tpu.memory_space<vmem>>, vector<1x128xf32>,
    %17 = arith.truncf %2 : vector<128x128xf32> to vector<128x128xbf16>
    %c0_14 = arith.constant 0 : index
    %c0_15 = arith.constant 0 : index
    %18 = vector.load %arg3[%c0_14, %c0_15] : memref<128x128xbf16, #tpu.memory_space<vmem>>, vector<128x128xbf16>
    tpu.vector_store %arg3[%c0_14, %c0_15], %17 {strides = array<i32>} : memref<128x128xbf16, #tpu.memory_space<vmem>>, vector<128x128xbf16>,
    return
  }
  func.func @transform_0(%arg0: i32) -> (i32, i32) {
    %c0_i32 = arith.constant 0 : i32
    %c0_i32_0 = arith.constant 0 : i32
    return %arg0, %c0_i32 : i32, i32
  }
  func.func @transform_1(%arg0: i32) -> (i32, i32) {
    %c0_i32 = arith.constant 0 : i32
    %c0_i32_0 = arith.constant 0 : i32
    %c0_i32_1 = arith.constant 0 : i32
    return %c0_i32, %c0_i32_0 : i32, i32
  }
  func.func @transform_2(%arg0: i32) -> (i32, i32) {
    %c0_i32 = arith.constant 0 : i32
    %c0_i32_0 = arith.constant 0 : i32
    return %arg0, %c0_i32 : i32, i32
  }
  func.func @transform_3(%arg0: i32) -> (i32, i32) {
    %c0_i32 = arith.constant 0 : i32
    %c0_i32_0 = arith.constant 0 : i32
    %c0_i32_1 = arith.constant 0 : i32
    return %c0_i32, %c0_i32_0 : i32, i32
  }
  func.func @transform_4(%arg0: i32) -> (i32, i32) {
    %c0_i32 = arith.constant 0 : i32
    %c0_i32_0 = arith.constant 0 : i32
    %c0_i32_1 = arith.constant 0 : i32
    return %c0_i32, %c0_i32_0 : i32, i32
  }
}

module attributes {stable_mosaic.version = 11 : i64} {
  func.func @_scale_shift_lrelu_kernel(%arg0: i32, %arg1: memref<128x128xbf16, #tpu.memory_space<vmem>>, %arg2: memref<1x128xf32, #tpu.memory_space<vmem>>, %arg3: memref<1x128xf32, #tpu.memory_space<vmem>>, %arg4: memref<128x128xbf16, #tpu.memory_space<vmem>>) attributes {dimension_semantics = [#tpu.dimension_semantics<parallel>], iteration_bounds = array<i64: 1>, scalar_prefetch = 0 : i64, scratch_operands = 0 : i64, tpu.core_type = #tpu.core_type<tc>, window_params = [{transform_indices = @transform_0, window_bounds = array<i64: 128, 128>}, {pipeline_mode = #tpu.pipeline_mode<synchronous>, transform_indices = @transform_1, window_bounds = array<i64: 1, 128>}, {pipeline_mode = #tpu.pipeline_mode<synchronous>, transform_indices = @transform_2, window_bounds = array<i64: 1, 128>}, {transform_indices = @transform_3, window_bounds = array<i64: 128, 128>}]} {
    %c0 = arith.constant 0 : index
    %c0_0 = arith.constant 0 : index
    %0 = vector.load %arg1[%c0, %c0_0] : memref<128x128xbf16, #tpu.memory_space<vmem>>, vector<128x128xbf16>
    %1 = arith.extf %0 : vector<128x128xbf16> to vector<128x128xf32>
    %c0_1 = arith.constant 0 : index
    %c0_2 = arith.constant 0 : index
    %2 = vector.load %arg2[%c0_1, %c0_2] : memref<1x128xf32, #tpu.memory_space<vmem>>, vector<1x128xf32>
    %3 = vector.broadcast %2 : vector<1x128xf32> to vector<128x128xf32>
    %4 = arith.mulf %1, %3 : vector<128x128xf32>
    %c0_3 = arith.constant 0 : index
    %c0_4 = arith.constant 0 : index
    %5 = vector.load %arg3[%c0_3, %c0_4] : memref<1x128xf32, #tpu.memory_space<vmem>>, vector<1x128xf32>
    %6 = vector.broadcast %5 : vector<1x128xf32> to vector<128x128xf32>
    %7 = arith.addf %4, %6 : vector<128x128xf32>
    %cst = arith.constant 0.000000e+00 : f32
    %8 = vector.broadcast %cst : f32 to vector<128x128xf32>
    %9 = arith.cmpf ogt, %7, %8 : vector<128x128xf32>
    %cst_5 = arith.constant 2.000000e-01 : f32
    %10 = vector.broadcast %cst_5 : f32 to vector<128x128xf32>
    %11 = arith.mulf %10, %7 : vector<128x128xf32>
    %12 = arith.select %9, %7, %11 : vector<128x128xi1>, vector<128x128xf32>
    %13 = arith.truncf %12 : vector<128x128xf32> to vector<128x128xbf16>
    %c0_6 = arith.constant 0 : index
    %c0_7 = arith.constant 0 : index
    %14 = vector.load %arg4[%c0_6, %c0_7] : memref<128x128xbf16, #tpu.memory_space<vmem>>, vector<128x128xbf16>
    tpu.vector_store %arg4[%c0_6, %c0_7], %13 {strides = array<i32>} : memref<128x128xbf16, #tpu.memory_space<vmem>>, vector<128x128xbf16>,
    return
  }
  func.func @transform_0(%arg0: i32) -> (i32, i32) {
    %c0_i32 = arith.constant 0 : i32
    %c0_i32_0 = arith.constant 0 : i32
    return %arg0, %c0_i32 : i32, i32
  }
  func.func @transform_1(%arg0: i32) -> (i32, i32) {
    %c0_i32 = arith.constant 0 : i32
    %c0_i32_0 = arith.constant 0 : i32
    %c0_i32_1 = arith.constant 0 : i32
    return %c0_i32, %c0_i32_0 : i32, i32
  }
  func.func @transform_2(%arg0: i32) -> (i32, i32) {
    %c0_i32 = arith.constant 0 : i32
    %c0_i32_0 = arith.constant 0 : i32
    %c0_i32_1 = arith.constant 0 : i32
    return %c0_i32, %c0_i32_0 : i32, i32
  }
  func.func @transform_3(%arg0: i32) -> (i32, i32) {
    %c0_i32 = arith.constant 0 : i32
    %c0_i32_0 = arith.constant 0 : i32
    return %arg0, %c0_i32 : i32, i32
  }
}

module attributes {stable_mosaic.version = 11 : i64} {
  func.func @_conv_stats_kernel(%arg0: i32, %arg1: memref<32x512xbf16, #tpu.memory_space<vmem>>, %arg2: memref<512x128xbf16, #tpu.memory_space<vmem>>, %arg3: memref<32x128xbf16, #tpu.memory_space<vmem>>, %arg4: memref<1x128xf32, #tpu.memory_space<vmem>>, %arg5: memref<1x128xf32, #tpu.memory_space<vmem>>) attributes {dimension_semantics = [#tpu.dimension_semantics<arbitrary>], iteration_bounds = array<i64: 1>, scalar_prefetch = 0 : i64, scratch_operands = 0 : i64, tpu.core_type = #tpu.core_type<tc>, window_params = [{transform_indices = @transform_0, window_bounds = array<i64: 32, 512>}, {pipeline_mode = #tpu.pipeline_mode<synchronous>, transform_indices = @transform_1, window_bounds = array<i64: 512, 128>}, {transform_indices = @transform_2, window_bounds = array<i64: 32, 128>}, {pipeline_mode = #tpu.pipeline_mode<synchronous>, transform_indices = @transform_3, window_bounds = array<i64: 1, 128>}, {pipeline_mode = #tpu.pipeline_mode<synchronous>, transform_indices = @transform_4, window_bounds = array<i64: 1, 128>}]} {
    %c0 = arith.constant 0 : index
    %c0_0 = arith.constant 0 : index
    %0 = vector.load %arg1[%c0, %c0_0] : memref<32x512xbf16, #tpu.memory_space<vmem>>, vector<32x512xbf16>
    %c0_1 = arith.constant 0 : index
    %c0_2 = arith.constant 0 : index
    %1 = vector.load %arg2[%c0_1, %c0_2] : memref<512x128xbf16, #tpu.memory_space<vmem>>, vector<512x128xbf16>
    %cst = arith.constant dense<0.000000e+00> : vector<32x128xf32>
    %2 = tpu.matmul %0, %1, %cst {dimension_numbers = #tpu.dot_dimension_numbers<[1], [0], [0], [1], [0, 0, 1, 1], [], []>} : vector<32x512xbf16>, vector<512x128xbf16>, vector<32x128xf32> -> vector<32x128xf32>
    %c0_i32 = arith.constant 0 : i32
    %3 = arith.cmpi eq, %arg0, %c0_i32 : i32
    %4 = arith.extui %3 : i1 to i32
    %c0_i32_3 = arith.constant 0 : i32
    %5 = arith.cmpi ne, %4, %c0_i32_3 : i32
    scf.if %5 {
      %cst_16 = arith.constant 0.000000e+00 : f32
      %19 = vector.broadcast %cst_16 : f32 to vector<1x128xf32>
      %c0_17 = arith.constant 0 : index
      %c0_18 = arith.constant 0 : index
      %20 = vector.load %arg4[%c0_17, %c0_18] : memref<1x128xf32, #tpu.memory_space<vmem>>, vector<1x128xf32>
      tpu.vector_store %arg4[%c0_17, %c0_18], %19 {strides = array<i32>} : memref<1x128xf32, #tpu.memory_space<vmem>>, vector<1x128xf32>,
      %cst_19 = arith.constant 0.000000e+00 : f32
      %21 = vector.broadcast %cst_19 : f32 to vector<1x128xf32>
      %c0_20 = arith.constant 0 : index
      %c0_21 = arith.constant 0 : index
      %22 = vector.load %arg5[%c0_20, %c0_21] : memref<1x128xf32, #tpu.memory_space<vmem>>, vector<1x128xf32>
      tpu.vector_store %arg5[%c0_20, %c0_21], %21 {strides = array<i32>} : memref<1x128xf32, #tpu.memory_space<vmem>>, vector<1x128xf32>,
    } else {
    }
    %c0_4 = arith.constant 0 : index
    %c0_5 = arith.constant 0 : index
    %6 = vector.load %arg4[%c0_4, %c0_5] : memref<1x128xf32, #tpu.memory_space<vmem>>, vector<1x128xf32>
    %cst_6 = arith.constant dense<0.000000e+00> : vector<128xf32>
    %7 = vector.multi_reduction <add>, %2, %cst_6 [0] : vector<32x128xf32> to vector<128xf32>
    %8 = vector.shape_cast %7 : vector<128xf32> to vector<1x128xf32>
    %9 = arith.addf %6, %8 : vector<1x128xf32>
    %c0_7 = arith.constant 0 : index
    %c0_8 = arith.constant 0 : index
    %10 = vector.load %arg4[%c0_7, %c0_8] : memref<1x128xf32, #tpu.memory_space<vmem>>, vector<1x128xf32>
    tpu.vector_store %arg4[%c0_7, %c0_8], %9 {strides = array<i32>} : memref<1x128xf32, #tpu.memory_space<vmem>>, vector<1x128xf32>,
    %c0_9 = arith.constant 0 : index
    %c0_10 = arith.constant 0 : index
    %11 = vector.load %arg5[%c0_9, %c0_10] : memref<1x128xf32, #tpu.memory_space<vmem>>, vector<1x128xf32>
    %12 = arith.mulf %2, %2 : vector<32x128xf32>
    %cst_11 = arith.constant dense<0.000000e+00> : vector<128xf32>
    %13 = vector.multi_reduction <add>, %12, %cst_11 [0] : vector<32x128xf32> to vector<128xf32>
    %14 = vector.shape_cast %13 : vector<128xf32> to vector<1x128xf32>
    %15 = arith.addf %11, %14 : vector<1x128xf32>
    %c0_12 = arith.constant 0 : index
    %c0_13 = arith.constant 0 : index
    %16 = vector.load %arg5[%c0_12, %c0_13] : memref<1x128xf32, #tpu.memory_space<vmem>>, vector<1x128xf32>
    tpu.vector_store %arg5[%c0_12, %c0_13], %15 {strides = array<i32>} : memref<1x128xf32, #tpu.memory_space<vmem>>, vector<1x128xf32>,
    %17 = arith.truncf %2 : vector<32x128xf32> to vector<32x128xbf16>
    %c0_14 = arith.constant 0 : index
    %c0_15 = arith.constant 0 : index
    %18 = vector.load %arg3[%c0_14, %c0_15] : memref<32x128xbf16, #tpu.memory_space<vmem>>, vector<32x128xbf16>
    tpu.vector_store %arg3[%c0_14, %c0_15], %17 {strides = array<i32>} : memref<32x128xbf16, #tpu.memory_space<vmem>>, vector<32x128xbf16>,
    return
  }
  func.func @transform_0(%arg0: i32) -> (i32, i32) {
    %c0_i32 = arith.constant 0 : i32
    %c0_i32_0 = arith.constant 0 : i32
    return %arg0, %c0_i32 : i32, i32
  }
  func.func @transform_1(%arg0: i32) -> (i32, i32) {
    %c0_i32 = arith.constant 0 : i32
    %c0_i32_0 = arith.constant 0 : i32
    %c0_i32_1 = arith.constant 0 : i32
    return %c0_i32, %c0_i32_0 : i32, i32
  }
  func.func @transform_2(%arg0: i32) -> (i32, i32) {
    %c0_i32 = arith.constant 0 : i32
    %c0_i32_0 = arith.constant 0 : i32
    return %arg0, %c0_i32 : i32, i32
  }
  func.func @transform_3(%arg0: i32) -> (i32, i32) {
    %c0_i32 = arith.constant 0 : i32
    %c0_i32_0 = arith.constant 0 : i32
    %c0_i32_1 = arith.constant 0 : i32
    return %c0_i32, %c0_i32_0 : i32, i32
  }
  func.func @transform_4(%arg0: i32) -> (i32, i32) {
    %c0_i32 = arith.constant 0 : i32
    %c0_i32_0 = arith.constant 0 : i32
    %c0_i32_1 = arith.constant 0 : i32
    return %c0_i32, %c0_i32_0 : i32, i32
  }
}

module attributes {stable_mosaic.version = 11 : i64} {
  func.func @_scale_shift_lrelu_kernel(%arg0: i32, %arg1: memref<32x128xbf16, #tpu.memory_space<vmem>>, %arg2: memref<1x128xf32, #tpu.memory_space<vmem>>, %arg3: memref<1x128xf32, #tpu.memory_space<vmem>>, %arg4: memref<32x128xbf16, #tpu.memory_space<vmem>>) attributes {dimension_semantics = [#tpu.dimension_semantics<parallel>], iteration_bounds = array<i64: 1>, scalar_prefetch = 0 : i64, scratch_operands = 0 : i64, tpu.core_type = #tpu.core_type<tc>, window_params = [{transform_indices = @transform_0, window_bounds = array<i64: 32, 128>}, {pipeline_mode = #tpu.pipeline_mode<synchronous>, transform_indices = @transform_1, window_bounds = array<i64: 1, 128>}, {pipeline_mode = #tpu.pipeline_mode<synchronous>, transform_indices = @transform_2, window_bounds = array<i64: 1, 128>}, {transform_indices = @transform_3, window_bounds = array<i64: 32, 128>}]} {
    %c0 = arith.constant 0 : index
    %c0_0 = arith.constant 0 : index
    %0 = vector.load %arg1[%c0, %c0_0] : memref<32x128xbf16, #tpu.memory_space<vmem>>, vector<32x128xbf16>
    %1 = arith.extf %0 : vector<32x128xbf16> to vector<32x128xf32>
    %c0_1 = arith.constant 0 : index
    %c0_2 = arith.constant 0 : index
    %2 = vector.load %arg2[%c0_1, %c0_2] : memref<1x128xf32, #tpu.memory_space<vmem>>, vector<1x128xf32>
    %3 = vector.broadcast %2 : vector<1x128xf32> to vector<32x128xf32>
    %4 = arith.mulf %1, %3 : vector<32x128xf32>
    %c0_3 = arith.constant 0 : index
    %c0_4 = arith.constant 0 : index
    %5 = vector.load %arg3[%c0_3, %c0_4] : memref<1x128xf32, #tpu.memory_space<vmem>>, vector<1x128xf32>
    %6 = vector.broadcast %5 : vector<1x128xf32> to vector<32x128xf32>
    %7 = arith.addf %4, %6 : vector<32x128xf32>
    %cst = arith.constant 0.000000e+00 : f32
    %8 = vector.broadcast %cst : f32 to vector<32x128xf32>
    %9 = arith.cmpf ogt, %7, %8 : vector<32x128xf32>
    %cst_5 = arith.constant 2.000000e-01 : f32
    %10 = vector.broadcast %cst_5 : f32 to vector<32x128xf32>
    %11 = arith.mulf %10, %7 : vector<32x128xf32>
    %12 = arith.select %9, %7, %11 : vector<32x128xi1>, vector<32x128xf32>
    %13 = arith.truncf %12 : vector<32x128xf32> to vector<32x128xbf16>
    %c0_6 = arith.constant 0 : index
    %c0_7 = arith.constant 0 : index
    %14 = vector.load %arg4[%c0_6, %c0_7] : memref<32x128xbf16, #tpu.memory_space<vmem>>, vector<32x128xbf16>
    tpu.vector_store %arg4[%c0_6, %c0_7], %13 {strides = array<i32>} : memref<32x128xbf16, #tpu.memory_space<vmem>>, vector<32x128xbf16>,
    return
  }
  func.func @transform_0(%arg0: i32) -> (i32, i32) {
    %c0_i32 = arith.constant 0 : i32
    %c0_i32_0 = arith.constant 0 : i32
    return %arg0, %c0_i32 : i32, i32
  }
  func.func @transform_1(%arg0: i32) -> (i32, i32) {
    %c0_i32 = arith.constant 0 : i32
    %c0_i32_0 = arith.constant 0 : i32
    %c0_i32_1 = arith.constant 0 : i32
    return %c0_i32, %c0_i32_0 : i32, i32
  }
  func.func @transform_2(%arg0: i32) -> (i32, i32) {
    %c0_i32 = arith.constant 0 : i32
    %c0_i32_0 = arith.constant 0 : i32
    %c0_i32_1 = arith.constant 0 : i32
    return %c0_i32, %c0_i32_0 : i32, i32
  }
  func.func @transform_3(%arg0: i32) -> (i32, i32) {
    %c0_i32 = arith.constant 0 : i32
    %c0_i32_0 = arith.constant 0 : i32
    return %arg0, %c0_i32 : i32, i32
  }
}

</mosaic_0001>

<llo_original>
// kernel: discriminator_forward.7
$region0: #{discriminator_forward.7}
  #allocation0 [shape = 'u32[]', space=smem, size = 0x4, offset = 0x4, fixed_abs, tag = 'smem constant byte address 0x4 - core index']
  #allocation1 [shape = 'u32[144,128]{1,0:T(1,128)}', space=vmem, size = 0x12000, scoped, tag = 'internal scratch']
  %s0 = inlined_call_operand.vmem [shape: bf16[2048,48], index: 0, kind: input, shape index: {}]
  %s1 = inlined_call_operand.vmem [shape: bf16[48,128], index: 1, kind: input, shape index: {}]
  %s2 = inlined_call_operand.vmem [shape: bf16[2048,128], index: 2, kind: output, shape index: {}]
  %s3 = sld [smem:[#allocation0]]
  $region41: #{discriminator_forward.7} parent=0
    _
  %s5 = ssub.s32 1, %s3
  %s6 = scalar_select 0, %s5, %s3
  loop: start=0, step=1, limit=6
  $region2: #{discriminator_forward.7} parent=0 // loop_pre_header
    _
  $region3: #{discriminator_forward.7} parent=0 // loop_header
    %s8 = sphi 0, %s12
    %p9 = scmp.ge.s32.totalorder %s8, 6
    %s18 = sphi 0, %s20
    %s21 = sphi 0, %s18
    %s22 = sphi 0, %s21
    %s38 = sphi 0, %s22
    %s42 = sphi 0, %s42
    %s44 = sphi 0, %s42
    %s45 = sphi 0, %s44
    %s59 = sphi 0, %s45
    %s65 = sphi 0, %s67
    %s68 = sphi 0, %s65
    %s69 = sphi 0, %s68
    %s85 = sphi 0, %s69
  $region4: #{discriminator_forward.7} parent=0 // loop_header_branch
    %11 = sbr.rel (%p9) target = $region8
  $region5: #{discriminator_forward.7} parent=0 // loop_body
    %s13 = ssub.s32 %s8, 1
    %s14 = ssub.s32 %s8, 2
    %s15 = sadd.s32 %s8, 1
    %s16 = ssub.s32 %s8, %s15
    %p17 = scmp.eq.s32.totalorder %s16, 0
    %s19 = sadd.s32 %s18, 1
    %s20 = scalar_select %p17, %s18, %s19
    %p23 = pneg %p17
    %p24 = scmp.eq.s32.totalorder %s8, 3
    %p25 = por %p23, %p24
    %p26 = scmp.ne.s32.totalorder %s18, %s21
    %p27 = scmp.eq.s32.totalorder %s8, 0
    %p28 = por %p26, %p27
    %p29 = scmp.ne.s32.totalorder %s18, %s21
    %p30 = scmp.eq.s32.totalorder %s13, 3
    %p31 = por %p29, %p30
    %p32 = scmp.ne.s32.totalorder %s21, %s22
    %p33 = scmp.eq.s32.totalorder %s13, 0
    %p34 = por %p32, %p33
    %p35 = scmp.ne.s32.totalorder %s21, %s22
    %p36 = scmp.eq.s32.totalorder %s14, 3
    %p37 = por %p35, %p36
    %p39 = scmp.ne.s32.totalorder %s22, %s38
    %p40 = scmp.eq.s32.totalorder %s14, 0
    %p41 = por %p39, %p40
    %s43 = sadd.s32 %s42, 1
    %p46 = scmp.eq.s32.totalorder %s8, 3
    %p47 = scmp.ne.s32.totalorder %s42, %s44
    %p48 = scmp.eq.s32.totalorder %s8, 0
    %p49 = por %p47, %p48
    %p50 = scmp.ne.s32.totalorder %s42, %s44
    %p51 = scmp.eq.s32.totalorder %s13, 3
    %p52 = por %p50, %p51
    %p53 = scmp.ne.s32.totalorder %s44, %s45
    %p54 = scmp.eq.s32.totalorder %s13, 0
    %p55 = por %p53, %p54
    %p56 = scmp.ne.s32.totalorder %s44, %s45
    %p57 = scmp.eq.s32.totalorder %s14, 3
    %p58 = por %p56, %p57
    %p60 = scmp.ne.s32.totalorder %s45, %s59
    %p61 = scmp.eq.s32.totalorder %s14, 0
    %p62 = por %p60, %p61
    %s63 = ssub.s32 %s8, %s15
    %p64 = scmp.eq.s32.totalorder %s63, 0
    %s66 = sadd.s32 %s65, 1
    %s67 = scalar_select %p64, %s65, %s66
    %p70 = pneg %p64
    %p71 = scmp.eq.s32.totalorder %s8, 3
    %p72 = por %p70, %p71
    %p73 = scmp.ne.s32.totalorder %s65, %s68
    %p74 = scmp.eq.s32.totalorder %s8, 0
    %p75 = por %p73, %p74
    %p76 = scmp.ne.s32.totalorder %s65, %s68
    %p77 = scmp.eq.s32.totalorder %s13, 3
    %p78 = por %p76, %p77
    %p79 = scmp.ne.s32.totalorder %s68, %s69
    %p80 = scmp.eq.s32.totalorder %s13, 0
    %p81 = por %p79, %p80
    %p82 = scmp.ne.s32.totalorder %s68, %s69
    %p83 = scmp.eq.s32.totalorder %s14, 3
    %p84 = por %p82, %p83
    %p86 = scmp.ne.s32.totalorder %s69, %s85
    %p87 = scmp.eq.s32.totalorder %s14, 0
    %p88 = por %p86, %p87
    %p89 = scmp.le.s32.totalorder 1, %s8
    %p90 = scmp.lt.s32.totalorder %s8, 5
    %p91 = pnand %p89, %p90
    %p92 = pneg %p91
    // Predicated region
    $region9: #{discriminator_forward.7} parent=5 // pred_check
      _
    $region10: #{discriminator_forward.7} parent=5 // pred_check_branch
      %94 = sbr.rel (%p91) target = $region12
    $region11: #{discriminator_forward.7} parent=5 // pred_region
      %s95 = ssub.s32 %s8, 1
      // Predicated region
      $region13: #{discriminator_forward.7} parent=11 // pred_check
        %p96 = pneg %p55
      $region14: #{discriminator_forward.7} parent=11 // pred_check_branch
        %98 = sbr.rel (%p96) target = $region16
      $region15: #{discriminator_forward.7} parent=11 // pred_region
        _
      $region16: #{discriminator_forward.7} parent=11 // pred_fallthru
        _
    $region12: #{discriminator_forward.7} parent=5 // pred_fallthru
      _
    %p99 = scmp.lt.s32.totalorder %s8, 4
    // Predicated region
    $region17: #{discriminator_forward.7} parent=5 // pred_check
      %p100 = pneg %p99
    $region18: #{discriminator_forward.7} parent=5 // pred_check_branch
      %102 = sbr.rel (%p100) target = $region20
    $region19: #{discriminator_forward.7} parent=5 // pred_region
      // Predicated region
      $region21: #{discriminator_forward.7} parent=19 // pred_check
        %p103 = pneg %p28
      $region22: #{discriminator_forward.7} parent=19 // pred_check_branch
        %105 = sbr.rel (%p103) target = $region24
      $region23: #{discriminator_forward.7} parent=19 // pred_region
        %s106 = smul.u32 64, %s8
        %p107 = scmp.lt.s32.totalorder %s106, 255
        %s108 = scalar_select %p107, %s106, 255
        %s109 = smul.addr %s108, 4
        %s110 = scalar_lea.vmem %s0, %s109
        %s111 = smul.u32 64, %s8
      $region24: #{discriminator_forward.7} parent=19 // pred_fallthru
        _
    $region20: #{discriminator_forward.7} parent=5 // pred_fallthru
      _
    %p112 = scmp.le.s32.totalorder 1, %s8
    %p113 = scmp.lt.s32.totalorder %s8, 5
    %p114 = pnand %p112, %p113
    %p115 = pneg %p114
    // Predicated region
    $region25: #{discriminator_forward.7} parent=5 // pred_check
      _
    $region26: #{discriminator_forward.7} parent=5 // pred_check_branch
      %117 = sbr.rel (%p114) target = $region28
    $region27: #{discriminator_forward.7} parent=5 // pred_region
      %s118 = ssub.s32 %s8, 1
      %s119 = smul.u32 64, %s13
      %p120 = scmp.lt.s32.totalorder %s119, 255
      %s121 = scalar_select %p120, %s119, 255
      %s122 = smul.addr %s121, 4
      %s123 = scalar_lea.vmem %s0, %s122
      %p124 = pneg %p34
      %p125 = pneg %p31
      %p126 = pneg %p55
      %p127 = pneg %p52
      %p128 = pneg %p81
      %p129 = pneg %p78
      %s130 = smul.u32 64, %s13
      %p131 = scmp.lt.s32.totalorder %s130, 255
      %s132 = scalar_select %p131, %s130, 255
      %s133 = smul.addr %s132, 4
      %s134 = scalar_lea.vmem %s2, %s133
      %s135 = smul.u32 64, %s13
      %p136 = scmp.lt.s32.totalorder %s135, 255
      %s137 = scalar_select %p136, %s135, 255
      %s138 = smul.addr %s137, 4
      %s139 = scalar_lea.vmem %s0, %s138
      %s140 = smul.u32 64, %s13
      %s141 = smul.u32 64, %s13
      %p142 = scmp.lt.s32.totalorder %s141, 255
      %s143 = scalar_select %p142, %s141, 255
      %s144 = smul.addr %s143, 4
      %s145 = scalar_lea.vmem %s2, %s144
      %s146 = smul.u32 64, %s13
      %v148 = vld [vmem:[%s139] sm:$0xf]
      %v149 = vld [vmem:[%s139 + $0x4] sm:$0xf]
      %v150 = vld [vmem:[%s139 + $0x8] sm:$0xf]
      %v151 = vld [vmem:[%s139 + $0xc] sm:$0xf]
      %v152 = vld [vmem:[%s139 + $0x10] sm:$0xf]
      %v153 = vld [vmem:[%s139 + $0x14] sm:$0xf]
      %v154 = vld [vmem:[%s139 + $0x18] sm:$0xf]
      %v155 = vld [vmem:[%s139 + $0x1c] sm:$0xf]
      %v156 = vld [vmem:[%s139 + $0x20] sm:$0xf]
      %v157 = vld [vmem:[%s139 + $0x24] sm:$0xf]
      %v158 = vld [vmem:[%s139 + $0x28] sm:$0xf]
      %v159 = vld [vmem:[%s139 + $0x2c] sm:$0xf]
      %v160 = vld [vmem:[%s139 + $0x30] sm:$0xf]
      %v161 = vld [vmem:[%s139 + $0x34] sm:$0xf]
      %v162 = vld [vmem:[%s139 + $0x38] sm:$0xf]
      %v163 = vld [vmem:[%s139 + $0x3c] sm:$0xf]
      %v164 = vld [vmem:[%s139 + $0x40] sm:$0xf]
      %v165 = vld [vmem:[%s139 + $0x44] sm:$0xf]
      %v166 = vld [vmem:[%s139 + $0x48] sm:$0xf]
      %v167 = vld [vmem:[%s139 + $0x4c] sm:$0xf]
      %v168 = vld [vmem:[%s139 + $0x50] sm:$0xf]
      %v169 = vld [vmem:[%s139 + $0x54] sm:$0xf]
      %v170 = vld [vmem:[%s139 + $0x58] sm:$0xf]
      %v171 = vld [vmem:[%s139 + $0x5c] sm:$0xf]
      %v172 = vld [vmem:[%s139 + $0x60] sm:$0xf]
      %v173 = vld [vmem:[%s139 + $0x64] sm:$0xf]
      %v174 = vld [vmem:[%s139 + $0x68] sm:$0xf]
      %v175 = vld [vmem:[%s139 + $0x6c] sm:$0xf]
      %v176 = vld [vmem:[%s139 + $0x70] sm:$0xf]
      %v177 = vld [vmem:[%s139 + $0x74] sm:$0xf]
      %v178 = vld [vmem:[%s139 + $0x78] sm:$0xf]
      %v179 = vld [vmem:[%s139 + $0x7c] sm:$0xf]
      %v180 = vld [vmem:[%s139 + $0x80] sm:$0xf]
      %v181 = vld [vmem:[%s139 + $0x84] sm:$0xf]
      %v182 = vld [vmem:[%s139 + $0x88] sm:$0xf]
      %v183 = vld [vmem:[%s139 + $0x8c] sm:$0xf]
      %v184 = vld [vmem:[%s139 + $0x90] sm:$0xf]
      %v185 = vld [vmem:[%s139 + $0x94] sm:$0xf]
      %v186 = vld [vmem:[%s139 + $0x98] sm:$0xf]
      %v187 = vld [vmem:[%s139 + $0x9c] sm:$0xf]
      %v188 = vld [vmem:[%s139 + $0xa0] sm:$0xf]
      %v189 = vld [vmem:[%s139 + $0xa4] sm:$0xf]
      %v190 = vld [vmem:[%s139 + $0xa8] sm:$0xf]
      %v191 = vld [vmem:[%s139 + $0xac] sm:$0xf]
      %v192 = vld [vmem:[%s139 + $0xb0] sm:$0xf]
      %v193 = vld [vmem:[%s139 + $0xb4] sm:$0xf]
      %v194 = vld [vmem:[%s139 + $0xb8] sm:$0xf]
      %v195 = vld [vmem:[%s139 + $0xbc] sm:$0xf]
      %v196 = vld [vmem:[%s139 + $0xc0] sm:$0xf]
      %v197 = vld [vmem:[%s139 + $0xc4] sm:$0xf]
      %v198 = vld [vmem:[%s139 + $0xc8] sm:$0xf]
      %v199 = vld [vmem:[%s139 + $0xcc] sm:$0xf]
      %v200 = vld [vmem:[%s139 + $0xd0] sm:$0xf]
      %v201 = vld [vmem:[%s139 + $0xd4] sm:$0xf]
      %v202 = vld [vmem:[%s139 + $0xd8] sm:$0xf]
      %v203 = vld [vmem:[%s139 + $0xdc] sm:$0xf]
      %v204 = vld [vmem:[%s139 + $0xe0] sm:$0xf]
      %v205 = vld [vmem:[%s139 + $0xe4] sm:$0xf]
      %v206 = vld [vmem:[%s139 + $0xe8] sm:$0xf]
      %v207 = vld [vmem:[%s139 + $0xec] sm:$0xf]
      %v208 = vld [vmem:[%s139 + $0xf0] sm:$0xf]
      %v209 = vld [vmem:[%s139 + $0xf4] sm:$0xf]
      %v210 = vld [vmem:[%s139 + $0xf8] sm:$0xf]
      %v211 = vld [vmem:[%s139 + $0xfc] sm:$0xf]
      %v212 = vld [vmem:[%s1] sm:$0xf]
      %v213 = vld [vmem:[%s1 + $0x4] sm:$0xf]
      %v214 = vld [vmem:[%s1 + $0x8] sm:$0xf]
      %v215 = vld [vmem:[%s1 + $0xc] sm:$0xf]
      %v216 = vld [vmem:[%s1 + $0x10] sm:$0xf]
      %v217 = vld [vmem:[%s1 + $0x14] sm:$0xf]
      %v282 = vunpack.c.l.b16 %v148
      %v283 = vunpack.c.l.b16 %v149
      %v284 = vunpack.c.l.b16 %v150
      %v285 = vunpack.c.l.b16 %v151
      %v286 = vunpack.c.l.b16 %v152
      %v287 = vunpack.c.l.b16 %v153
      %v288 = vunpack.c.l.b16 %v154
      %v289 = vunpack.c.l.b16 %v155
      %v290 = vunpack.c.l.b16 %v156
      %v291 = vunpack.c.l.b16 %v157
      %v292 = vunpack.c.l.b16 %v158
      %v293 = vunpack.c.l.b16 %v159
      %v294 = vunpack.c.l.b16 %v160
      %v295 = vunpack.c.l.b16 %v161
      %v296 = vunpack.c.l.b16 %v162
      %v297 = vunpack.c.l.b16 %v163
      %v298 = vunpack.c.l.b16 %v164
      %v299 = vunpack.c.l.b16 %v165
      %v300 = vunpack.c.l.b16 %v166
      %v301 = vunpack.c.l.b16 %v167
      %v302 = vunpack.c.l.b16 %v168
      %v303 = vunpack.c.l.b16 %v169
      %v304 = vunpack.c.l.b16 %v170
      %v305 = vunpack.c.l.b16 %v171
      %v306 = vunpack.c.l.b16 %v172
      %v307 = vunpack.c.l.b16 %v173
      %v308 = vunpack.c.l.b16 %v174
      %v309 = vunpack.c.l.b16 %v175
      %v310 = vunpack.c.l.b16 %v176
      %v311 = vunpack.c.l.b16 %v177
      %v312 = vunpack.c.l.b16 %v178
      %v313 = vunpack.c.l.b16 %v179
      %v314 = vunpack.c.l.b16 %v180
      %v315 = vunpack.c.l.b16 %v181
      %v316 = vunpack.c.l.b16 %v182
      %v317 = vunpack.c.l.b16 %v183
      %v318 = vunpack.c.l.b16 %v184
      %v319 = vunpack.c.l.b16 %v185
      %v320 = vunpack.c.l.b16 %v186
      %v321 = vunpack.c.l.b16 %v187
      %v322 = vunpack.c.l.b16 %v188
      %v323 = vunpack.c.l.b16 %v189
      %v324 = vunpack.c.l.b16 %v190
      %v325 = vunpack.c.l.b16 %v191
      %v326 = vunpack.c.l.b16 %v192
      %v327 = vunpack.c.l.b16 %v193
      %v328 = vunpack.c.l.b16 %v194
      %v329 = vunpack.c.l.b16 %v195
      %v330 = vunpack.c.l.b16 %v196
      %v331 = vunpack.c.l.b16 %v197
      %v332 = vunpack.c.l.b16 %v198
      %v333 = vunpack.c.l.b16 %v199
      %v334 = vunpack.c.l.b16 %v200
      %v335 = vunpack.c.l.b16 %v201
      %v336 = vunpack.c.l.b16 %v202
      %v337 = vunpack.c.l.b16 %v203
      %v338 = vunpack.c.l.b16 %v204
      %v339 = vunpack.c.l.b16 %v205
      %v340 = vunpack.c.l.b16 %v206
      %v341 = vunpack.c.l.b16 %v207
      %v342 = vunpack.c.l.b16 %v208
      %v343 = vunpack.c.l.b16 %v209
      %v344 = vunpack.c.l.b16 %v210
      %v345 = vunpack.c.l.b16 %v211
      %v346 = vpack.c.b16 %v283, %v282
      %v347 = vpack.c.b16 %v285, %v284
      %v348 = vpack.c.b16 %v287, %v286
      %v349 = vpack.c.b16 %v289, %v288
      %v350 = vpack.c.b16 %v291, %v290
      %v351 = vpack.c.b16 %v293, %v292
      %v352 = vpack.c.b16 %v295, %v294
      %v353 = vpack.c.b16 %v297, %v296
      %v354 = vpack.c.b16 %v299, %v298
      %v355 = vpack.c.b16 %v301, %v300
      %v356 = vpack.c.b16 %v303, %v302
      %v357 = vpack.c.b16 %v305, %v304
      %v358 = vpack.c.b16 %v307, %v306
      %v359 = vpack.c.b16 %v309, %v308
      %v360 = vpack.c.b16 %v311, %v310
      %v361 = vpack.c.b16 %v313, %v312
      %v362 = vpack.c.b16 %v315, %v314
      %v363 = vpack.c.b16 %v317, %v316
      %v364 = vpack.c.b16 %v319, %v318
      %v365 = vpack.c.b16 %v321, %v320
      %v366 = vpack.c.b16 %v323, %v322
      %v367 = vpack.c.b16 %v325, %v324
      %v368 = vpack.c.b16 %v327, %v326
      %v369 = vpack.c.b16 %v329, %v328
      %v370 = vpack.c.b16 %v331, %v330
      %v371 = vpack.c.b16 %v333, %v332
      %v372 = vpack.c.b16 %v335, %v334
      %v373 = vpack.c.b16 %v337, %v336
      %v374 = vpack.c.b16 %v339, %v338
      %v375 = vpack.c.b16 %v341, %v340
      %v376 = vpack.c.b16 %v343, %v342
      %v377 = vpack.c.b16 %v345, %v344
      %v384 = vunpack.c.l.b16 %v212
      %v385 = vunpack.c.l.b16 %v213
      %v386 = vunpack.c.l.b16 %v214
      %v387 = vunpack.c.l.b16 %v215
      %v388 = vunpack.c.l.b16 %v216
      %v389 = vunpack.c.l.b16 %v217
      %v390 = vpack.c.b16 %v385, %v384
      %v391 = vpack.c.b16 %v387, %v386
      %v392 = vpack.c.b16 %v389, %v388
      %vm396 = vcmask 392192
      %v398 = vsel %vm396, %v346, 0
      %v401 = vsel %vm396, %v347, 0
      %v404 = vsel %vm396, %v348, 0
      %v407 = vsel %vm396, %v349, 0
      %v410 = vsel %vm396, %v350, 0
      %v413 = vsel %vm396, %v351, 0
      %v416 = vsel %vm396, %v352, 0
      %v419 = vsel %vm396, %v353, 0
      %v422 = vsel %vm396, %v354, 0
      %v425 = vsel %vm396, %v355, 0
      %v428 = vsel %vm396, %v356, 0
      %v431 = vsel %vm396, %v357, 0
      %v434 = vsel %vm396, %v358, 0
      %v437 = vsel %vm396, %v359, 0
      %v440 = vsel %vm396, %v360, 0
      %v443 = vsel %vm396, %v361, 0
      %v446 = vsel %vm396, %v362, 0
      %v449 = vsel %vm396, %v363, 0
      %v452 = vsel %vm396, %v364, 0
      %v455 = vsel %vm396, %v365, 0
      %v458 = vsel %vm396, %v366, 0
      %v461 = vsel %vm396, %v367, 0
      %v464 = vsel %vm396, %v368, 0
      %v467 = vsel %vm396, %v369, 0
      %v470 = vsel %vm396, %v370, 0
      %v473 = vsel %vm396, %v371, 0
      %v476 = vsel %vm396, %v372, 0
      %v479 = vsel %vm396, %v373, 0
      %v482 = vsel %vm396, %v374, 0
      %v485 = vsel %vm396, %v375, 0
      %v488 = vsel %vm396, %v376, 0
      %v491 = vsel %vm396, %v377, 0
      %493 = vmatprep.subr.bf16.mxu0 0
      %494 = vmatpush1.bf16.msra.mxu0 %v390
      %495 = vmatprep.subr.bf16.mxu0 0
      %496 = vmatpush1.bf16.msra.mxu0 %v391
      %497 = vmatprep.subr.bf16.mxu0 0
      %498 = vmatpush1.bf16.msra.mxu0 %v392
      %499 = vmatprep.subr.bf16.mxu0 0
      %500 = vmatpush1.bf16.msra.mxu0 0
      %501 = vmatprep.subr.bf16.mxu0 0
      %502 = vmatpush1.bf16.msra.mxu0 0
      %503 = vmatprep.subr.bf16.mxu0 0
      %504 = vmatpush1.bf16.msra.mxu0 0
      %505 = vmatprep.subr.bf16.mxu0 0
      %506 = vmatpush1.bf16.msra.mxu0 0
      %507 = vmatprep.subr.bf16.mxu0 0
      %508 = vmatpush1.bf16.msra.mxu0 0
      %509 = vmatprep.subr.bf16.mxu0 0
      %510 = vmatpush1.bf16.msra.mxu0 0
      %511 = vmatprep.subr.bf16.mxu0 0
      %512 = vmatpush1.bf16.msra.mxu0 0
      %513 = vmatprep.subr.bf16.mxu0 0
      %514 = vmatpush1.bf16.msra.mxu0 0
      %515 = vmatprep.subr.bf16.mxu0 0
      %516 = vmatpush1.bf16.msra.mxu0 0
      %517 = vmatprep.subr.bf16.mxu0 0
      %518 = vmatpush1.bf16.msra.mxu0 0
      %519 = vmatprep.subr.bf16.mxu0 0
      %520 = vmatpush1.bf16.msra.mxu0 0
      %521 = vmatprep.subr.bf16.mxu0 0
      %522 = vmatpush1.bf16.msra.mxu0 0
      %523 = vmatprep.subr.bf16.mxu0 0
      %524 = vmatpush1.bf16.msra.mxu0 0
      %525 = vmatprep.mubr.bf16.mxu0 0
      %526 = vmatmul.mubr.bf16.gmra.mrb[0].mxu0 %v398
      %v527 = vpop.f32.mrb[0].mxu0
      %v528 = vadd.f32 0.0, %v527
      %v529 = vpop.f32.mrb[0].mxu0
      %v530 = vpop.f32.mrb[0].mxu0
      %v531 = vadd.f32 0.0, %v530
      %v532 = vpop.f32.mrb[0].mxu0
      %533 = vmatprep.mubr.bf16.mxu0 0
      %534 = vmatmul.mubr.bf16.gmra.mrb[0].mxu0 %v401
      %v535 = vpop.f32.mrb[0].mxu0
      %v536 = vadd.f32 0.0, %v535
      %v537 = vpop.f32.mrb[0].mxu0
      %v538 = vpop.f32.mrb[0].mxu0
      %v539 = vadd.f32 0.0, %v538
      %v540 = vpop.f32.mrb[0].mxu0
      %541 = vmatprep.mubr.bf16.mxu0 0
      %542 = vmatmul.mubr.bf16.gmra.mrb[0].mxu0 %v404
      %v543 = vpop.f32.mrb[0].mxu0
      %v544 = vadd.f32 0.0, %v543
      %v545 = vpop.f32.mrb[0].mxu0
      %v546 = vpop.f32.mrb[0].mxu0
      %v547 = vadd.f32 0.0, %v546
      %v548 = vpop.f32.mrb[0].mxu0
      %549 = vmatprep.mubr.bf16.mxu0 0
      %550 = vmatmul.mubr.bf16.gmra.mrb[0].mxu0 %v407
      %v551 = vpop.f32.mrb[0].mxu0
      %v552 = vadd.f32 0.0, %v551
      %v553 = vpop.f32.mrb[0].mxu0
      %v554 = vpop.f32.mrb[0].mxu0
      %v555 = vadd.f32 0.0, %v554
      %v556 = vpop.f32.mrb[0].mxu0
      %557 = vmatprep.mubr.bf16.mxu0 0
      %558 = vmatmul.mubr.bf16.gmra.mrb[0].mxu0 %v410
      %v559 = vpop.f32.mrb[0].mxu0
      %v560 = vadd.f32 0.0, %v559
      %v561 = vpop.f32.mrb[0].mxu0
      %v562 = vpop.f32.mrb[0].mxu0
      %v563 = vadd.f32 0.0, %v562
      %v564 = vpop.f32.mrb[0].mxu0
      %565 = vmatprep.mubr.bf16.mxu0 0
      %566 = vmatmul.mubr.bf16.gmra.mrb[0].mxu0 %v413
      %v567 = vpop.f32.mrb[0].mxu0
      %v568 = vadd.f32 0.0, %v567
      %v569 = vpop.f32.mrb[0].mxu0
      %v570 = vpop.f32.mrb[0].mxu0
      %v571 = vadd.f32 0.0, %v570
      %v572 = vpop.f32.mrb[0].mxu0
      %573 = vmatprep.mubr.bf16.mxu0 0
      %574 = vmatmul.mubr.bf16.gmra.mrb[0].mxu0 %v416
      %v575 = vpop.f32.mrb[0].mxu0
      %v576 = vadd.f32 0.0, %v575
      %v577 = vpop.f32.mrb[0].mxu0
      %v578 = vpop.f32.mrb[0].mxu0
      %v579 = vadd.f32 0.0, %v578
      %v580 = vpop.f32.mrb[0].mxu0
      %581 = vmatprep.mubr.bf16.mxu0 0
      %582 = vmatmul.mubr.bf16.gmra.mrb[0].mxu0 %v419
      %v583 = vpop.f32.mrb[0].mxu0
      %v584 = vadd.f32 0.0, %v583
      %v585 = vpop.f32.mrb[0].mxu0
      %v586 = vpop.f32.mrb[0].mxu0
      %v587 = vadd.f32 0.0, %v586
      %v588 = vpop.f32.mrb[0].mxu0
      %589 = vmatprep.mubr.bf16.mxu0 0
      %590 = vmatmul.mubr.bf16.gmra.mrb[0].mxu0 %v422
      %v591 = vpop.f32.mrb[0].mxu0
      %v592 = vadd.f32 0.0, %v591
      %v593 = vpop.f32.mrb[0].mxu0
      %v594 = vpop.f32.mrb[0].mxu0
      %v595 = vadd.f32 0.0, %v594
      %v596 = vpop.f32.mrb[0].mxu0
      %597 = vmatprep.mubr.bf16.mxu0 0
      %598 = vmatmul.mubr.bf16.gmra.mrb[0].mxu0 %v425
      %v599 = vpop.f32.mrb[0].mxu0
      %v600 = vadd.f32 0.0, %v599
      %v601 = vpop.f32.mrb[0].mxu0
      %v602 = vpop.f32.mrb[0].mxu0
      %v603 = vadd.f32 0.0, %v602
      %v604 = vpop.f32.mrb[0].mxu0
      %605 = vmatprep.mubr.bf16.mxu0 0
      %606 = vmatmul.mubr.bf16.gmra.mrb[0].mxu0 %v428
      %v607 = vpop.f32.mrb[0].mxu0
      %v608 = vadd.f32 0.0, %v607
      %v609 = vpop.f32.mrb[0].mxu0
      %v610 = vpop.f32.mrb[0].mxu0
      %v611 = vadd.f32 0.0, %v610
      %v612 = vpop.f32.mrb[0].mxu0
      %613 = vmatprep.mubr.bf16.mxu0 0
      %614 = vmatmul.mubr.bf16.gmra.mrb[0].mxu0 %v431
      %v615 = vpop.f32.mrb[0].mxu0
      %v616 = vadd.f32 0.0, %v615
      %v617 = vpop.f32.mrb[0].mxu0
      %v618 = vpop.f32.mrb[0].mxu0
      %v619 = vadd.f32 0.0, %v618
      %v620 = vpop.f32.mrb[0].mxu0
      %621 = vmatprep.mubr.bf16.mxu0 0
      %622 = vmatmul.mubr.bf16.gmra.mrb[0].mxu0 %v434
      %v623 = vpop.f32.mrb[0].mxu0
      %v624 = vadd.f32 0.0, %v623
      %v625 = vpop.f32.mrb[0].mxu0
      %v626 = vpop.f32.mrb[0].mxu0
      %v627 = vadd.f32 0.0, %v626
      %v628 = vpop.f32.mrb[0].mxu0
      %629 = vmatprep.mubr.bf16.mxu0 0
      %630 = vmatmul.mubr.bf16.gmra.mrb[0].mxu0 %v437
      %v631 = vpop.f32.mrb[0].mxu0
      %v632 = vadd.f32 0.0, %v631
      %v633 = vpop.f32.mrb[0].mxu0
      %v634 = vpop.f32.mrb[0].mxu0
      %v635 = vadd.f32 0.0, %v634
      %v636 = vpop.f32.mrb[0].mxu0
      %637 = vmatprep.mubr.bf16.mxu0 0
      %638 = vmatmul.mubr.bf16.gmra.mrb[0].mxu0 %v440
      %v639 = vpop.f32.mrb[0].mxu0
      %v640 = vadd.f32 0.0, %v639
      %v641 = vpop.f32.mrb[0].mxu0
      %v642 = vpop.f32.mrb[0].mxu0
      %v643 = vadd.f32 0.0, %v642
      %v644 = vpop.f32.mrb[0].mxu0
      %645 = vmatprep.mubr.bf16.mxu0 0
      %646 = vmatmul.mubr.bf16.gmra.mrb[0].mxu0 %v443
      %v647 = vpop.f32.mrb[0].mxu0
      %v648 = vadd.f32 0.0, %v647
      %v649 = vpop.f32.mrb[0].mxu0
      %v650 = vpop.f32.mrb[0].mxu0
      %v651 = vadd.f32 0.0, %v650
      %v652 = vpop.f32.mrb[0].mxu0
      %653 = vmatprep.mubr.bf16.mxu0 0
      %654 = vmatmul.mubr.bf16.gmra.mrb[0].mxu0 %v446
      %v655 = vpop.f32.mrb[0].mxu0
      %v656 = vadd.f32 0.0, %v655
      %v657 = vpop.f32.mrb[0].mxu0
      %v658 = vpop.f32.mrb[0].mxu0
      %v659 = vadd.f32 0.0, %v658
      %v660 = vpop.f32.mrb[0].mxu0
      %661 = vmatprep.mubr.bf16.mxu0 0
      %662 = vmatmul.mubr.bf16.gmra.mrb[0].mxu0 %v449
      %v663 = vpop.f32.mrb[0].mxu0
      %v664 = vadd.f32 0.0, %v663
      %v665 = vpop.f32.mrb[0].mxu0
      %v666 = vpop.f32.mrb[0].mxu0
      %v667 = vadd.f32 0.0, %v666
      %v668 = vpop.f32.mrb[0].mxu0
      %669 = vmatprep.mubr.bf16.mxu0 0
      %670 = vmatmul.mubr.bf16.gmra.mrb[0].mxu0 %v452
      %v671 = vpop.f32.mrb[0].mxu0
      %v672 = vadd.f32 0.0, %v671
      %v673 = vpop.f32.mrb[0].mxu0
      %v674 = vpop.f32.mrb[0].mxu0
      %v675 = vadd.f32 0.0, %v674
      %v676 = vpop.f32.mrb[0].mxu0
      %677 = vmatprep.mubr.bf16.mxu0 0
      %678 = vmatmul.mubr.bf16.gmra.mrb[0].mxu0 %v455
      %v679 = vpop.f32.mrb[0].mxu0
      %v680 = vadd.f32 0.0, %v679
      %v681 = vpop.f32.mrb[0].mxu0
      %v682 = vpop.f32.mrb[0].mxu0
      %v683 = vadd.f32 0.0, %v682
      %v684 = vpop.f32.mrb[0].mxu0
      %685 = vmatprep.mubr.bf16.mxu0 0
      %686 = vmatmul.mubr.bf16.gmra.mrb[0].mxu0 %v458
      %v687 = vpop.f32.mrb[0].mxu0
      %v688 = vadd.f32 0.0, %v687
      %v689 = vpop.f32.mrb[0].mxu0
      %v690 = vpop.f32.mrb[0].mxu0
      %v691 = vadd.f32 0.0, %v690
      %v692 = vpop.f32.mrb[0].mxu0
      %693 = vmatprep.mubr.bf16.mxu0 0
      %694 = vmatmul.mubr.bf16.gmra.mrb[0].mxu0 %v461
      %v695 = vpop.f32.mrb[0].mxu0
      %v696 = vadd.f32 0.0, %v695
      %v697 = vpop.f32.mrb[0].mxu0
      %v698 = vpop.f32.mrb[0].mxu0
      %v699 = vadd.f32 0.0, %v698
      %v700 = vpop.f32.mrb[0].mxu0
      %701 = vmatprep.mubr.bf16.mxu0 0
      %702 = vmatmul.mubr.bf16.gmra.mrb[0].mxu0 %v464
      %v703 = vpop.f32.mrb[0].mxu0
      %v704 = vadd.f32 0.0, %v703
      %v705 = vpop.f32.mrb[0].mxu0
      %v706 = vpop.f32.mrb[0].mxu0
      %v707 = vadd.f32 0.0, %v706
      %v708 = vpop.f32.mrb[0].mxu0
      %709 = vmatprep.mubr.bf16.mxu0 0
      %710 = vmatmul.mubr.bf16.gmra.mrb[0].mxu0 %v467
      %v711 = vpop.f32.mrb[0].mxu0
      %v712 = vadd.f32 0.0, %v711
      %v713 = vpop.f32.mrb[0].mxu0
      %v714 = vpop.f32.mrb[0].mxu0
      %v715 = vadd.f32 0.0, %v714
      %v716 = vpop.f32.mrb[0].mxu0
      %717 = vmatprep.mubr.bf16.mxu0 0
      %718 = vmatmul.mubr.bf16.gmra.mrb[0].mxu0 %v470
      %v719 = vpop.f32.mrb[0].mxu0
      %v720 = vadd.f32 0.0, %v719
      %v721 = vpop.f32.mrb[0].mxu0
      %v722 = vpop.f32.mrb[0].mxu0
      %v723 = vadd.f32 0.0, %v722
      %v724 = vpop.f32.mrb[0].mxu0
      %725 = vmatprep.mubr.bf16.mxu0 0
      %726 = vmatmul.mubr.bf16.gmra.mrb[0].mxu0 %v473
      %v727 = vpop.f32.mrb[0].mxu0
      %v728 = vadd.f32 0.0, %v727
      %v729 = vpop.f32.mrb[0].mxu0
      %v730 = vpop.f32.mrb[0].mxu0
      %v731 = vadd.f32 0.0, %v730
      %v732 = vpop.f32.mrb[0].mxu0
      %733 = vmatprep.mubr.bf16.mxu0 0
      %734 = vmatmul.mubr.bf16.gmra.mrb[0].mxu0 %v476
      %v735 = vpop.f32.mrb[0].mxu0
      %v736 = vadd.f32 0.0, %v735
      %v737 = vpop.f32.mrb[0].mxu0
      %v738 = vpop.f32.mrb[0].mxu0
      %v739 = vadd.f32 0.0, %v738
      %v740 = vpop.f32.mrb[0].mxu0
      %741 = vmatprep.mubr.bf16.mxu0 0
      %742 = vmatmul.mubr.bf16.gmra.mrb[0].mxu0 %v479
      %v743 = vpop.f32.mrb[0].mxu0
      %v744 = vadd.f32 0.0, %v743
      %v745 = vpop.f32.mrb[0].mxu0
      %v746 = vpop.f32.mrb[0].mxu0
      %v747 = vadd.f32 0.0, %v746
      %v748 = vpop.f32.mrb[0].mxu0
      %749 = vmatprep.mubr.bf16.mxu0 0
      %750 = vmatmul.mubr.bf16.gmra.mrb[0].mxu0 %v482
      %v751 = vpop.f32.mrb[0].mxu0
      %v752 = vadd.f32 0.0, %v751
      %v753 = vpop.f32.mrb[0].mxu0
      %v754 = vpop.f32.mrb[0].mxu0
      %v755 = vadd.f32 0.0, %v754
      %v756 = vpop.f32.mrb[0].mxu0
      %757 = vmatprep.mubr.bf16.mxu0 0
      %758 = vmatmul.mubr.bf16.gmra.mrb[0].mxu0 %v485
      %v759 = vpop.f32.mrb[0].mxu0
      %v760 = vadd.f32 0.0, %v759
      %v761 = vpop.f32.mrb[0].mxu0
      %v762 = vpop.f32.mrb[0].mxu0
      %v763 = vadd.f32 0.0, %v762
      %v764 = vpop.f32.mrb[0].mxu0
      %765 = vmatprep.mubr.bf16.mxu0 0
      %766 = vmatmul.mubr.bf16.gmra.mrb[0].mxu0 %v488
      %v767 = vpop.f32.mrb[0].mxu0
      %v768 = vadd.f32 0.0, %v767
      %v769 = vpop.f32.mrb[0].mxu0
      %v770 = vpop.f32.mrb[0].mxu0
      %v771 = vadd.f32 0.0, %v770
      %v772 = vpop.f32.mrb[0].mxu0
      %773 = vmatprep.mubr.bf16.mxu0 0
      %774 = vmatmul.mubr.bf16.gmra.mrb[0].mxu0 %v491
      %v775 = vpop.f32.mrb[0].mxu0
      %v776 = vadd.f32 0.0, %v775
      %v777 = vpop.f32.mrb[0].mxu0
      %v778 = vpop.f32.mrb[0].mxu0
      %v779 = vadd.f32 0.0, %v778
      %v780 = vpop.f32.mrb[0].mxu0
      %781 = vdwg.mxu0
      %vm782 = vcmp.gt.f32.partialorder %v528, 0.0
      %vm783 = vcmp.gt.f32.partialorder %v531, 0.0
      %vm784 = vcmp.gt.f32.partialorder %v536, 0.0
      %vm785 = vcmp.gt.f32.partialorder %v539, 0.0
      %vm786 = vcmp.gt.f32.partialorder %v544, 0.0
      %vm787 = vcmp.gt.f32.partialorder %v547, 0.0
      %vm788 = vcmp.gt.f32.partialorder %v552, 0.0
      %vm789 = vcmp.gt.f32.partialorder %v555, 0.0
      %vm790 = vcmp.gt.f32.partialorder %v560, 0.0
      %vm791 = vcmp.gt.f32.partialorder %v563, 0.0
      %vm792 = vcmp.gt.f32.partialorder %v568, 0.0
      %vm793 = vcmp.gt.f32.partialorder %v571, 0.0
      %vm794 = vcmp.gt.f32.partialorder %v576, 0.0
      %vm795 = vcmp.gt.f32.partialorder %v579, 0.0
      %vm796 = vcmp.gt.f32.partialorder %v584, 0.0
      %vm797 = vcmp.gt.f32.partialorder %v587, 0.0
      %vm798 = vcmp.gt.f32.partialorder %v592, 0.0
      %vm799 = vcmp.gt.f32.partialorder %v595, 0.0
      %vm800 = vcmp.gt.f32.partialorder %v600, 0.0
      %vm801 = vcmp.gt.f32.partialorder %v603, 0.0
      %vm802 = vcmp.gt.f32.partialorder %v608, 0.0
      %vm803 = vcmp.gt.f32.partialorder %v611, 0.0
      %vm804 = vcmp.gt.f32.partialorder %v616, 0.0
      %vm805 = vcmp.gt.f32.partialorder %v619, 0.0
      %vm806 = vcmp.gt.f32.partialorder %v624, 0.0
      %vm807 = vcmp.gt.f32.partialorder %v627, 0.0
      %vm808 = vcmp.gt.f32.partialorder %v632, 0.0
      %vm809 = vcmp.gt.f32.partialorder %v635, 0.0
      %vm810 = vcmp.gt.f32.partialorder %v640, 0.0
      %vm811 = vcmp.gt.f32.partialorder %v643, 0.0
      %vm812 = vcmp.gt.f32.partialorder %v648, 0.0
      %vm813 = vcmp.gt.f32.partialorder %v651, 0.0
      %vm814 = vcmp.gt.f32.partialorder %v656, 0.0
      %vm815 = vcmp.gt.f32.partialorder %v659, 0.0
      %vm816 = vcmp.gt.f32.partialorder %v664, 0.0
      %vm817 = vcmp.gt.f32.partialorder %v667, 0.0
      %vm818 = vcmp.gt.f32.partialorder %v672, 0.0
      %vm819 = vcmp.gt.f32.partialorder %v675, 0.0
      %vm820 = vcmp.gt.f32.partialorder %v680, 0.0
      %vm821 = vcmp.gt.f32.partialorder %v683, 0.0
      %vm822 = vcmp.gt.f32.partialorder %v688, 0.0
      %vm823 = vcmp.gt.f32.partialorder %v691, 0.0
      %vm824 = vcmp.gt.f32.partialorder %v696, 0.0
      %vm825 = vcmp.gt.f32.partialorder %v699, 0.0
      %vm826 = vcmp.gt.f32.partialorder %v704, 0.0
      %vm827 = vcmp.gt.f32.partialorder %v707, 0.0
      %vm828 = vcmp.gt.f32.partialorder %v712, 0.0
      %vm829 = vcmp.gt.f32.partialorder %v715, 0.0
      %vm830 = vcmp.gt.f32.partialorder %v720, 0.0
      %vm831 = vcmp.gt.f32.partialorder %v723, 0.0
      %vm832 = vcmp.gt.f32.partialorder %v728, 0.0
      %vm833 = vcmp.gt.f32.partialorder %v731, 0.0
      %vm834 = vcmp.gt.f32.partialorder %v736, 0.0
      %vm835 = vcmp.gt.f32.partialorder %v739, 0.0
      %vm836 = vcmp.gt.f32.partialorder %v744, 0.0
      %vm837 = vcmp.gt.f32.partialorder %v747, 0.0
      %vm838 = vcmp.gt.f32.partialorder %v752, 0.0
      %vm839 = vcmp.gt.f32.partialorder %v755, 0.0
      %vm840 = vcmp.gt.f32.partialorder %v760, 0.0
      %vm841 = vcmp.gt.f32.partialorder %v763, 0.0
      %vm842 = vcmp.gt.f32.partialorder %v768, 0.0
      %vm843 = vcmp.gt.f32.partialorder %v771, 0.0
      %vm844 = vcmp.gt.f32.partialorder %v776, 0.0
      %vm845 = vcmp.gt.f32.partialorder %v779, 0.0
      %v846 = vmul.f32 %v528, 0.2
      %v847 = vmul.f32 %v531, 0.2
      %v848 = vmul.f32 %v536, 0.2
      %v849 = vmul.f32 %v539, 0.2
      %v850 = vmul.f32 %v544, 0.2
      %v851 = vmul.f32 %v547, 0.2
      %v852 = vmul.f32 %v552, 0.2
      %v853 = vmul.f32 %v555, 0.2
      %v854 = vmul.f32 %v560, 0.2
      %v855 = vmul.f32 %v563, 0.2
      %v856 = vmul.f32 %v568, 0.2
      %v857 = vmul.f32 %v571, 0.2
      %v858 = vmul.f32 %v576, 0.2
      %v859 = vmul.f32 %v579, 0.2
      %v860 = vmul.f32 %v584, 0.2
      %v861 = vmul.f32 %v587, 0.2
      %v862 = vmul.f32 %v592, 0.2
      %v863 = vmul.f32 %v595, 0.2
      %v864 = vmul.f32 %v600, 0.2
      %v865 = vmul.f32 %v603, 0.2
      %v866 = vmul.f32 %v608, 0.2
      %v867 = vmul.f32 %v611, 0.2
      %v868 = vmul.f32 %v616, 0.2
      %v869 = vmul.f32 %v619, 0.2
      %v870 = vmul.f32 %v624, 0.2
      %v871 = vmul.f32 %v627, 0.2
      %v872 = vmul.f32 %v632, 0.2
      %v873 = vmul.f32 %v635, 0.2
      %v874 = vmul.f32 %v640, 0.2
      %v875 = vmul.f32 %v643, 0.2
      %v876 = vmul.f32 %v648, 0.2
      %v877 = vmul.f32 %v651, 0.2
      %v878 = vmul.f32 %v656, 0.2
      %v879 = vmul.f32 %v659, 0.2
      %v880 = vmul.f32 %v664, 0.2
      %v881 = vmul.f32 %v667, 0.2
      %v882 = vmul.f32 %v672, 0.2
      %v883 = vmul.f32 %v675, 0.2
      %v884 = vmul.f32 %v680, 0.2
      %v885 = vmul.f32 %v683, 0.2
      %v886 = vmul.f32 %v688, 0.2
      %v887 = vmul.f32 %v691, 0.2
      %v888 = vmul.f32 %v696, 0.2
      %v889 = vmul.f32 %v699, 0.2
      %v890 = vmul.f32 %v704, 0.2
      %v891 = vmul.f32 %v707, 0.2
      %v892 = vmul.f32 %v712, 0.2
      %v893 = vmul.f32 %v715, 0.2
      %v894 = vmul.f32 %v720, 0.2
      %v895 = vmul.f32 %v723, 0.2
      %v896 = vmul.f32 %v728, 0.2
      %v897 = vmul.f32 %v731, 0.2
      %v898 = vmul.f32 %v736, 0.2
      %v899 = vmul.f32 %v739, 0.2
      %v900 = vmul.f32 %v744, 0.2
      %v901 = vmul.f32 %v747, 0.2
      %v902 = vmul.f32 %v752, 0.2
      %v903 = vmul.f32 %v755, 0.2
      %v904 = vmul.f32 %v760, 0.2
      %v905 = vmul.f32 %v763, 0.2
      %v906 = vmul.f32 %v768, 0.2
      %v907 = vmul.f32 %v771, 0.2
      %v908 = vmul.f32 %v776, 0.2
      %v909 = vmul.f32 %v779, 0.2
      %v910 = vsel %vm782, %v528, %v846
      %v911 = vsel %vm783, %v531, %v847
      %v912 = vsel %vm784, %v536, %v848
      %v913 = vsel %vm785, %v539, %v849
      %v914 = vsel %vm786, %v544, %v850
      %v915 = vsel %vm787, %v547, %v851
      %v916 = vsel %vm788, %v552, %v852
      %v917 = vsel %vm789, %v555, %v853
      %v918 = vsel %vm790, %v560, %v854
      %v919 = vsel %vm791, %v563, %v855
      %v920 = vsel %vm792, %v568, %v856
      %v921 = vsel %vm793, %v571, %v857
      %v922 = vsel %vm794, %v576, %v858
      %v923 = vsel %vm795, %v579, %v859
      %v924 = vsel %vm796, %v584, %v860
      %v925 = vsel %vm797, %v587, %v861
      %v926 = vsel %vm798, %v592, %v862
      %v927 = vsel %vm799, %v595, %v863
      %v928 = vsel %vm800, %v600, %v864
      %v929 = vsel %vm801, %v603, %v865
      %v930 = vsel %vm802, %v608, %v866
      %v931 = vsel %vm803, %v611, %v867
      %v932 = vsel %vm804, %v616, %v868
      %v933 = vsel %vm805, %v619, %v869
      %v934 = vsel %vm806, %v624, %v870
      %v935 = vsel %vm807, %v627, %v871
      %v936 = vsel %vm808, %v632, %v872
      %v937 = vsel %vm809, %v635, %v873
      %v938 = vsel %vm810, %v640, %v874
      %v939 = vsel %vm811, %v643, %v875
      %v940 = vsel %vm812, %v648, %v876
      %v941 = vsel %vm813, %v651, %v877
      %v942 = vsel %vm814, %v656, %v878
      %v943 = vsel %vm815, %v659, %v879
      %v944 = vsel %vm816, %v664, %v880
      %v945 = vsel %vm817, %v667, %v881
      %v946 = vsel %vm818, %v672, %v882
      %v947 = vsel %vm819, %v675, %v883
      %v948 = vsel %vm820, %v680, %v884
      %v949 = vsel %vm821, %v683, %v885
      %v950 = vsel %vm822, %v688, %v886
      %v951 = vsel %vm823, %v691, %v887
      %v952 = vsel %vm824, %v696, %v888
      %v953 = vsel %vm825, %v699, %v889
      %v954 = vsel %vm826, %v704, %v890
      %v955 = vsel %vm827, %v707, %v891
      %v956 = vsel %vm828, %v712, %v892
      %v957 = vsel %vm829, %v715, %v893
      %v958 = vsel %vm830, %v720, %v894
      %v959 = vsel %vm831, %v723, %v895
      %v960 = vsel %vm832, %v728, %v896
      %v961 = vsel %vm833, %v731, %v897
      %v962 = vsel %vm834, %v736, %v898
      %v963 = vsel %vm835, %v739, %v899
      %v964 = vsel %vm836, %v744, %v900
      %v965 = vsel %vm837, %v747, %v901
      %v966 = vsel %vm838, %v752, %v902
      %v967 = vsel %vm839, %v755, %v903
      %v968 = vsel %vm840, %v760, %v904
      %v969 = vsel %vm841, %v763, %v905
      %v970 = vsel %vm842, %v768, %v906
      %v971 = vsel %vm843, %v771, %v907
      %v972 = vsel %vm844, %v776, %v908
      %v973 = vsel %vm845, %v779, %v909
      %v974 = vpack.c.bf16 %v911, %v910
      %v975 = vpack.c.bf16 %v913, %v912
      %v976 = vpack.c.bf16 %v915, %v914
      %v977 = vpack.c.bf16 %v917, %v916
      %v978 = vpack.c.bf16 %v919, %v918
      %v979 = vpack.c.bf16 %v921, %v920
      %v980 = vpack.c.bf16 %v923, %v922
      %v981 = vpack.c.bf16 %v925, %v924
      %v982 = vpack.c.bf16 %v927, %v926
      %v983 = vpack.c.bf16 %v929, %v928
      %v984 = vpack.c.bf16 %v931, %v930
      %v985 = vpack.c.bf16 %v933, %v932
      %v986 = vpack.c.bf16 %v935, %v934
      %v987 = vpack.c.bf16 %v937, %v936
      %v988 = vpack.c.bf16 %v939, %v938
      %v989 = vpack.c.bf16 %v941, %v940
      %v990 = vpack.c.bf16 %v943, %v942
      %v991 = vpack.c.bf16 %v945, %v944
      %v992 = vpack.c.bf16 %v947, %v946
      %v993 = vpack.c.bf16 %v949, %v948
      %v994 = vpack.c.bf16 %v951, %v950
      %v995 = vpack.c.bf16 %v953, %v952
      %v996 = vpack.c.bf16 %v955, %v954
      %v997 = vpack.c.bf16 %v957, %v956
      %v998 = vpack.c.bf16 %v959, %v958
      %v999 = vpack.c.bf16 %v961, %v960
      %v1000 = vpack.c.bf16 %v963, %v962
      %v1001 = vpack.c.bf16 %v965, %v964
      %v1002 = vpack.c.bf16 %v967, %v966
      %v1003 = vpack.c.bf16 %v969, %v968
      %v1004 = vpack.c.bf16 %v971, %v970
      %v1005 = vpack.c.bf16 %v973, %v972
      %v1038 = vunpack.c.l.b16 %v974
      %v1039 = vunpack.c.h.b16 %v974
      %v1040 = vunpack.c.l.b16 %v975
      %v1041 = vunpack.c.h.b16 %v975
      %v1042 = vunpack.c.l.b16 %v976
      %v1043 = vunpack.c.h.b16 %v976
      %v1044 = vunpack.c.l.b16 %v977
      %v1045 = vunpack.c.h.b16 %v977
      %v1046 = vunpack.c.l.b16 %v978
      %v1047 = vunpack.c.h.b16 %v978
      %v1048 = vunpack.c.l.b16 %v979
      %v1049 = vunpack.c.h.b16 %v979
      %v1050 = vunpack.c.l.b16 %v980
      %v1051 = vunpack.c.h.b16 %v980
      %v1052 = vunpack.c.l.b16 %v981
      %v1053 = vunpack.c.h.b16 %v981
      %v1054 = vunpack.c.l.b16 %v982
      %v1055 = vunpack.c.h.b16 %v982
      %v1056 = vunpack.c.l.b16 %v983
      %v1057 = vunpack.c.h.b16 %v983
      %v1058 = vunpack.c.l.b16 %v984
      %v1059 = vunpack.c.h.b16 %v984
      %v1060 = vunpack.c.l.b16 %v985
      %v1061 = vunpack.c.h.b16 %v985
      %v1062 = vunpack.c.l.b16 %v986
      %v1063 = vunpack.c.h.b16 %v986
      %v1064 = vunpack.c.l.b16 %v987
      %v1065 = vunpack.c.h.b16 %v987
      %v1066 = vunpack.c.l.b16 %v988
      %v1067 = vunpack.c.h.b16 %v988
      %v1068 = vunpack.c.l.b16 %v989
      %v1069 = vunpack.c.h.b16 %v989
      %v1070 = vunpack.c.l.b16 %v990
      %v1071 = vunpack.c.h.b16 %v990
      %v1072 = vunpack.c.l.b16 %v991
      %v1073 = vunpack.c.h.b16 %v991
      %v1074 = vunpack.c.l.b16 %v992
      %v1075 = vunpack.c.h.b16 %v992
      %v1076 = vunpack.c.l.b16 %v993
      %v1077 = vunpack.c.h.b16 %v993
      %v1078 = vunpack.c.l.b16 %v994
      %v1079 = vunpack.c.h.b16 %v994
      %v1080 = vunpack.c.l.b16 %v995
      %v1081 = vunpack.c.h.b16 %v995
      %v1082 = vunpack.c.l.b16 %v996
      %v1083 = vunpack.c.h.b16 %v996
      %v1084 = vunpack.c.l.b16 %v997
      %v1085 = vunpack.c.h.b16 %v997
      %v1086 = vunpack.c.l.b16 %v998
      %v1087 = vunpack.c.h.b16 %v998
      %v1088 = vunpack.c.l.b16 %v999
      %v1089 = vunpack.c.h.b16 %v999
      %v1090 = vunpack.c.l.b16 %v1000
      %v1091 = vunpack.c.h.b16 %v1000
      %v1092 = vunpack.c.l.b16 %v1001
      %v1093 = vunpack.c.h.b16 %v1001
      %v1094 = vunpack.c.l.b16 %v1002
      %v1095 = vunpack.c.h.b16 %v1002
      %v1096 = vunpack.c.l.b16 %v1003
      %v1097 = vunpack.c.h.b16 %v1003
      %v1098 = vunpack.c.l.b16 %v1004
      %v1099 = vunpack.c.h.b16 %v1004
      %v1100 = vunpack.c.l.b16 %v1005
      %v1101 = vunpack.c.h.b16 %v1005
      %v1102 = vpack.c.b16 %v1038, %v1038
      %v1103 = vpack.c.b16 %v1039, %v1039
      %v1104 = vpack.c.b16 %v1040, %v1040
      %v1105 = vpack.c.b16 %v1041, %v1041
      %v1106 = vpack.c.b16 %v1042, %v1042
      %v1107 = vpack.c.b16 %v1043, %v1043
      %v1108 = vpack.c.b16 %v1044, %v1044
      %v1109 = vpack.c.b16 %v1045, %v1045
      %v1110 = vpack.c.b16 %v1046, %v1046
      %v1111 = vpack.c.b16 %v1047, %v1047
      %v1112 = vpack.c.b16 %v1048, %v1048
      %v1113 = vpack.c.b16 %v1049, %v1049
      %v1114 = vpack.c.b16 %v1050, %v1050
      %v1115 = vpack.c.b16 %v1051, %v1051
      %v1116 = vpack.c.b16 %v1052, %v1052
      %v1117 = vpack.c.b16 %v1053, %v1053
      %v1118 = vpack.c.b16 %v1054, %v1054
      %v1119 = vpack.c.b16 %v1055, %v1055
      %v1120 = vpack.c.b16 %v1056, %v1056
      %v1121 = vpack.c.b16 %v1057, %v1057
      %v1122 = vpack.c.b16 %v1058, %v1058
      %v1123 = vpack.c.b16 %v1059, %v1059
      %v1124 = vpack.c.b16 %v1060, %v1060
      %v1125 = vpack.c.b16 %v1061, %v1061
      %v1126 = vpack.c.b16 %v1062, %v1062
      %v1127 = vpack.c.b16 %v1063, %v1063
      %v1128 = vpack.c.b16 %v1064, %v1064
      %v1129 = vpack.c.b16 %v1065, %v1065
      %v1130 = vpack.c.b16 %v1066, %v1066
      %v1131 = vpack.c.b16 %v1067, %v1067
      %v1132 = vpack.c.b16 %v1068, %v1068
      %v1133 = vpack.c.b16 %v1069, %v1069
      %v1134 = vpack.c.b16 %v1070, %v1070
      %v1135 = vpack.c.b16 %v1071, %v1071
      %v1136 = vpack.c.b16 %v1072, %v1072
      %v1137 = vpack.c.b16 %v1073, %v1073
      %v1138 = vpack.c.b16 %v1074, %v1074
      %v1139 = vpack.c.b16 %v1075, %v1075
      %v1140 = vpack.c.b16 %v1076, %v1076
      %v1141 = vpack.c.b16 %v1077, %v1077
      %v1142 = vpack.c.b16 %v1078, %v1078
      %v1143 = vpack.c.b16 %v1079, %v1079
      %v1144 = vpack.c.b16 %v1080, %v1080
      %v1145 = vpack.c.b16 %v1081, %v1081
      %v1146 = vpack.c.b16 %v1082, %v1082
      %v1147 = vpack.c.b16 %v1083, %v1083
      %v1148 = vpack.c.b16 %v1084, %v1084
      %v1149 = vpack.c.b16 %v1085, %v1085
      %v1150 = vpack.c.b16 %v1086, %v1086
      %v1151 = vpack.c.b16 %v1087, %v1087
      %v1152 = vpack.c.b16 %v1088, %v1088
      %v1153 = vpack.c.b16 %v1089, %v1089
      %v1154 = vpack.c.b16 %v1090, %v1090
      %v1155 = vpack.c.b16 %v1091, %v1091
      %v1156 = vpack.c.b16 %v1092, %v1092
      %v1157 = vpack.c.b16 %v1093, %v1093
      %v1158 = vpack.c.b16 %v1094, %v1094
      %v1159 = vpack.c.b16 %v1095, %v1095
      %v1160 = vpack.c.b16 %v1096, %v1096
      %v1161 = vpack.c.b16 %v1097, %v1097
      %v1162 = vpack.c.b16 %v1098, %v1098
      %v1163 = vpack.c.b16 %v1099, %v1099
      %v1164 = vpack.c.b16 %v1100, %v1100
      %v1165 = vpack.c.b16 %v1101, %v1101
      %1230 = vst [vmem:[%s145] sm:$0xf] %v1102
      %1231 = vst [vmem:[%s145 + $0x4] sm:$0xf] %v1103
      %1232 = vst [vmem:[%s145 + $0x8] sm:$0xf] %v1104
      %1233 = vst [vmem:[%s145 + $0xc] sm:$0xf] %v1105
      %1234 = vst [vmem:[%s145 + $0x10] sm:$0xf] %v1106
      %1235 = vst [vmem:[%s145 + $0x14] sm:$0xf] %v1107
      %1236 = vst [vmem:[%s145 + $0x18] sm:$0xf] %v1108
      %1237 = vst [vmem:[%s145 + $0x1c] sm:$0xf] %v1109
      %1238 = vst [vmem:[%s145 + $0x20] sm:$0xf] %v1110
      %1239 = vst [vmem:[%s145 + $0x24] sm:$0xf] %v1111
      %1240 = vst [vmem:[%s145 + $0x28] sm:$0xf] %v1112
      %1241 = vst [vmem:[%s145 + $0x2c] sm:$0xf] %v1113
      %1242 = vst [vmem:[%s145 + $0x30] sm:$0xf] %v1114
      %1243 = vst [vmem:[%s145 + $0x34] sm:$0xf] %v1115
      %1244 = vst [vmem:[%s145 + $0x38] sm:$0xf] %v1116
      %1245 = vst [vmem:[%s145 + $0x3c] sm:$0xf] %v1117
      %1246 = vst [vmem:[%s145 + $0x40] sm:$0xf] %v1118
      %1247 = vst [vmem:[%s145 + $0x44] sm:$0xf] %v1119
      %1248 = vst [vmem:[%s145 + $0x48] sm:$0xf] %v1120
      %1249 = vst [vmem:[%s145 + $0x4c] sm:$0xf] %v1121
      %1250 = vst [vmem:[%s145 + $0x50] sm:$0xf] %v1122
      %1251 = vst [vmem:[%s145 + $0x54] sm:$0xf] %v1123
      %1252 = vst [vmem:[%s145 + $0x58] sm:$0xf] %v1124
      %1253 = vst [vmem:[%s145 + $0x5c] sm:$0xf] %v1125
      %1254 = vst [vmem:[%s145 + $0x60] sm:$0xf] %v1126
      %1255 = vst [vmem:[%s145 + $0x64] sm:$0xf] %v1127
      %1256 = vst [vmem:[%s145 + $0x68] sm:$0xf] %v1128
      %1257 = vst [vmem:[%s145 + $0x6c] sm:$0xf] %v1129
      %1258 = vst [vmem:[%s145 + $0x70] sm:$0xf] %v1130
      %1259 = vst [vmem:[%s145 + $0x74] sm:$0xf] %v1131
      %1260 = vst [vmem:[%s145 + $0x78] sm:$0xf] %v1132
      %1261 = vst [vmem:[%s145 + $0x7c] sm:$0xf] %v1133
      %1262 = vst [vmem:[%s145 + $0x80] sm:$0xf] %v1134
      %1263 = vst [vmem:[%s145 + $0x84] sm:$0xf] %v1135
      %1264 = vst [vmem:[%s145 + $0x88] sm:$0xf] %v1136
      %1265 = vst [vmem:[%s145 + $0x8c] sm:$0xf] %v1137
      %1266 = vst [vmem:[%s145 + $0x90] sm:$0xf] %v1138
      %1267 = vst [vmem:[%s145 + $0x94] sm:$0xf] %v1139
      %1268 = vst [vmem:[%s145 + $0x98] sm:$0xf] %v1140
      %1269 = vst [vmem:[%s145 + $0x9c] sm:$0xf] %v1141
      %1270 = vst [vmem:[%s145 + $0xa0] sm:$0xf] %v1142
      %1271 = vst [vmem:[%s145 + $0xa4] sm:$0xf] %v1143
      %1272 = vst [vmem:[%s145 + $0xa8] sm:$0xf] %v1144
      %1273 = vst [vmem:[%s145 + $0xac] sm:$0xf] %v1145
      %1274 = vst [vmem:[%s145 + $0xb0] sm:$0xf] %v1146
      %1275 = vst [vmem:[%s145 + $0xb4] sm:$0xf] %v1147
      %1276 = vst [vmem:[%s145 + $0xb8] sm:$0xf] %v1148
      %1277 = vst [vmem:[%s145 + $0xbc] sm:$0xf] %v1149
      %1278 = vst [vmem:[%s145 + $0xc0] sm:$0xf] %v1150
      %1279 = vst [vmem:[%s145 + $0xc4] sm:$0xf] %v1151
      %1280 = vst [vmem:[%s145 + $0xc8] sm:$0xf] %v1152
      %1281 = vst [vmem:[%s145 + $0xcc] sm:$0xf] %v1153
      %1282 = vst [vmem:[%s145 + $0xd0] sm:$0xf] %v1154
      %1283 = vst [vmem:[%s145 + $0xd4] sm:$0xf] %v1155
      %1284 = vst [vmem:[%s145 + $0xd8] sm:$0xf] %v1156
      %1285 = vst [vmem:[%s145 + $0xdc] sm:$0xf] %v1157
      %1286 = vst [vmem:[%s145 + $0xe0] sm:$0xf] %v1158
      %1287 = vst [vmem:[%s145 + $0xe4] sm:$0xf] %v1159
      %1288 = vst [vmem:[%s145 + $0xe8] sm:$0xf] %v1160
      %1289 = vst [vmem:[%s145 + $0xec] sm:$0xf] %v1161
      %1290 = vst [vmem:[%s145 + $0xf0] sm:$0xf] %v1162
      %1291 = vst [vmem:[%s145 + $0xf4] sm:$0xf] %v1163
      %1292 = vst [vmem:[%s145 + $0xf8] sm:$0xf] %v1164
      %1293 = vst [vmem:[%s145 + $0xfc] sm:$0xf] %v1165
      %s1294 = smul.u32 64, %s13
      %p1295 = scmp.lt.s32.totalorder %s1294, 255
      %s1296 = scalar_select %p1295, %s1294, 255
      %s1297 = smul.addr %s1296, 4
      %s1298 = scalar_lea.vmem %s2, %s1297
      // Predicated region
      $region29: #{discriminator_forward.7} parent=27 // pred_check
        %p1299 = pneg %p78
      $region30: #{discriminator_forward.7} parent=27 // pred_check_branch
        %1301 = sbr.rel (%p1299) target = $region32
      $region31: #{discriminator_forward.7} parent=27 // pred_region
        %s1302 = smul.u32 64, %s13
      $region32: #{discriminator_forward.7} parent=27 // pred_fallthru
        _
    $region28: #{discriminator_forward.7} parent=5 // pred_fallthru
      _
    %p1303 = scmp.le.s32.totalorder 2, %s8
    // Predicated region
    $region33: #{discriminator_forward.7} parent=5 // pred_check
      %p1304 = pneg %p1303
    $region34: #{discriminator_forward.7} parent=5 // pred_check_branch
      %1306 = sbr.rel (%p1304) target = $region36
    $region35: #{discriminator_forward.7} parent=5 // pred_region
      %s1307 = ssub.s32 %s8, 2
      // Predicated region
      $region37: #{discriminator_forward.7} parent=35 // pred_check
        %p1308 = pneg %p84
      $region38: #{discriminator_forward.7} parent=35 // pred_check_branch
        %1310 = sbr.rel (%p1308) target = $region40
      $region39: #{discriminator_forward.7} parent=35 // pred_region
        %s1311 = smul.u32 64, %s14
        %p1312 = scmp.lt.s32.totalorder %s1311, 255
        %s1313 = scalar_select %p1312, %s1311, 255
        %s1314 = smul.addr %s1313, 4
        %s1315 = scalar_lea.vmem %s2, %s1314
      $region40: #{discriminator_forward.7} parent=35 // pred_fallthru
        _
    $region36: #{discriminator_forward.7} parent=5 // pred_fallthru
      _
  $region6: #{discriminator_forward.7} parent=0 // loop_footer
    %s12 = sadd.s32 1, %s8
  $region7: #{discriminator_forward.7} parent=0 // loop_footer_branch
    %7 = sbr.rel target = $region3
  $region8: #{discriminator_forward.7} parent=0 // loop_exit
    _

// kernel: discriminator_forward.8
$region0: #{discriminator_forward.8}
  #allocation0 [shape = 'u32[]', space=smem, size = 0x4, offset = 0x4, fixed_abs, tag = 'smem constant byte address 0x4 - core index']
  #allocation1 [shape = 'u32[144,128]{1,0:T(1,128)}', space=vmem, size = 0x12000, scoped, tag = 'internal scratch']
  %s0 = inlined_call_operand.vmem [shape: bf16[512,128], index: 0, kind: input, shape index: {}]
  %s1 = inlined_call_operand.vmem [shape: bf16[128,128], index: 1, kind: input, shape index: {}]
  %s2 = inlined_call_operand.vmem [shape: bf16[512,128], index: 2, kind: output, shape index: {0}]
  %s3 = inlined_call_operand.vmem [shape: f32[1,128], index: 3, kind: output, shape index: {1}]
  %s4 = inlined_call_operand.vmem [shape: f32[1,128], index: 4, kind: output, shape index: {2}]
  %5 = xla_tuple %s2, %s3, %s4
  %s6 = sld [smem:[#allocation0]]
  $region38: #{discriminator_forward.8} parent=0
    _
  %s8 = ssub.s32 1, %s6
  %s9 = scalar_select 0, %s8, %s6
  // Predicated region
  $region2: #{discriminator_forward.8} parent=0 // pred_check
    _
  $region3: #{discriminator_forward.8} parent=0 // pred_check_branch
    %11 = sbr.rel (0) target = $region5
  $region4: #{discriminator_forward.8} parent=0 // pred_region
    _
  $region5: #{discriminator_forward.8} parent=0 // pred_fallthru
    _
  // Predicated region
  $region6: #{discriminator_forward.8} parent=0 // pred_check
    _
  $region7: #{discriminator_forward.8} parent=0 // pred_check_branch
    %13 = sbr.rel (0) target = $region9
  $region8: #{discriminator_forward.8} parent=0 // pred_region
    _
  $region9: #{discriminator_forward.8} parent=0 // pred_fallthru
    _
  %v15 = vld [vmem:[%s0] sm:$0xf]
  %v16 = vld [vmem:[%s0 + $0x4] sm:$0xf]
  %v17 = vld [vmem:[%s0 + $0x8] sm:$0xf]
  %v18 = vld [vmem:[%s0 + $0xc] sm:$0xf]
  %v19 = vld [vmem:[%s0 + $0x10] sm:$0xf]
  %v20 = vld [vmem:[%s0 + $0x14] sm:$0xf]
  %v21 = vld [vmem:[%s0 + $0x18] sm:$0xf]
  %v22 = vld [vmem:[%s0 + $0x1c] sm:$0xf]
  %v23 = vld [vmem:[%s0 + $0x20] sm:$0xf]
  %v24 = vld [vmem:[%s0 + $0x24] sm:$0xf]
  %v25 = vld [vmem:[%s0 + $0x28] sm:$0xf]
  %v26 = vld [vmem:[%s0 + $0x2c] sm:$0xf]
  %v27 = vld [vmem:[%s0 + $0x30] sm:$0xf]
  %v28 = vld [vmem:[%s0 + $0x34] sm:$0xf]
  %v29 = vld [vmem:[%s0 + $0x38] sm:$0xf]
  %v30 = vld [vmem:[%s0 + $0x3c] sm:$0xf]
  %v31 = vld [vmem:[%s0 + $0x40] sm:$0xf]
  %v32 = vld [vmem:[%s0 + $0x44] sm:$0xf]
  %v33 = vld [vmem:[%s0 + $0x48] sm:$0xf]
  %v34 = vld [vmem:[%s0 + $0x4c] sm:$0xf]
  %v35 = vld [vmem:[%s0 + $0x50] sm:$0xf]
  %v36 = vld [vmem:[%s0 + $0x54] sm:$0xf]
  %v37 = vld [vmem:[%s0 + $0x58] sm:$0xf]
  %v38 = vld [vmem:[%s0 + $0x5c] sm:$0xf]
  %v39 = vld [vmem:[%s0 + $0x60] sm:$0xf]
  %v40 = vld [vmem:[%s0 + $0x64] sm:$0xf]
  %v41 = vld [vmem:[%s0 + $0x68] sm:$0xf]
  %v42 = vld [vmem:[%s0 + $0x6c] sm:$0xf]
  %v43 = vld [vmem:[%s0 + $0x70] sm:$0xf]
  %v44 = vld [vmem:[%s0 + $0x74] sm:$0xf]
  %v45 = vld [vmem:[%s0 + $0x78] sm:$0xf]
  %v46 = vld [vmem:[%s0 + $0x7c] sm:$0xf]
  %v47 = vld [vmem:[%s0 + $0x80] sm:$0xf]
  %v48 = vld [vmem:[%s0 + $0x84] sm:$0xf]
  %v49 = vld [vmem:[%s0 + $0x88] sm:$0xf]
  %v50 = vld [vmem:[%s0 + $0x8c] sm:$0xf]
  %v51 = vld [vmem:[%s0 + $0x90] sm:$0xf]
  %v52 = vld [vmem:[%s0 + $0x94] sm:$0xf]
  %v53 = vld [vmem:[%s0 + $0x98] sm:$0xf]
  %v54 = vld [vmem:[%s0 + $0x9c] sm:$0xf]
  %v55 = vld [vmem:[%s0 + $0xa0] sm:$0xf]
  %v56 = vld [vmem:[%s0 + $0xa4] sm:$0xf]
  %v57 = vld [vmem:[%s0 + $0xa8] sm:$0xf]
  %v58 = vld [vmem:[%s0 + $0xac] sm:$0xf]
  %v59 = vld [vmem:[%s0 + $0xb0] sm:$0xf]
  %v60 = vld [vmem:[%s0 + $0xb4] sm:$0xf]
  %v61 = vld [vmem:[%s0 + $0xb8] sm:$0xf]
  %v62 = vld [vmem:[%s0 + $0xbc] sm:$0xf]
  %v63 = vld [vmem:[%s0 + $0xc0] sm:$0xf]
  %v64 = vld [vmem:[%s0 + $0xc4] sm:$0xf]
  %v65 = vld [vmem:[%s0 + $0xc8] sm:$0xf]
  %v66 = vld [vmem:[%s0 + $0xcc] sm:$0xf]
  %v67 = vld [vmem:[%s0 + $0xd0] sm:$0xf]
  %v68 = vld [vmem:[%s0 + $0xd4] sm:$0xf]
  %v69 = vld [vmem:[%s0 + $0xd8] sm:$0xf]
  %v70 = vld [vmem:[%s0 + $0xdc] sm:$0xf]
  %v71 = vld [vmem:[%s0 + $0xe0] sm:$0xf]
  %v72 = vld [vmem:[%s0 + $0xe4] sm:$0xf]
  %v73 = vld [vmem:[%s0 + $0xe8] sm:$0xf]
  %v74 = vld [vmem:[%s0 + $0xec] sm:$0xf]
  %v75 = vld [vmem:[%s0 + $0xf0] sm:$0xf]
  %v76 = vld [vmem:[%s0 + $0xf4] sm:$0xf]
  %v77 = vld [vmem:[%s0 + $0xf8] sm:$0xf]
  %v78 = vld [vmem:[%s0 + $0xfc] sm:$0xf]
  %v79 = vld [vmem:[%s1] sm:$0xf]
  %v80 = vld [vmem:[%s1 + $0x4] sm:$0xf]
  %v81 = vld [vmem:[%s1 + $0x8] sm:$0xf]
  %v82 = vld [vmem:[%s1 + $0xc] sm:$0xf]
  %v83 = vld [vmem:[%s1 + $0x10] sm:$0xf]
  %v84 = vld [vmem:[%s1 + $0x14] sm:$0xf]
  %v85 = vld [vmem:[%s1 + $0x18] sm:$0xf]
  %v86 = vld [vmem:[%s1 + $0x1c] sm:$0xf]
  %v87 = vld [vmem:[%s1 + $0x20] sm:$0xf]
  %v88 = vld [vmem:[%s1 + $0x24] sm:$0xf]
  %v89 = vld [vmem:[%s1 + $0x28] sm:$0xf]
  %v90 = vld [vmem:[%s1 + $0x2c] sm:$0xf]
  %v91 = vld [vmem:[%s1 + $0x30] sm:$0xf]
  %v92 = vld [vmem:[%s1 + $0x34] sm:$0xf]
  %v93 = vld [vmem:[%s1 + $0x38] sm:$0xf]
  %v94 = vld [vmem:[%s1 + $0x3c] sm:$0xf]
  %v159 = vunpack.c.l.b16 %v15
  %v160 = vunpack.c.l.b16 %v16
  %v161 = vunpack.c.l.b16 %v17
  %v162 = vunpack.c.l.b16 %v18
  %v163 = vunpack.c.l.b16 %v19
  %v164 = vunpack.c.l.b16 %v20
  %v165 = vunpack.c.l.b16 %v21
  %v166 = vunpack.c.l.b16 %v22
  %v167 = vunpack.c.l.b16 %v23
  %v168 = vunpack.c.l.b16 %v24
  %v169 = vunpack.c.l.b16 %v25
  %v170 = vunpack.c.l.b16 %v26
  %v171 = vunpack.c.l.b16 %v27
  %v172 = vunpack.c.l.b16 %v28
  %v173 = vunpack.c.l.b16 %v29
  %v174 = vunpack.c.l.b16 %v30
  %v175 = vunpack.c.l.b16 %v31
  %v176 = vunpack.c.l.b16 %v32
  %v177 = vunpack.c.l.b16 %v33
  %v178 = vunpack.c.l.b16 %v34
  %v179 = vunpack.c.l.b16 %v35
  %v180 = vunpack.c.l.b16 %v36
  %v181 = vunpack.c.l.b16 %v37
  %v182 = vunpack.c.l.b16 %v38
  %v183 = vunpack.c.l.b16 %v39
  %v184 = vunpack.c.l.b16 %v40
  %v185 = vunpack.c.l.b16 %v41
  %v186 = vunpack.c.l.b16 %v42
  %v187 = vunpack.c.l.b16 %v43
  %v188 = vunpack.c.l.b16 %v44
  %v189 = vunpack.c.l.b16 %v45
  %v190 = vunpack.c.l.b16 %v46
  %v191 = vunpack.c.l.b16 %v47
  %v192 = vunpack.c.l.b16 %v48
  %v193 = vunpack.c.l.b16 %v49
  %v194 = vunpack.c.l.b16 %v50
  %v195 = vunpack.c.l.b16 %v51
  %v196 = vunpack.c.l.b16 %v52
  %v197 = vunpack.c.l.b16 %v53
  %v198 = vunpack.c.l.b16 %v54
  %v199 = vunpack.c.l.b16 %v55
  %v200 = vunpack.c.l.b16 %v56
  %v201 = vunpack.c.l.b16 %v57
  %v202 = vunpack.c.l.b16 %v58
  %v203 = vunpack.c.l.b16 %v59
  %v204 = vunpack.c.l.b16 %v60
  %v205 = vunpack.c.l.b16 %v61
  %v206 = vunpack.c.l.b16 %v62
  %v207 = vunpack.c.l.b16 %v63
  %v208 = vunpack.c.l.b16 %v64
  %v209 = vunpack.c.l.b16 %v65
  %v210 = vunpack.c.l.b16 %v66
  %v211 = vunpack.c.l.b16 %v67
  %v212 = vunpack.c.l.b16 %v68
  %v213 = vunpack.c.l.b16 %v69
  %v214 = vunpack.c.l.b16 %v70
  %v215 = vunpack.c.l.b16 %v71
  %v216 = vunpack.c.l.b16 %v72
  %v217 = vunpack.c.l.b16 %v73
  %v218 = vunpack.c.l.b16 %v74
  %v219 = vunpack.c.l.b16 %v75
  %v220 = vunpack.c.l.b16 %v76
  %v221 = vunpack.c.l.b16 %v77
  %v222 = vunpack.c.l.b16 %v78
  %v223 = vpack.c.b16 %v160, %v159
  %v224 = vpack.c.b16 %v162, %v161
  %v225 = vpack.c.b16 %v164, %v163
  %v226 = vpack.c.b16 %v166, %v165
  %v227 = vpack.c.b16 %v168, %v167
  %v228 = vpack.c.b16 %v170, %v169
  %v229 = vpack.c.b16 %v172, %v171
  %v230 = vpack.c.b16 %v174, %v173
  %v231 = vpack.c.b16 %v176, %v175
  %v232 = vpack.c.b16 %v178, %v177
  %v233 = vpack.c.b16 %v180, %v179
  %v234 = vpack.c.b16 %v182, %v181
  %v235 = vpack.c.b16 %v184, %v183
  %v236 = vpack.c.b16 %v186, %v185
  %v237 = vpack.c.b16 %v188, %v187
  %v238 = vpack.c.b16 %v190, %v189
  %v239 = vpack.c.b16 %v192, %v191
  %v240 = vpack.c.b16 %v194, %v193
  %v241 = vpack.c.b16 %v196, %v195
  %v242 = vpack.c.b16 %v198, %v197
  %v243 = vpack.c.b16 %v200, %v199
  %v244 = vpack.c.b16 %v202, %v201
  %v245 = vpack.c.b16 %v204, %v203
  %v246 = vpack.c.b16 %v206, %v205
  %v247 = vpack.c.b16 %v208, %v207
  %v248 = vpack.c.b16 %v210, %v209
  %v249 = vpack.c.b16 %v212, %v211
  %v250 = vpack.c.b16 %v214, %v213
  %v251 = vpack.c.b16 %v216, %v215
  %v252 = vpack.c.b16 %v218, %v217
  %v253 = vpack.c.b16 %v220, %v219
  %v254 = vpack.c.b16 %v222, %v221
  %v303 = vunpack.c.l.b16 %v79
  %v304 = vunpack.c.l.b16 %v80
  %v305 = vunpack.c.l.b16 %v81
  %v306 = vunpack.c.l.b16 %v82
  %v307 = vunpack.c.l.b16 %v83
  %v308 = vunpack.c.l.b16 %v84
  %v309 = vunpack.c.l.b16 %v85
  %v310 = vunpack.c.l.b16 %v86
  %v311 = vunpack.c.l.b16 %v87
  %v312 = vunpack.c.l.b16 %v88
  %v313 = vunpack.c.l.b16 %v89
  %v314 = vunpack.c.l.b16 %v90
  %v315 = vunpack.c.l.b16 %v91
  %v316 = vunpack.c.l.b16 %v92
  %v317 = vunpack.c.l.b16 %v93
  %v318 = vunpack.c.l.b16 %v94
  %v319 = vpack.c.b16 %v304, %v303
  %v320 = vpack.c.b16 %v306, %v305
  %v321 = vpack.c.b16 %v308, %v307
  %v322 = vpack.c.b16 %v310, %v309
  %v323 = vpack.c.b16 %v312, %v311
  %v324 = vpack.c.b16 %v314, %v313
  %v325 = vpack.c.b16 %v316, %v315
  %v326 = vpack.c.b16 %v318, %v317
  %335 = vmatprep.subr.bf16.mxu0 0
  %336 = vmatpush1.bf16.msra.mxu0 %v319
  %337 = vmatprep.subr.bf16.mxu0 0
  %338 = vmatpush1.bf16.msra.mxu0 %v320
  %339 = vmatprep.subr.bf16.mxu0 0
  %340 = vmatpush1.bf16.msra.mxu0 %v321
  %341 = vmatprep.subr.bf16.mxu0 0
  %342 = vmatpush1.bf16.msra.mxu0 %v322
  %343 = vmatprep.subr.bf16.mxu0 0
  %344 = vmatpush1.bf16.msra.mxu0 %v323
  %345 = vmatprep.subr.bf16.mxu0 0
  %346 = vmatpush1.bf16.msra.mxu0 %v324
  %347 = vmatprep.subr.bf16.mxu0 0
  %348 = vmatpush1.bf16.msra.mxu0 %v325
  %349 = vmatprep.subr.bf16.mxu0 0
  %350 = vmatpush1.bf16.msra.mxu0 %v326
  %351 = vmatprep.subr.bf16.mxu0 0
  %352 = vmatpush1.bf16.msra.mxu0 0
  %353 = vmatprep.subr.bf16.mxu0 0
  %354 = vmatpush1.bf16.msra.mxu0 0
  %355 = vmatprep.subr.bf16.mxu0 0
  %356 = vmatpush1.bf16.msra.mxu0 0
  %357 = vmatprep.subr.bf16.mxu0 0
  %358 = vmatpush1.bf16.msra.mxu0 0
  %359 = vmatprep.subr.bf16.mxu0 0
  %360 = vmatpush1.bf16.msra.mxu0 0
  %361 = vmatprep.subr.bf16.mxu0 0
  %362 = vmatpush1.bf16.msra.mxu0 0
  %363 = vmatprep.subr.bf16.mxu0 0
  %364 = vmatpush1.bf16.msra.mxu0 0
  %365 = vmatprep.subr.bf16.mxu0 0
  %366 = vmatpush1.bf16.msra.mxu0 0
  %367 = vmatprep.mubr.bf16.mxu0 0
  %368 = vmatmul.mubr.bf16.gmra.mrb[0].mxu0 %v223
  %v369 = vpop.f32.mrb[0].mxu0
  %v370 = vadd.f32 0.0, %v369
  %v371 = vpop.f32.mrb[0].mxu0
  %v372 = vpop.f32.mrb[0].mxu0
  %v373 = vadd.f32 0.0, %v372
  %v374 = vpop.f32.mrb[0].mxu0
  %375 = vmatprep.mubr.bf16.mxu0 0
  %376 = vmatmul.mubr.bf16.gmra.mrb[0].mxu0 %v224
  %v377 = vpop.f32.mrb[0].mxu0
  %v378 = vadd.f32 0.0, %v377
  %v379 = vpop.f32.mrb[0].mxu0
  %v380 = vpop.f32.mrb[0].mxu0
  %v381 = vadd.f32 0.0, %v380
  %v382 = vpop.f32.mrb[0].mxu0
  %383 = vmatprep.mubr.bf16.mxu0 0
  %384 = vmatmul.mubr.bf16.gmra.mrb[0].mxu0 %v225
  %v385 = vpop.f32.mrb[0].mxu0
  %v386 = vadd.f32 0.0, %v385
  %v387 = vpop.f32.mrb[0].mxu0
  %v388 = vpop.f32.mrb[0].mxu0
  %v389 = vadd.f32 0.0, %v388
  %v390 = vpop.f32.mrb[0].mxu0
  %391 = vmatprep.mubr.bf16.mxu0 0
  %392 = vmatmul.mubr.bf16.gmra.mrb[0].mxu0 %v226
  %v393 = vpop.f32.mrb[0].mxu0
  %v394 = vadd.f32 0.0, %v393
  %v395 = vpop.f32.mrb[0].mxu0
  %v396 = vpop.f32.mrb[0].mxu0
  %v397 = vadd.f32 0.0, %v396
  %v398 = vpop.f32.mrb[0].mxu0
  %399 = vmatprep.mubr.bf16.mxu0 0
  %400 = vmatmul.mubr.bf16.gmra.mrb[0].mxu0 %v227
  %v401 = vpop.f32.mrb[0].mxu0
  %v402 = vadd.f32 0.0, %v401
  %v403 = vpop.f32.mrb[0].mxu0
  %v404 = vpop.f32.mrb[0].mxu0
  %v405 = vadd.f32 0.0, %v404
  %v406 = vpop.f32.mrb[0].mxu0
  %407 = vmatprep.mubr.bf16.mxu0 0
  %408 = vmatmul.mubr.bf16.gmra.mrb[0].mxu0 %v228
  %v409 = vpop.f32.mrb[0].mxu0
  %v410 = vadd.f32 0.0, %v409
  %v411 = vpop.f32.mrb[0].mxu0
  %v412 = vpop.f32.mrb[0].mxu0
  %v413 = vadd.f32 0.0, %v412
  %v414 = vpop.f32.mrb[0].mxu0
  %415 = vmatprep.mubr.bf16.mxu0 0
  %416 = vmatmul.mubr.bf16.gmra.mrb[0].mxu0 %v229
  %v417 = vpop.f32.mrb[0].mxu0
  %v418 = vadd.f32 0.0, %v417
  %v419 = vpop.f32.mrb[0].mxu0
  %v420 = vpop.f32.mrb[0].mxu0
  %v421 = vadd.f32 0.0, %v420
  %v422 = vpop.f32.mrb[0].mxu0
  %423 = vmatprep.mubr.bf16.mxu0 0
  %424 = vmatmul.mubr.bf16.gmra.mrb[0].mxu0 %v230
  %v425 = vpop.f32.mrb[0].mxu0
  %v426 = vadd.f32 0.0, %v425
  %v427 = vpop.f32.mrb[0].mxu0
  %v428 = vpop.f32.mrb[0].mxu0
  %v429 = vadd.f32 0.0, %v428
  %v430 = vpop.f32.mrb[0].mxu0
  %431 = vmatprep.mubr.bf16.mxu0 0
  %432 = vmatmul.mubr.bf16.gmra.mrb[0].mxu0 %v231
  %v433 = vpop.f32.mrb[0].mxu0
  %v434 = vadd.f32 0.0, %v433
  %v435 = vpop.f32.mrb[0].mxu0
  %v436 = vpop.f32.mrb[0].mxu0
  %v437 = vadd.f32 0.0, %v436
  %v438 = vpop.f32.mrb[0].mxu0
  %439 = vmatprep.mubr.bf16.mxu0 0
  %440 = vmatmul.mubr.bf16.gmra.mrb[0].mxu0 %v232
  %v441 = vpop.f32.mrb[0].mxu0
  %v442 = vadd.f32 0.0, %v441
  %v443 = vpop.f32.mrb[0].mxu0
  %v444 = vpop.f32.mrb[0].mxu0
  %v445 = vadd.f32 0.0, %v444
  %v446 = vpop.f32.mrb[0].mxu0
  %447 = vmatprep.mubr.bf16.mxu0 0
  %448 = vmatmul.mubr.bf16.gmra.mrb[0].mxu0 %v233
  %v449 = vpop.f32.mrb[0].mxu0
  %v450 = vadd.f32 0.0, %v449
  %v451 = vpop.f32.mrb[0].mxu0
  %v452 = vpop.f32.mrb[0].mxu0
  %v453 = vadd.f32 0.0, %v452
  %v454 = vpop.f32.mrb[0].mxu0
  %455 = vmatprep.mubr.bf16.mxu0 0
  %456 = vmatmul.mubr.bf16.gmra.mrb[0].mxu0 %v234
  %v457 = vpop.f32.mrb[0].mxu0
  %v458 = vadd.f32 0.0, %v457
  %v459 = vpop.f32.mrb[0].mxu0
  %v460 = vpop.f32.mrb[0].mxu0
  %v461 = vadd.f32 0.0, %v460
  %v462 = vpop.f32.mrb[0].mxu0
  %463 = vmatprep.mubr.bf16.mxu0 0
  %464 = vmatmul.mubr.bf16.gmra.mrb[0].mxu0 %v235
  %v465 = vpop.f32.mrb[0].mxu0
  %v466 = vadd.f32 0.0, %v465
  %v467 = vpop.f32.mrb[0].mxu0
  %v468 = vpop.f32.mrb[0].mxu0
  %v469 = vadd.f32 0.0, %v468
  %v470 = vpop.f32.mrb[0].mxu0
  %471 = vmatprep.mubr.bf16.mxu0 0
  %472 = vmatmul.mubr.bf16.gmra.mrb[0].mxu0 %v236
  %v473 = vpop.f32.mrb[0].mxu0
  %v474 = vadd.f32 0.0, %v473
  %v475 = vpop.f32.mrb[0].mxu0
  %v476 = vpop.f32.mrb[0].mxu0
  %v477 = vadd.f32 0.0, %v476
  %v478 = vpop.f32.mrb[0].mxu0
  %479 = vmatprep.mubr.bf16.mxu0 0
  %480 = vmatmul.mubr.bf16.gmra.mrb[0].mxu0 %v237
  %v481 = vpop.f32.mrb[0].mxu0
  %v482 = vadd.f32 0.0, %v481
  %v483 = vpop.f32.mrb[0].mxu0
  %v484 = vpop.f32.mrb[0].mxu0
  %v485 = vadd.f32 0.0, %v484
  %v486 = vpop.f32.mrb[0].mxu0
  %487 = vmatprep.mubr.bf16.mxu0 0
  %488 = vmatmul.mubr.bf16.gmra.mrb[0].mxu0 %v238
  %v489 = vpop.f32.mrb[0].mxu0
  %v490 = vadd.f32 0.0, %v489
  %v491 = vpop.f32.mrb[0].mxu0
  %v492 = vpop.f32.mrb[0].mxu0
  %v493 = vadd.f32 0.0, %v492
  %v494 = vpop.f32.mrb[0].mxu0
  %495 = vmatprep.mubr.bf16.mxu0 0
  %496 = vmatmul.mubr.bf16.gmra.mrb[0].mxu0 %v239
  %v497 = vpop.f32.mrb[0].mxu0
  %v498 = vadd.f32 0.0, %v497
  %v499 = vpop.f32.mrb[0].mxu0
  %v500 = vpop.f32.mrb[0].mxu0
  %v501 = vadd.f32 0.0, %v500
  %v502 = vpop.f32.mrb[0].mxu0
  %503 = vmatprep.mubr.bf16.mxu0 0
  %504 = vmatmul.mubr.bf16.gmra.mrb[0].mxu0 %v240
  %v505 = vpop.f32.mrb[0].mxu0
  %v506 = vadd.f32 0.0, %v505
  %v507 = vpop.f32.mrb[0].mxu0
  %v508 = vpop.f32.mrb[0].mxu0
  %v509 = vadd.f32 0.0, %v508
  %v510 = vpop.f32.mrb[0].mxu0
  %511 = vmatprep.mubr.bf16.mxu0 0
  %512 = vmatmul.mubr.bf16.gmra.mrb[0].mxu0 %v241
  %v513 = vpop.f32.mrb[0].mxu0
  %v514 = vadd.f32 0.0, %v513
  %v515 = vpop.f32.mrb[0].mxu0
  %v516 = vpop.f32.mrb[0].mxu0
  %v517 = vadd.f32 0.0, %v516
  %v518 = vpop.f32.mrb[0].mxu0
  %519 = vmatprep.mubr.bf16.mxu0 0
  %520 = vmatmul.mubr.bf16.gmra.mrb[0].mxu0 %v242
  %v521 = vpop.f32.mrb[0].mxu0
  %v522 = vadd.f32 0.0, %v521
  %v523 = vpop.f32.mrb[0].mxu0
  %v524 = vpop.f32.mrb[0].mxu0
  %v525 = vadd.f32 0.0, %v524
  %v526 = vpop.f32.mrb[0].mxu0
  %527 = vmatprep.mubr.bf16.mxu0 0
  %528 = vmatmul.mubr.bf16.gmra.mrb[0].mxu0 %v243
  %v529 = vpop.f32.mrb[0].mxu0
  %v530 = vadd.f32 0.0, %v529
  %v531 = vpop.f32.mrb[0].mxu0
  %v532 = vpop.f32.mrb[0].mxu0
  %v533 = vadd.f32 0.0, %v532
  %v534 = vpop.f32.mrb[0].mxu0
  %535 = vmatprep.mubr.bf16.mxu0 0
  %536 = vmatmul.mubr.bf16.gmra.mrb[0].mxu0 %v244
  %v537 = vpop.f32.mrb[0].mxu0
  %v538 = vadd.f32 0.0, %v537
  %v539 = vpop.f32.mrb[0].mxu0
  %v540 = vpop.f32.mrb[0].mxu0
  %v541 = vadd.f32 0.0, %v540
  %v542 = vpop.f32.mrb[0].mxu0
  %543 = vmatprep.mubr.bf16.mxu0 0
  %544 = vmatmul.mubr.bf16.gmra.mrb[0].mxu0 %v245
  %v545 = vpop.f32.mrb[0].mxu0
  %v546 = vadd.f32 0.0, %v545
  %v547 = vpop.f32.mrb[0].mxu0
  %v548 = vpop.f32.mrb[0].mxu0
  %v549 = vadd.f32 0.0, %v548
  %v550 = vpop.f32.mrb[0].mxu0
  %551 = vmatprep.mubr.bf16.mxu0 0
  %552 = vmatmul.mubr.bf16.gmra.mrb[0].mxu0 %v246
  %v553 = vpop.f32.mrb[0].mxu0
  %v554 = vadd.f32 0.0, %v553
  %v555 = vpop.f32.mrb[0].mxu0
  %v556 = vpop.f32.mrb[0].mxu0
  %v557 = vadd.f32 0.0, %v556
  %v558 = vpop.f32.mrb[0].mxu0
  %559 = vmatprep.mubr.bf16.mxu0 0
  %560 = vmatmul.mubr.bf16.gmra.mrb[0].mxu0 %v247
  %v561 = vpop.f32.mrb[0].mxu0
  %v562 = vadd.f32 0.0, %v561
  %v563 = vpop.f32.mrb[0].mxu0
  %v564 = vpop.f32.mrb[0].mxu0
  %v565 = vadd.f32 0.0, %v564
  %v566 = vpop.f32.mrb[0].mxu0
  %567 = vmatprep.mubr.bf16.mxu0 0
  %568 = vmatmul.mubr.bf16.gmra.mrb[0].mxu0 %v248
  %v569 = vpop.f32.mrb[0].mxu0
  %v570 = vadd.f32 0.0, %v569
  %v571 = vpop.f32.mrb[0].mxu0
  %v572 = vpop.f32.mrb[0].mxu0
  %v573 = vadd.f32 0.0, %v572
  %v574 = vpop.f32.mrb[0].mxu0
  %575 = vmatprep.mubr.bf16.mxu0 0
  %576 = vmatmul.mubr.bf16.gmra.mrb[0].mxu0 %v249
  %v577 = vpop.f32.mrb[0].mxu0
  %v578 = vadd.f32 0.0, %v577
  %v579 = vpop.f32.mrb[0].mxu0
  %v580 = vpop.f32.mrb[0].mxu0
  %v581 = vadd.f32 0.0, %v580
  %v582 = vpop.f32.mrb[0].mxu0
  %583 = vmatprep.mubr.bf16.mxu0 0
  %584 = vmatmul.mubr.bf16.gmra.mrb[0].mxu0 %v250
  %v585 = vpop.f32.mrb[0].mxu0
  %v586 = vadd.f32 0.0, %v585
  %v587 = vpop.f32.mrb[0].mxu0
  %v588 = vpop.f32.mrb[0].mxu0
  %v589 = vadd.f32 0.0, %v588
  %v590 = vpop.f32.mrb[0].mxu0
  %591 = vmatprep.mubr.bf16.mxu0 0
  %592 = vmatmul.mubr.bf16.gmra.mrb[0].mxu0 %v251
  %v593 = vpop.f32.mrb[0].mxu0
  %v594 = vadd.f32 0.0, %v593
  %v595 = vpop.f32.mrb[0].mxu0
  %v596 = vpop.f32.mrb[0].mxu0
  %v597 = vadd.f32 0.0, %v596
  %v598 = vpop.f32.mrb[0].mxu0
  %599 = vmatprep.mubr.bf16.mxu0 0
  %600 = vmatmul.mubr.bf16.gmra.mrb[0].mxu0 %v252
  %v601 = vpop.f32.mrb[0].mxu0
  %v602 = vadd.f32 0.0, %v601
  %v603 = vpop.f32.mrb[0].mxu0
  %v604 = vpop.f32.mrb[0].mxu0
  %v605 = vadd.f32 0.0, %v604
  %v606 = vpop.f32.mrb[0].mxu0
  %607 = vmatprep.mubr.bf16.mxu0 0
  %608 = vmatmul.mubr.bf16.gmra.mrb[0].mxu0 %v253
  %v609 = vpop.f32.mrb[0].mxu0
  %v610 = vadd.f32 0.0, %v609
  %v611 = vpop.f32.mrb[0].mxu0
  %v612 = vpop.f32.mrb[0].mxu0
  %v613 = vadd.f32 0.0, %v612
  %v614 = vpop.f32.mrb[0].mxu0
  %615 = vmatprep.mubr.bf16.mxu0 0
  %616 = vmatmul.mubr.bf16.gmra.mrb[0].mxu0 %v254
  %v617 = vpop.f32.mrb[0].mxu0
  %v618 = vadd.f32 0.0, %v617
  %v619 = vpop.f32.mrb[0].mxu0
  %v620 = vpop.f32.mrb[0].mxu0
  %v621 = vadd.f32 0.0, %v620
  %v622 = vpop.f32.mrb[0].mxu0
  %623 = vdwg.mxu0
  %p624 = scmp.eq.s32.totalorder 0, 0
  // Predicated region
  $region10: #{discriminator_forward.8} parent=0 // pred_check
    %p625 = pneg %p624
  $region11: #{discriminator_forward.8} parent=0 // pred_check_branch
    %627 = sbr.rel (%p625) target = $region13
  $region12: #{discriminator_forward.8} parent=0 // pred_region
    %628 = vst [vmem:[%s3] sm:$0x1] 0.0
    %629 = vst [vmem:[%s4] sm:$0x1] 0.0
  $region13: #{discriminator_forward.8} parent=0 // pred_fallthru
    _
  %v630 = vld [vmem:[%s3] sm:$0x1]
  %v631 = vadd.f32 %v370, %v373
  %v632 = vadd.f32 %v631, %v378
  %v633 = vadd.f32 %v632, %v381
  %v634 = vadd.f32 %v633, %v386
  %v635 = vadd.f32 %v634, %v389
  %v636 = vadd.f32 %v635, %v394
  %v637 = vadd.f32 %v636, %v397
  %v638 = vadd.f32 %v637, %v402
  %v639 = vadd.f32 %v638, %v405
  %v640 = vadd.f32 %v639, %v410
  %v641 = vadd.f32 %v640, %v413
  %v642 = vadd.f32 %v641, %v418
  %v643 = vadd.f32 %v642, %v421
  %v644 = vadd.f32 %v643, %v426
  %v645 = vadd.f32 %v644, %v429
  %v646 = vadd.f32 %v645, %v434
  %v647 = vadd.f32 %v646, %v437
  %v648 = vadd.f32 %v647, %v442
  %v649 = vadd.f32 %v648, %v445
  %v650 = vadd.f32 %v649, %v450
  %v651 = vadd.f32 %v650, %v453
  %v652 = vadd.f32 %v651, %v458
  %v653 = vadd.f32 %v652, %v461
  %v654 = vadd.f32 %v653, %v466
  %v655 = vadd.f32 %v654, %v469
  %v656 = vadd.f32 %v655, %v474
  %v657 = vadd.f32 %v656, %v477
  %v658 = vadd.f32 %v657, %v482
  %v659 = vadd.f32 %v658, %v485
  %v660 = vadd.f32 %v659, %v490
  %v661 = vadd.f32 %v660, %v493
  %v662 = vadd.f32 %v661, %v498
  %v663 = vadd.f32 %v662, %v501
  %v664 = vadd.f32 %v663, %v506
  %v665 = vadd.f32 %v664, %v509
  %v666 = vadd.f32 %v665, %v514
  %v667 = vadd.f32 %v666, %v517
  %v668 = vadd.f32 %v667, %v522
  %v669 = vadd.f32 %v668, %v525
  %v670 = vadd.f32 %v669, %v530
  %v671 = vadd.f32 %v670, %v533
  %v672 = vadd.f32 %v671, %v538
  %v673 = vadd.f32 %v672, %v541
  %v674 = vadd.f32 %v673, %v546
  %v675 = vadd.f32 %v674, %v549
  %v676 = vadd.f32 %v675, %v554
  %v677 = vadd.f32 %v676, %v557
  %v678 = vadd.f32 %v677, %v562
  %v679 = vadd.f32 %v678, %v565
  %v680 = vadd.f32 %v679, %v570
  %v681 = vadd.f32 %v680, %v573
  %v682 = vadd.f32 %v681, %v578
  %v683 = vadd.f32 %v682, %v581
  %v684 = vadd.f32 %v683, %v586
  %v685 = vadd.f32 %v684, %v589
  %v686 = vadd.f32 %v685, %v594
  %v687 = vadd.f32 %v686, %v597
  %v688 = vadd.f32 %v687, %v602
  %v689 = vadd.f32 %v688, %v605
  %v690 = vadd.f32 %v689, %v610
  %v691 = vadd.f32 %v690, %v613
  %v692 = vadd.f32 %v691, %v618
  %v693 = vadd.f32 %v692, %v621
  %v694 = vrot.slane %v693, 4
  %v695 = vadd.f32 %v693, %v694
  %v696 = vrot.slane %v695, 2
  %v697 = vadd.f32 %v695, %v696
  %v698 = vrot.slane %v697, 1
  %v699 = vadd.f32 %v697, %v698
  %v700 = vadd.f32 %v630, %v699
  %701 = vst [vmem:[%s3] sm:$0x1] %v700
  %v702 = vld [vmem:[%s4] sm:$0x1]
  %v703 = vmul.f32 %v370, %v370
  %v704 = vmul.f32 %v373, %v373
  %v705 = vmul.f32 %v378, %v378
  %v706 = vmul.f32 %v381, %v381
  %v707 = vmul.f32 %v386, %v386
  %v708 = vmul.f32 %v389, %v389
  %v709 = vmul.f32 %v394, %v394
  %v710 = vmul.f32 %v397, %v397
  %v711 = vmul.f32 %v402, %v402
  %v712 = vmul.f32 %v405, %v405
  %v713 = vmul.f32 %v410, %v410
  %v714 = vmul.f32 %v413, %v413
  %v715 = vmul.f32 %v418, %v418
  %v716 = vmul.f32 %v421, %v421
  %v717 = vmul.f32 %v426, %v426
  %v718 = vmul.f32 %v429, %v429
  %v719 = vmul.f32 %v434, %v434
  %v720 = vmul.f32 %v437, %v437
  %v721 = vmul.f32 %v442, %v442
  %v722 = vmul.f32 %v445, %v445
  %v723 = vmul.f32 %v450, %v450
  %v724 = vmul.f32 %v453, %v453
  %v725 = vmul.f32 %v458, %v458
  %v726 = vmul.f32 %v461, %v461
  %v727 = vmul.f32 %v466, %v466
  %v728 = vmul.f32 %v469, %v469
  %v729 = vmul.f32 %v474, %v474
  %v730 = vmul.f32 %v477, %v477
  %v731 = vmul.f32 %v482, %v482
  %v732 = vmul.f32 %v485, %v485
  %v733 = vmul.f32 %v490, %v490
  %v734 = vmul.f32 %v493, %v493
  %v735 = vmul.f32 %v498, %v498
  %v736 = vmul.f32 %v501, %v501
  %v737 = vmul.f32 %v506, %v506
  %v738 = vmul.f32 %v509, %v509
  %v739 = vmul.f32 %v514, %v514
  %v740 = vmul.f32 %v517, %v517
  %v741 = vmul.f32 %v522, %v522
  %v742 = vmul.f32 %v525, %v525
  %v743 = vmul.f32 %v530, %v530
  %v744 = vmul.f32 %v533, %v533
  %v745 = vmul.f32 %v538, %v538
  %v746 = vmul.f32 %v541, %v541
  %v747 = vmul.f32 %v546, %v546
  %v748 = vmul.f32 %v549, %v549
  %v749 = vmul.f32 %v554, %v554
  %v750 = vmul.f32 %v557, %v557
  %v751 = vmul.f32 %v562, %v562
  %v752 = vmul.f32 %v565, %v565
  %v753 = vmul.f32 %v570, %v570
  %v754 = vmul.f32 %v573, %v573
  %v755 = vmul.f32 %v578, %v578
  %v756 = vmul.f32 %v581, %v581
  %v757 = vmul.f32 %v586, %v586
  %v758 = vmul.f32 %v589, %v589
  %v759 = vmul.f32 %v594, %v594
  %v760 = vmul.f32 %v597, %v597
  %v761 = vmul.f32 %v602, %v602
  %v762 = vmul.f32 %v605, %v605
  %v763 = vmul.f32 %v610, %v610
  %v764 = vmul.f32 %v613, %v613
  %v765 = vmul.f32 %v618, %v618
  %v766 = vmul.f32 %v621, %v621
  %v767 = vadd.f32 %v703, %v704
  %v768 = vadd.f32 %v767, %v705
  %v769 = vadd.f32 %v768, %v706
  %v770 = vadd.f32 %v769, %v707
  %v771 = vadd.f32 %v770, %v708
  %v772 = vadd.f32 %v771, %v709
  %v773 = vadd.f32 %v772, %v710
  %v774 = vadd.f32 %v773, %v711
  %v775 = vadd.f32 %v774, %v712
  %v776 = vadd.f32 %v775, %v713
  %v777 = vadd.f32 %v776, %v714
  %v778 = vadd.f32 %v777, %v715
  %v779 = vadd.f32 %v778, %v716
  %v780 = vadd.f32 %v779, %v717
  %v781 = vadd.f32 %v780, %v718
  %v782 = vadd.f32 %v781, %v719
  %v783 = vadd.f32 %v782, %v720
  %v784 = vadd.f32 %v783, %v721
  %v785 = vadd.f32 %v784, %v722
  %v786 = vadd.f32 %v785, %v723
  %v787 = vadd.f32 %v786, %v724
  %v788 = vadd.f32 %v787, %v725
  %v789 = vadd.f32 %v788, %v726
  %v790 = vadd.f32 %v789, %v727
  %v791 = vadd.f32 %v790, %v728
  %v792 = vadd.f32 %v791, %v729
  %v793 = vadd.f32 %v792, %v730
  %v794 = vadd.f32 %v793, %v731
  %v795 = vadd.f32 %v794, %v732
  %v796 = vadd.f32 %v795, %v733
  %v797 = vadd.f32 %v796, %v734
  %v798 = vadd.f32 %v797, %v735
  %v799 = vadd.f32 %v798, %v736
  %v800 = vadd.f32 %v799, %v737
  %v801 = vadd.f32 %v800, %v738
  %v802 = vadd.f32 %v801, %v739
  %v803 = vadd.f32 %v802, %v740
  %v804 = vadd.f32 %v803, %v741
  %v805 = vadd.f32 %v804, %v742
  %v806 = vadd.f32 %v805, %v743
  %v807 = vadd.f32 %v806, %v744
  %v808 = vadd.f32 %v807, %v745
  %v809 = vadd.f32 %v808, %v746
  %v810 = vadd.f32 %v809, %v747
  %v811 = vadd.f32 %v810, %v748
  %v812 = vadd.f32 %v811, %v749
  %v813 = vadd.f32 %v812, %v750
  %v814 = vadd.f32 %v813, %v751
  %v815 = vadd.f32 %v814, %v752
  %v816 = vadd.f32 %v815, %v753
  %v817 = vadd.f32 %v816, %v754
  %v818 = vadd.f32 %v817, %v755
  %v819 = vadd.f32 %v818, %v756
  %v820 = vadd.f32 %v819, %v757
  %v821 = vadd.f32 %v820, %v758
  %v822 = vadd.f32 %v821, %v759
  %v823 = vadd.f32 %v822, %v760
  %v824 = vadd.f32 %v823, %v761
  %v825 = vadd.f32 %v824, %v762
  %v826 = vadd.f32 %v825, %v763
  %v827 = vadd.f32 %v826, %v764
  %v828 = vadd.f32 %v827, %v765
  %v829 = vadd.f32 %v828, %v766
  %v830 = vrot.slane %v829, 4
  %v831 = vadd.f32 %v829, %v830
  %v832 = vrot.slane %v831, 2
  %v833 = vadd.f32 %v831, %v832
  %v834 = vrot.slane %v833, 1
  %v835 = vadd.f32 %v833, %v834
  %v836 = vadd.f32 %v702, %v835
  %837 = vst [vmem:[%s4] sm:$0x1] %v836
  %v838 = vpack.c.bf16 %v373, %v370
  %v839 = vpack.c.bf16 %v381, %v378
  %v840 = vpack.c.bf16 %v389, %v386
  %v841 = vpack.c.bf16 %v397, %v394
  %v842 = vpack.c.bf16 %v405, %v402
  %v843 = vpack.c.bf16 %v413, %v410
  %v844 = vpack.c.bf16 %v421, %v418
  %v845 = vpack.c.bf16 %v429, %v426
  %v846 = vpack.c.bf16 %v437, %v434
  %v847 = vpack.c.bf16 %v445, %v442
  %v848 = vpack.c.bf16 %v453, %v450
  %v849 = vpack.c.bf16 %v461, %v458
  %v850 = vpack.c.bf16 %v469, %v466
  %v851 = vpack.c.bf16 %v477, %v474
  %v852 = vpack.c.bf16 %v485, %v482
  %v853 = vpack.c.bf16 %v493, %v490
  %v854 = vpack.c.bf16 %v501, %v498
  %v855 = vpack.c.bf16 %v509, %v506
  %v856 = vpack.c.bf16 %v517, %v514
  %v857 = vpack.c.bf16 %v525, %v522
  %v858 = vpack.c.bf16 %v533, %v530
  %v859 = vpack.c.bf16 %v541, %v538
  %v860 = vpack.c.bf16 %v549, %v546
  %v861 = vpack.c.bf16 %v557, %v554
  %v862 = vpack.c.bf16 %v565, %v562
  %v863 = vpack.c.bf16 %v573, %v570
  %v864 = vpack.c.bf16 %v581, %v578
  %v865 = vpack.c.bf16 %v589, %v586
  %v866 = vpack.c.bf16 %v597, %v594
  %v867 = vpack.c.bf16 %v605, %v602
  %v868 = vpack.c.bf16 %v613, %v610
  %v869 = vpack.c.bf16 %v621, %v618
  %v902 = vunpack.c.l.b16 %v838
  %v903 = vunpack.c.h.b16 %v838
  %v904 = vunpack.c.l.b16 %v839
  %v905 = vunpack.c.h.b16 %v839
  %v906 = vunpack.c.l.b16 %v840
  %v907 = vunpack.c.h.b16 %v840
  %v908 = vunpack.c.l.b16 %v841
  %v909 = vunpack.c.h.b16 %v841
  %v910 = vunpack.c.l.b16 %v842
  %v911 = vunpack.c.h.b16 %v842
  %v912 = vunpack.c.l.b16 %v843
  %v913 = vunpack.c.h.b16 %v843
  %v914 = vunpack.c.l.b16 %v844
  %v915 = vunpack.c.h.b16 %v844
  %v916 = vunpack.c.l.b16 %v845
  %v917 = vunpack.c.h.b16 %v845
  %v918 = vunpack.c.l.b16 %v846
  %v919 = vunpack.c.h.b16 %v846
  %v920 = vunpack.c.l.b16 %v847
  %v921 = vunpack.c.h.b16 %v847
  %v922 = vunpack.c.l.b16 %v848
  %v923 = vunpack.c.h.b16 %v848
  %v924 = vunpack.c.l.b16 %v849
  %v925 = vunpack.c.h.b16 %v849
  %v926 = vunpack.c.l.b16 %v850
  %v927 = vunpack.c.h.b16 %v850
  %v928 = vunpack.c.l.b16 %v851
  %v929 = vunpack.c.h.b16 %v851
  %v930 = vunpack.c.l.b16 %v852
  %v931 = vunpack.c.h.b16 %v852
  %v932 = vunpack.c.l.b16 %v853
  %v933 = vunpack.c.h.b16 %v853
  %v934 = vunpack.c.l.b16 %v854
  %v935 = vunpack.c.h.b16 %v854
  %v936 = vunpack.c.l.b16 %v855
  %v937 = vunpack.c.h.b16 %v855
  %v938 = vunpack.c.l.b16 %v856
  %v939 = vunpack.c.h.b16 %v856
  %v940 = vunpack.c.l.b16 %v857
  %v941 = vunpack.c.h.b16 %v857
  %v942 = vunpack.c.l.b16 %v858
  %v943 = vunpack.c.h.b16 %v858
  %v944 = vunpack.c.l.b16 %v859
  %v945 = vunpack.c.h.b16 %v859
  %v946 = vunpack.c.l.b16 %v860
  %v947 = vunpack.c.h.b16 %v860
  %v948 = vunpack.c.l.b16 %v861
  %v949 = vunpack.c.h.b16 %v861
  %v950 = vunpack.c.l.b16 %v862
  %v951 = vunpack.c.h.b16 %v862
  %v952 = vunpack.c.l.b16 %v863
  %v953 = vunpack.c.h.b16 %v863
  %v954 = vunpack.c.l.b16 %v864
  %v955 = vunpack.c.h.b16 %v864
  %v956 = vunpack.c.l.b16 %v865
  %v957 = vunpack.c.h.b16 %v865
  %v958 = vunpack.c.l.b16 %v866
  %v959 = vunpack.c.h.b16 %v866
  %v960 = vunpack.c.l.b16 %v867
  %v961 = vunpack.c.h.b16 %v867
  %v962 = vunpack.c.l.b16 %v868
  %v963 = vunpack.c.h.b16 %v868
  %v964 = vunpack.c.l.b16 %v869
  %v965 = vunpack.c.h.b16 %v869
  %v966 = vpack.c.b16 %v902, %v902
  %v967 = vpack.c.b16 %v903, %v903
  %v968 = vpack.c.b16 %v904, %v904
  %v969 = vpack.c.b16 %v905, %v905
  %v970 = vpack.c.b16 %v906, %v906
  %v971 = vpack.c.b16 %v907, %v907
  %v972 = vpack.c.b16 %v908, %v908
  %v973 = vpack.c.b16 %v909, %v909
  %v974 = vpack.c.b16 %v910, %v910
  %v975 = vpack.c.b16 %v911, %v911
  %v976 = vpack.c.b16 %v912, %v912
  %v977 = vpack.c.b16 %v913, %v913
  %v978 = vpack.c.b16 %v914, %v914
  %v979 = vpack.c.b16 %v915, %v915
  %v980 = vpack.c.b16 %v916, %v916
  %v981 = vpack.c.b16 %v917, %v917
  %v982 = vpack.c.b16 %v918, %v918
  %v983 = vpack.c.b16 %v919, %v919
  %v984 = vpack.c.b16 %v920, %v920
  %v985 = vpack.c.b16 %v921, %v921
  %v986 = vpack.c.b16 %v922, %v922
  %v987 = vpack.c.b16 %v923, %v923
  %v988 = vpack.c.b16 %v924, %v924
  %v989 = vpack.c.b16 %v925, %v925
  %v990 = vpack.c.b16 %v926, %v926
  %v991 = vpack.c.b16 %v927, %v927
  %v992 = vpack.c.b16 %v928, %v928
  %v993 = vpack.c.b16 %v929, %v929
  %v994 = vpack.c.b16 %v930, %v930
  %v995 = vpack.c.b16 %v931, %v931
  %v996 = vpack.c.b16 %v932, %v932
  %v997 = vpack.c.b16 %v933, %v933
  %v998 = vpack.c.b16 %v934, %v934
  %v999 = vpack.c.b16 %v935, %v935
  %v1000 = vpack.c.b16 %v936, %v936
  %v1001 = vpack.c.b16 %v937, %v937
  %v1002 = vpack.c.b16 %v938, %v938
  %v1003 = vpack.c.b16 %v939, %v939
  %v1004 = vpack.c.b16 %v940, %v940
  %v1005 = vpack.c.b16 %v941, %v941
  %v1006 = vpack.c.b16 %v942, %v942
  %v1007 = vpack.c.b16 %v943, %v943
  %v1008 = vpack.c.b16 %v944, %v944
  %v1009 = vpack.c.b16 %v945, %v945
  %v1010 = vpack.c.b16 %v946, %v946
  %v1011 = vpack.c.b16 %v947, %v947
  %v1012 = vpack.c.b16 %v948, %v948
  %v1013 = vpack.c.b16 %v949, %v949
  %v1014 = vpack.c.b16 %v950, %v950
  %v1015 = vpack.c.b16 %v951, %v951
  %v1016 = vpack.c.b16 %v952, %v952
  %v1017 = vpack.c.b16 %v953, %v953
  %v1018 = vpack.c.b16 %v954, %v954
  %v1019 = vpack.c.b16 %v955, %v955
  %v1020 = vpack.c.b16 %v956, %v956
  %v1021 = vpack.c.b16 %v957, %v957
  %v1022 = vpack.c.b16 %v958, %v958
  %v1023 = vpack.c.b16 %v959, %v959
  %v1024 = vpack.c.b16 %v960, %v960
  %v1025 = vpack.c.b16 %v961, %v961
  %v1026 = vpack.c.b16 %v962, %v962
  %v1027 = vpack.c.b16 %v963, %v963
  %v1028 = vpack.c.b16 %v964, %v964
  %v1029 = vpack.c.b16 %v965, %v965
  %1094 = vst [vmem:[%s2] sm:$0xf] %v966
  %1095 = vst [vmem:[%s2 + $0x4] sm:$0xf] %v967
  %1096 = vst [vmem:[%s2 + $0x8] sm:$0xf] %v968
  %1097 = vst [vmem:[%s2 + $0xc] sm:$0xf] %v969
  %1098 = vst [vmem:[%s2 + $0x10] sm:$0xf] %v970
  %1099 = vst [vmem:[%s2 + $0x14] sm:$0xf] %v971
  %1100 = vst [vmem:[%s2 + $0x18] sm:$0xf] %v972
  %1101 = vst [vmem:[%s2 + $0x1c] sm:$0xf] %v973
  %1102 = vst [vmem:[%s2 + $0x20] sm:$0xf] %v974
  %1103 = vst [vmem:[%s2 + $0x24] sm:$0xf] %v975
  %1104 = vst [vmem:[%s2 + $0x28] sm:$0xf] %v976
  %1105 = vst [vmem:[%s2 + $0x2c] sm:$0xf] %v977
  %1106 = vst [vmem:[%s2 + $0x30] sm:$0xf] %v978
  %1107 = vst [vmem:[%s2 + $0x34] sm:$0xf] %v979
  %1108 = vst [vmem:[%s2 + $0x38] sm:$0xf] %v980
  %1109 = vst [vmem:[%s2 + $0x3c] sm:$0xf] %v981
  %1110 = vst [vmem:[%s2 + $0x40] sm:$0xf] %v982
  %1111 = vst [vmem:[%s2 + $0x44] sm:$0xf] %v983
  %1112 = vst [vmem:[%s2 + $0x48] sm:$0xf] %v984
  %1113 = vst [vmem:[%s2 + $0x4c] sm:$0xf] %v985
  %1114 = vst [vmem:[%s2 + $0x50] sm:$0xf] %v986
  %1115 = vst [vmem:[%s2 + $0x54] sm:$0xf] %v987
  %1116 = vst [vmem:[%s2 + $0x58] sm:$0xf] %v988
  %1117 = vst [vmem:[%s2 + $0x5c] sm:$0xf] %v989
  %1118 = vst [vmem:[%s2 + $0x60] sm:$0xf] %v990
  %1119 = vst [vmem:[%s2 + $0x64] sm:$0xf] %v991
  %1120 = vst [vmem:[%s2 + $0x68] sm:$0xf] %v992
  %1121 = vst [vmem:[%s2 + $0x6c] sm:$0xf] %v993
  %1122 = vst [vmem:[%s2 + $0x70] sm:$0xf] %v994
  %1123 = vst [vmem:[%s2 + $0x74] sm:$0xf] %v995
  %1124 = vst [vmem:[%s2 + $0x78] sm:$0xf] %v996
  %1125 = vst [vmem:[%s2 + $0x7c] sm:$0xf] %v997
  %1126 = vst [vmem:[%s2 + $0x80] sm:$0xf] %v998
  %1127 = vst [vmem:[%s2 + $0x84] sm:$0xf] %v999
  %1128 = vst [vmem:[%s2 + $0x88] sm:$0xf] %v1000
  %1129 = vst [vmem:[%s2 + $0x8c] sm:$0xf] %v1001
  %1130 = vst [vmem:[%s2 + $0x90] sm:$0xf] %v1002
  %1131 = vst [vmem:[%s2 + $0x94] sm:$0xf] %v1003
  %1132 = vst [vmem:[%s2 + $0x98] sm:$0xf] %v1004
  %1133 = vst [vmem:[%s2 + $0x9c] sm:$0xf] %v1005
  %1134 = vst [vmem:[%s2 + $0xa0] sm:$0xf] %v1006
  %1135 = vst [vmem:[%s2 + $0xa4] sm:$0xf] %v1007
  %1136 = vst [vmem:[%s2 + $0xa8] sm:$0xf] %v1008
  %1137 = vst [vmem:[%s2 + $0xac] sm:$0xf] %v1009
  %1138 = vst [vmem:[%s2 + $0xb0] sm:$0xf] %v1010
  %1139 = vst [vmem:[%s2 + $0xb4] sm:$0xf] %v1011
  %1140 = vst [vmem:[%s2 + $0xb8] sm:$0xf] %v1012
  %1141 = vst [vmem:[%s2 + $0xbc] sm:$0xf] %v1013
  %1142 = vst [vmem:[%s2 + $0xc0] sm:$0xf] %v1014
  %1143 = vst [vmem:[%s2 + $0xc4] sm:$0xf] %v1015
  %1144 = vst [vmem:[%s2 + $0xc8] sm:$0xf] %v1016
  %1145 = vst [vmem:[%s2 + $0xcc] sm:$0xf] %v1017
  %1146 = vst [vmem:[%s2 + $0xd0] sm:$0xf] %v1018
  %1147 = vst [vmem:[%s2 + $0xd4] sm:$0xf] %v1019
  %1148 = vst [vmem:[%s2 + $0xd8] sm:$0xf] %v1020
  %1149 = vst [vmem:[%s2 + $0xdc] sm:$0xf] %v1021
  %1150 = vst [vmem:[%s2 + $0xe0] sm:$0xf] %v1022
  %1151 = vst [vmem:[%s2 + $0xe4] sm:$0xf] %v1023
  %1152 = vst [vmem:[%s2 + $0xe8] sm:$0xf] %v1024
  %1153 = vst [vmem:[%s2 + $0xec] sm:$0xf] %v1025
  %1154 = vst [vmem:[%s2 + $0xf0] sm:$0xf] %v1026
  %1155 = vst [vmem:[%s2 + $0xf4] sm:$0xf] %v1027
  %1156 = vst [vmem:[%s2 + $0xf8] sm:$0xf] %v1028
  %1157 = vst [vmem:[%s2 + $0xfc] sm:$0xf] %v1029
  // Predicated region
  $region14: #{discriminator_forward.8} parent=0 // pred_check
    _
  $region15: #{discriminator_forward.8} parent=0 // pred_check_branch
    %1159 = sbr.rel (0) target = $region17
  $region16: #{discriminator_forward.8} parent=0 // pred_region
    _
  $region17: #{discriminator_forward.8} parent=0 // pred_fallthru
    _
  // Predicated region
  $region18: #{discriminator_forward.8} parent=0 // pred_check
    _
  $region19: #{discriminator_forward.8} parent=0 // pred_check_branch
    %1161 = sbr.rel (0) target = $region21
  $region20: #{discriminator_forward.8} parent=0 // pred_region
    _
  $region21: #{discriminator_forward.8} parent=0 // pred_fallthru
    _
  // Predicated region
  $region22: #{discriminator_forward.8} parent=0 // pred_check
    _
  $region23: #{discriminator_forward.8} parent=0 // pred_check_branch
    %1163 = sbr.rel (0) target = $region25
  $region24: #{discriminator_forward.8} parent=0 // pred_region
    _
  $region25: #{discriminator_forward.8} parent=0 // pred_fallthru
    _
  // Predicated region
  $region26: #{discriminator_forward.8} parent=0 // pred_check
    _
  $region27: #{discriminator_forward.8} parent=0 // pred_check_branch
    %1165 = sbr.rel (0) target = $region29
  $region28: #{discriminator_forward.8} parent=0 // pred_region
    _
  $region29: #{discriminator_forward.8} parent=0 // pred_fallthru
    _
  // Predicated region
  $region30: #{discriminator_forward.8} parent=0 // pred_check
    _
  $region31: #{discriminator_forward.8} parent=0 // pred_check_branch
    %1167 = sbr.rel (0) target = $region33
  $region32: #{discriminator_forward.8} parent=0 // pred_region
    _
  $region33: #{discriminator_forward.8} parent=0 // pred_fallthru
    _
  // Predicated region
  $region34: #{discriminator_forward.8} parent=0 // pred_check
    _
  $region35: #{discriminator_forward.8} parent=0 // pred_check_branch
    %1169 = sbr.rel (0) target = $region37
  $region36: #{discriminator_forward.8} parent=0 // pred_region
    _
  $region37: #{discriminator_forward.8} parent=0 // pred_fallthru
    _

// kernel: discriminator_forward.9
$region0: #{discriminator_forward.9}
  #allocation0 [shape = 'u32[]', space=smem, size = 0x4, offset = 0x4, fixed_abs, tag = 'smem constant byte address 0x4 - core index']
  #allocation1 [shape = 'u32[144,128]{1,0:T(1,128)}', space=vmem, size = 0x12000, scoped, tag = 'internal scratch']
  %s0 = inlined_call_operand.vmem [shape: bf16[512,128], index: 0, kind: input, shape index: {}]
  %s1 = inlined_call_operand.vmem [shape: f32[1,128], index: 1, kind: input, shape index: {}]
  %s2 = inlined_call_operand.vmem [shape: f32[1,128], index: 2, kind: input, shape index: {}]
  %s3 = inlined_call_operand.vmem [shape: bf16[512,128], index: 3, kind: output, shape index: {}]
  %s4 = sld [smem:[#allocation0]]
  $region22: #{discriminator_forward.9} parent=0
    _
  %s6 = ssub.s32 1, %s4
  %s7 = scalar_select 0, %s6, %s4
  // Predicated region
  $region2: #{discriminator_forward.9} parent=0 // pred_check
    _
  $region3: #{discriminator_forward.9} parent=0 // pred_check_branch
    %9 = sbr.rel (0) target = $region5
  $region4: #{discriminator_forward.9} parent=0 // pred_region
    _
  $region5: #{discriminator_forward.9} parent=0 // pred_fallthru
    _
  // Predicated region
  $region6: #{discriminator_forward.9} parent=0 // pred_check
    _
  $region7: #{discriminator_forward.9} parent=0 // pred_check_branch
    %11 = sbr.rel (0) target = $region9
  $region8: #{discriminator_forward.9} parent=0 // pred_region
    _
  $region9: #{discriminator_forward.9} parent=0 // pred_fallthru
    _
  // Predicated region
  $region10: #{discriminator_forward.9} parent=0 // pred_check
    _
  $region11: #{discriminator_forward.9} parent=0 // pred_check_branch
    %13 = sbr.rel (0) target = $region13
  $region12: #{discriminator_forward.9} parent=0 // pred_region
    _
  $region13: #{discriminator_forward.9} parent=0 // pred_fallthru
    _
  %v14 = vld [vmem:[%s0] sm:$0xf]
  %v15 = vld [vmem:[%s0 + $0x4] sm:$0xf]
  %v16 = vld [vmem:[%s0 + $0x8] sm:$0xf]
  %v17 = vld [vmem:[%s0 + $0xc] sm:$0xf]
  %v18 = vld [vmem:[%s0 + $0x10] sm:$0xf]
  %v19 = vld [vmem:[%s0 + $0x14] sm:$0xf]
  %v20 = vld [vmem:[%s0 + $0x18] sm:$0xf]
  %v21 = vld [vmem:[%s0 + $0x1c] sm:$0xf]
  %v22 = vld [vmem:[%s0 + $0x20] sm:$0xf]
  %v23 = vld [vmem:[%s0 + $0x24] sm:$0xf]
  %v24 = vld [vmem:[%s0 + $0x28] sm:$0xf]
  %v25 = vld [vmem:[%s0 + $0x2c] sm:$0xf]
  %v26 = vld [vmem:[%s0 + $0x30] sm:$0xf]
  %v27 = vld [vmem:[%s0 + $0x34] sm:$0xf]
  %v28 = vld [vmem:[%s0 + $0x38] sm:$0xf]
  %v29 = vld [vmem:[%s0 + $0x3c] sm:$0xf]
  %v30 = vld [vmem:[%s0 + $0x40] sm:$0xf]
  %v31 = vld [vmem:[%s0 + $0x44] sm:$0xf]
  %v32 = vld [vmem:[%s0 + $0x48] sm:$0xf]
  %v33 = vld [vmem:[%s0 + $0x4c] sm:$0xf]
  %v34 = vld [vmem:[%s0 + $0x50] sm:$0xf]
  %v35 = vld [vmem:[%s0 + $0x54] sm:$0xf]
  %v36 = vld [vmem:[%s0 + $0x58] sm:$0xf]
  %v37 = vld [vmem:[%s0 + $0x5c] sm:$0xf]
  %v38 = vld [vmem:[%s0 + $0x60] sm:$0xf]
  %v39 = vld [vmem:[%s0 + $0x64] sm:$0xf]
  %v40 = vld [vmem:[%s0 + $0x68] sm:$0xf]
  %v41 = vld [vmem:[%s0 + $0x6c] sm:$0xf]
  %v42 = vld [vmem:[%s0 + $0x70] sm:$0xf]
  %v43 = vld [vmem:[%s0 + $0x74] sm:$0xf]
  %v44 = vld [vmem:[%s0 + $0x78] sm:$0xf]
  %v45 = vld [vmem:[%s0 + $0x7c] sm:$0xf]
  %v46 = vld [vmem:[%s0 + $0x80] sm:$0xf]
  %v47 = vld [vmem:[%s0 + $0x84] sm:$0xf]
  %v48 = vld [vmem:[%s0 + $0x88] sm:$0xf]
  %v49 = vld [vmem:[%s0 + $0x8c] sm:$0xf]
  %v50 = vld [vmem:[%s0 + $0x90] sm:$0xf]
  %v51 = vld [vmem:[%s0 + $0x94] sm:$0xf]
  %v52 = vld [vmem:[%s0 + $0x98] sm:$0xf]
  %v53 = vld [vmem:[%s0 + $0x9c] sm:$0xf]
  %v54 = vld [vmem:[%s0 + $0xa0] sm:$0xf]
  %v55 = vld [vmem:[%s0 + $0xa4] sm:$0xf]
  %v56 = vld [vmem:[%s0 + $0xa8] sm:$0xf]
  %v57 = vld [vmem:[%s0 + $0xac] sm:$0xf]
  %v58 = vld [vmem:[%s0 + $0xb0] sm:$0xf]
  %v59 = vld [vmem:[%s0 + $0xb4] sm:$0xf]
  %v60 = vld [vmem:[%s0 + $0xb8] sm:$0xf]
  %v61 = vld [vmem:[%s0 + $0xbc] sm:$0xf]
  %v62 = vld [vmem:[%s0 + $0xc0] sm:$0xf]
  %v63 = vld [vmem:[%s0 + $0xc4] sm:$0xf]
  %v64 = vld [vmem:[%s0 + $0xc8] sm:$0xf]
  %v65 = vld [vmem:[%s0 + $0xcc] sm:$0xf]
  %v66 = vld [vmem:[%s0 + $0xd0] sm:$0xf]
  %v67 = vld [vmem:[%s0 + $0xd4] sm:$0xf]
  %v68 = vld [vmem:[%s0 + $0xd8] sm:$0xf]
  %v69 = vld [vmem:[%s0 + $0xdc] sm:$0xf]
  %v70 = vld [vmem:[%s0 + $0xe0] sm:$0xf]
  %v71 = vld [vmem:[%s0 + $0xe4] sm:$0xf]
  %v72 = vld [vmem:[%s0 + $0xe8] sm:$0xf]
  %v73 = vld [vmem:[%s0 + $0xec] sm:$0xf]
  %v74 = vld [vmem:[%s0 + $0xf0] sm:$0xf]
  %v75 = vld [vmem:[%s0 + $0xf4] sm:$0xf]
  %v76 = vld [vmem:[%s0 + $0xf8] sm:$0xf]
  %v77 = vld [vmem:[%s0 + $0xfc] sm:$0xf]
  %v78 = vunpack.c.l.bf16 %v14
  %v79 = vunpack.c.l.bf16 %v15
  %v80 = vunpack.c.l.bf16 %v16
  %v81 = vunpack.c.l.bf16 %v17
  %v82 = vunpack.c.l.bf16 %v18
  %v83 = vunpack.c.l.bf16 %v19
  %v84 = vunpack.c.l.bf16 %v20
  %v85 = vunpack.c.l.bf16 %v21
  %v86 = vunpack.c.l.bf16 %v22
  %v87 = vunpack.c.l.bf16 %v23
  %v88 = vunpack.c.l.bf16 %v24
  %v89 = vunpack.c.l.bf16 %v25
  %v90 = vunpack.c.l.bf16 %v26
  %v91 = vunpack.c.l.bf16 %v27
  %v92 = vunpack.c.l.bf16 %v28
  %v93 = vunpack.c.l.bf16 %v29
  %v94 = vunpack.c.l.bf16 %v30
  %v95 = vunpack.c.l.bf16 %v31
  %v96 = vunpack.c.l.bf16 %v32
  %v97 = vunpack.c.l.bf16 %v33
  %v98 = vunpack.c.l.bf16 %v34
  %v99 = vunpack.c.l.bf16 %v35
  %v100 = vunpack.c.l.bf16 %v36
  %v101 = vunpack.c.l.bf16 %v37
  %v102 = vunpack.c.l.bf16 %v38
  %v103 = vunpack.c.l.bf16 %v39
  %v104 = vunpack.c.l.bf16 %v40
  %v105 = vunpack.c.l.bf16 %v41
  %v106 = vunpack.c.l.bf16 %v42
  %v107 = vunpack.c.l.bf16 %v43
  %v108 = vunpack.c.l.bf16 %v44
  %v109 = vunpack.c.l.bf16 %v45
  %v110 = vunpack.c.l.bf16 %v46
  %v111 = vunpack.c.l.bf16 %v47
  %v112 = vunpack.c.l.bf16 %v48
  %v113 = vunpack.c.l.bf16 %v49
  %v114 = vunpack.c.l.bf16 %v50
  %v115 = vunpack.c.l.bf16 %v51
  %v116 = vunpack.c.l.bf16 %v52
  %v117 = vunpack.c.l.bf16 %v53
  %v118 = vunpack.c.l.bf16 %v54
  %v119 = vunpack.c.l.bf16 %v55
  %v120 = vunpack.c.l.bf16 %v56
  %v121 = vunpack.c.l.bf16 %v57
  %v122 = vunpack.c.l.bf16 %v58
  %v123 = vunpack.c.l.bf16 %v59
  %v124 = vunpack.c.l.bf16 %v60
  %v125 = vunpack.c.l.bf16 %v61
  %v126 = vunpack.c.l.bf16 %v62
  %v127 = vunpack.c.l.bf16 %v63
  %v128 = vunpack.c.l.bf16 %v64
  %v129 = vunpack.c.l.bf16 %v65
  %v130 = vunpack.c.l.bf16 %v66
  %v131 = vunpack.c.l.bf16 %v67
  %v132 = vunpack.c.l.bf16 %v68
  %v133 = vunpack.c.l.bf16 %v69
  %v134 = vunpack.c.l.bf16 %v70
  %v135 = vunpack.c.l.bf16 %v71
  %v136 = vunpack.c.l.bf16 %v72
  %v137 = vunpack.c.l.bf16 %v73
  %v138 = vunpack.c.l.bf16 %v74
  %v139 = vunpack.c.l.bf16 %v75
  %v140 = vunpack.c.l.bf16 %v76
  %v141 = vunpack.c.l.bf16 %v77
  %v142 = vld [vmem:[%s1] sm:$0x1]
  %v144 = vlaneseq
  %v145 = vshrl.u32 %v144, 7
  %v146 = vsub.s32 0, %v145
  %v147 = vrot.slane %v142, %v146
  %v149 = vmul.f32 %v78, %v147
  %v150 = vmul.f32 %v79, %v147
  %v151 = vmul.f32 %v80, %v147
  %v152 = vmul.f32 %v81, %v147
  %v153 = vmul.f32 %v82, %v147
  %v154 = vmul.f32 %v83, %v147
  %v155 = vmul.f32 %v84, %v147
  %v156 = vmul.f32 %v85, %v147
  %v157 = vmul.f32 %v86, %v147
  %v158 = vmul.f32 %v87, %v147
  %v159 = vmul.f32 %v88, %v147
  %v160 = vmul.f32 %v89, %v147
  %v161 = vmul.f32 %v90, %v147
  %v162 = vmul.f32 %v91, %v147
  %v163 = vmul.f32 %v92, %v147
  %v164 = vmul.f32 %v93, %v147
  %v165 = vmul.f32 %v94, %v147
  %v166 = vmul.f32 %v95, %v147
  %v167 = vmul.f32 %v96, %v147
  %v168 = vmul.f32 %v97, %v147
  %v169 = vmul.f32 %v98, %v147
  %v170 = vmul.f32 %v99, %v147
  %v171 = vmul.f32 %v100, %v147
  %v172 = vmul.f32 %v101, %v147
  %v173 = vmul.f32 %v102, %v147
  %v174 = vmul.f32 %v103, %v147
  %v175 = vmul.f32 %v104, %v147
  %v176 = vmul.f32 %v105, %v147
  %v177 = vmul.f32 %v106, %v147
  %v178 = vmul.f32 %v107, %v147
  %v179 = vmul.f32 %v108, %v147
  %v180 = vmul.f32 %v109, %v147
  %v181 = vmul.f32 %v110, %v147
  %v182 = vmul.f32 %v111, %v147
  %v183 = vmul.f32 %v112, %v147
  %v184 = vmul.f32 %v113, %v147
  %v185 = vmul.f32 %v114, %v147
  %v186 = vmul.f32 %v115, %v147
  %v187 = vmul.f32 %v116, %v147
  %v188 = vmul.f32 %v117, %v147
  %v189 = vmul.f32 %v118, %v147
  %v190 = vmul.f32 %v119, %v147
  %v191 = vmul.f32 %v120, %v147
  %v192 = vmul.f32 %v121, %v147
  %v193 = vmul.f32 %v122, %v147
  %v194 = vmul.f32 %v123, %v147
  %v195 = vmul.f32 %v124, %v147
  %v196 = vmul.f32 %v125, %v147
  %v197 = vmul.f32 %v126, %v147
  %v198 = vmul.f32 %v127, %v147
  %v199 = vmul.f32 %v128, %v147
  %v200 = vmul.f32 %v129, %v147
  %v201 = vmul.f32 %v130, %v147
  %v202 = vmul.f32 %v131, %v147
  %v203 = vmul.f32 %v132, %v147
  %v204 = vmul.f32 %v133, %v147
  %v205 = vmul.f32 %v134, %v147
  %v206 = vmul.f32 %v135, %v147
  %v207 = vmul.f32 %v136, %v147
  %v208 = vmul.f32 %v137, %v147
  %v209 = vmul.f32 %v138, %v147
  %v210 = vmul.f32 %v139, %v147
  %v211 = vmul.f32 %v140, %v147
  %v212 = vmul.f32 %v141, %v147
  %v213 = vld [vmem:[%s2] sm:$0x1]
  %v215 = vlaneseq
  %v216 = vshrl.u32 %v215, 7
  %v217 = vsub.s32 0, %v216
  %v218 = vrot.slane %v213, %v217
  %v220 = vadd.f32 %v149, %v218
  %v221 = vadd.f32 %v150, %v218
  %v222 = vadd.f32 %v151, %v218
  %v223 = vadd.f32 %v152, %v218
  %v224 = vadd.f32 %v153, %v218
  %v225 = vadd.f32 %v154, %v218
  %v226 = vadd.f32 %v155, %v218
  %v227 = vadd.f32 %v156, %v218
  %v228 = vadd.f32 %v157, %v218
  %v229 = vadd.f32 %v158, %v218
  %v230 = vadd.f32 %v159, %v218
  %v231 = vadd.f32 %v160, %v218
  %v232 = vadd.f32 %v161, %v218
  %v233 = vadd.f32 %v162, %v218
  %v234 = vadd.f32 %v163, %v218
  %v235 = vadd.f32 %v164, %v218
  %v236 = vadd.f32 %v165, %v218
  %v237 = vadd.f32 %v166, %v218
  %v238 = vadd.f32 %v167, %v218
  %v239 = vadd.f32 %v168, %v218
  %v240 = vadd.f32 %v169, %v218
  %v241 = vadd.f32 %v170, %v218
  %v242 = vadd.f32 %v171, %v218
  %v243 = vadd.f32 %v172, %v218
  %v244 = vadd.f32 %v173, %v218
  %v245 = vadd.f32 %v174, %v218
  %v246 = vadd.f32 %v175, %v218
  %v247 = vadd.f32 %v176, %v218
  %v248 = vadd.f32 %v177, %v218
  %v249 = vadd.f32 %v178, %v218
  %v250 = vadd.f32 %v179, %v218
  %v251 = vadd.f32 %v180, %v218
  %v252 = vadd.f32 %v181, %v218
  %v253 = vadd.f32 %v182, %v218
  %v254 = vadd.f32 %v183, %v218
  %v255 = vadd.f32 %v184, %v218
  %v256 = vadd.f32 %v185, %v218
  %v257 = vadd.f32 %v186, %v218
  %v258 = vadd.f32 %v187, %v218
  %v259 = vadd.f32 %v188, %v218
  %v260 = vadd.f32 %v189, %v218
  %v261 = vadd.f32 %v190, %v218
  %v262 = vadd.f32 %v191, %v218
  %v263 = vadd.f32 %v192, %v218
  %v264 = vadd.f32 %v193, %v218
  %v265 = vadd.f32 %v194, %v218
  %v266 = vadd.f32 %v195, %v218
  %v267 = vadd.f32 %v196, %v218
  %v268 = vadd.f32 %v197, %v218
  %v269 = vadd.f32 %v198, %v218
  %v270 = vadd.f32 %v199, %v218
  %v271 = vadd.f32 %v200, %v218
  %v272 = vadd.f32 %v201, %v218
  %v273 = vadd.f32 %v202, %v218
  %v274 = vadd.f32 %v203, %v218
  %v275 = vadd.f32 %v204, %v218
  %v276 = vadd.f32 %v205, %v218
  %v277 = vadd.f32 %v206, %v218
  %v278 = vadd.f32 %v207, %v218
  %v279 = vadd.f32 %v208, %v218
  %v280 = vadd.f32 %v209, %v218
  %v281 = vadd.f32 %v210, %v218
  %v282 = vadd.f32 %v211, %v218
  %v283 = vadd.f32 %v212, %v218
  %vm284 = vcmp.gt.f32.partialorder %v220, 0.0
  %vm285 = vcmp.gt.f32.partialorder %v221, 0.0
  %vm286 = vcmp.gt.f32.partialorder %v222, 0.0
  %vm287 = vcmp.gt.f32.partialorder %v223, 0.0
  %vm288 = vcmp.gt.f32.partialorder %v224, 0.0
  %vm289 = vcmp.gt.f32.partialorder %v225, 0.0
  %vm290 = vcmp.gt.f32.partialorder %v226, 0.0
  %vm291 = vcmp.gt.f32.partialorder %v227, 0.0
  %vm292 = vcmp.gt.f32.partialorder %v228, 0.0
  %vm293 = vcmp.gt.f32.partialorder %v229, 0.0
  %vm294 = vcmp.gt.f32.partialorder %v230, 0.0
  %vm295 = vcmp.gt.f32.partialorder %v231, 0.0
  %vm296 = vcmp.gt.f32.partialorder %v232, 0.0
  %vm297 = vcmp.gt.f32.partialorder %v233, 0.0
  %vm298 = vcmp.gt.f32.partialorder %v234, 0.0
  %vm299 = vcmp.gt.f32.partialorder %v235, 0.0
  %vm300 = vcmp.gt.f32.partialorder %v236, 0.0
  %vm301 = vcmp.gt.f32.partialorder %v237, 0.0
  %vm302 = vcmp.gt.f32.partialorder %v238, 0.0
  %vm303 = vcmp.gt.f32.partialorder %v239, 0.0
  %vm304 = vcmp.gt.f32.partialorder %v240, 0.0
  %vm305 = vcmp.gt.f32.partialorder %v241, 0.0
  %vm306 = vcmp.gt.f32.partialorder %v242, 0.0
  %vm307 = vcmp.gt.f32.partialorder %v243, 0.0
  %vm308 = vcmp.gt.f32.partialorder %v244, 0.0
  %vm309 = vcmp.gt.f32.partialorder %v245, 0.0
  %vm310 = vcmp.gt.f32.partialorder %v246, 0.0
  %vm311 = vcmp.gt.f32.partialorder %v247, 0.0
  %vm312 = vcmp.gt.f32.partialorder %v248, 0.0
  %vm313 = vcmp.gt.f32.partialorder %v249, 0.0
  %vm314 = vcmp.gt.f32.partialorder %v250, 0.0
  %vm315 = vcmp.gt.f32.partialorder %v251, 0.0
  %vm316 = vcmp.gt.f32.partialorder %v252, 0.0
  %vm317 = vcmp.gt.f32.partialorder %v253, 0.0
  %vm318 = vcmp.gt.f32.partialorder %v254, 0.0
  %vm319 = vcmp.gt.f32.partialorder %v255, 0.0
  %vm320 = vcmp.gt.f32.partialorder %v256, 0.0
  %vm321 = vcmp.gt.f32.partialorder %v257, 0.0
  %vm322 = vcmp.gt.f32.partialorder %v258, 0.0
  %vm323 = vcmp.gt.f32.partialorder %v259, 0.0
  %vm324 = vcmp.gt.f32.partialorder %v260, 0.0
  %vm325 = vcmp.gt.f32.partialorder %v261, 0.0
  %vm326 = vcmp.gt.f32.partialorder %v262, 0.0
  %vm327 = vcmp.gt.f32.partialorder %v263, 0.0
  %vm328 = vcmp.gt.f32.partialorder %v264, 0.0
  %vm329 = vcmp.gt.f32.partialorder %v265, 0.0
  %vm330 = vcmp.gt.f32.partialorder %v266, 0.0
  %vm331 = vcmp.gt.f32.partialorder %v267, 0.0
  %vm332 = vcmp.gt.f32.partialorder %v268, 0.0
  %vm333 = vcmp.gt.f32.partialorder %v269, 0.0
  %vm334 = vcmp.gt.f32.partialorder %v270, 0.0
  %vm335 = vcmp.gt.f32.partialorder %v271, 0.0
  %vm336 = vcmp.gt.f32.partialorder %v272, 0.0
  %vm337 = vcmp.gt.f32.partialorder %v273, 0.0
  %vm338 = vcmp.gt.f32.partialorder %v274, 0.0
  %vm339 = vcmp.gt.f32.partialorder %v275, 0.0
  %vm340 = vcmp.gt.f32.partialorder %v276, 0.0
  %vm341 = vcmp.gt.f32.partialorder %v277, 0.0
  %vm342 = vcmp.gt.f32.partialorder %v278, 0.0
  %vm343 = vcmp.gt.f32.partialorder %v279, 0.0
  %vm344 = vcmp.gt.f32.partialorder %v280, 0.0
  %vm345 = vcmp.gt.f32.partialorder %v281, 0.0
  %vm346 = vcmp.gt.f32.partialorder %v282, 0.0
  %vm347 = vcmp.gt.f32.partialorder %v283, 0.0
  %v348 = vmul.f32 %v220, 0.2
  %v349 = vmul.f32 %v221, 0.2
  %v350 = vmul.f32 %v222, 0.2
  %v351 = vmul.f32 %v223, 0.2
  %v352 = vmul.f32 %v224, 0.2
  %v353 = vmul.f32 %v225, 0.2
  %v354 = vmul.f32 %v226, 0.2
  %v355 = vmul.f32 %v227, 0.2
  %v356 = vmul.f32 %v228, 0.2
  %v357 = vmul.f32 %v229, 0.2
  %v358 = vmul.f32 %v230, 0.2
  %v359 = vmul.f32 %v231, 0.2
  %v360 = vmul.f32 %v232, 0.2
  %v361 = vmul.f32 %v233, 0.2
  %v362 = vmul.f32 %v234, 0.2
  %v363 = vmul.f32 %v235, 0.2
  %v364 = vmul.f32 %v236, 0.2
  %v365 = vmul.f32 %v237, 0.2
  %v366 = vmul.f32 %v238, 0.2
  %v367 = vmul.f32 %v239, 0.2
  %v368 = vmul.f32 %v240, 0.2
  %v369 = vmul.f32 %v241, 0.2
  %v370 = vmul.f32 %v242, 0.2
  %v371 = vmul.f32 %v243, 0.2
  %v372 = vmul.f32 %v244, 0.2
  %v373 = vmul.f32 %v245, 0.2
  %v374 = vmul.f32 %v246, 0.2
  %v375 = vmul.f32 %v247, 0.2
  %v376 = vmul.f32 %v248, 0.2
  %v377 = vmul.f32 %v249, 0.2
  %v378 = vmul.f32 %v250, 0.2
  %v379 = vmul.f32 %v251, 0.2
  %v380 = vmul.f32 %v252, 0.2
  %v381 = vmul.f32 %v253, 0.2
  %v382 = vmul.f32 %v254, 0.2
  %v383 = vmul.f32 %v255, 0.2
  %v384 = vmul.f32 %v256, 0.2
  %v385 = vmul.f32 %v257, 0.2
  %v386 = vmul.f32 %v258, 0.2
  %v387 = vmul.f32 %v259, 0.2
  %v388 = vmul.f32 %v260, 0.2
  %v389 = vmul.f32 %v261, 0.2
  %v390 = vmul.f32 %v262, 0.2
  %v391 = vmul.f32 %v263, 0.2
  %v392 = vmul.f32 %v264, 0.2
  %v393 = vmul.f32 %v265, 0.2
  %v394 = vmul.f32 %v266, 0.2
  %v395 = vmul.f32 %v267, 0.2
  %v396 = vmul.f32 %v268, 0.2
  %v397 = vmul.f32 %v269, 0.2
  %v398 = vmul.f32 %v270, 0.2
  %v399 = vmul.f32 %v271, 0.2
  %v400 = vmul.f32 %v272, 0.2
  %v401 = vmul.f32 %v273, 0.2
  %v402 = vmul.f32 %v274, 0.2
  %v403 = vmul.f32 %v275, 0.2
  %v404 = vmul.f32 %v276, 0.2
  %v405 = vmul.f32 %v277, 0.2
  %v406 = vmul.f32 %v278, 0.2
  %v407 = vmul.f32 %v279, 0.2
  %v408 = vmul.f32 %v280, 0.2
  %v409 = vmul.f32 %v281, 0.2
  %v410 = vmul.f32 %v282, 0.2
  %v411 = vmul.f32 %v283, 0.2
  %v412 = vsel %vm284, %v220, %v348
  %v413 = vsel %vm285, %v221, %v349
  %v414 = vsel %vm286, %v222, %v350
  %v415 = vsel %vm287, %v223, %v351
  %v416 = vsel %vm288, %v224, %v352
  %v417 = vsel %vm289, %v225, %v353
  %v418 = vsel %vm290, %v226, %v354
  %v419 = vsel %vm291, %v227, %v355
  %v420 = vsel %vm292, %v228, %v356
  %v421 = vsel %vm293, %v229, %v357
  %v422 = vsel %vm294, %v230, %v358
  %v423 = vsel %vm295, %v231, %v359
  %v424 = vsel %vm296, %v232, %v360
  %v425 = vsel %vm297, %v233, %v361
  %v426 = vsel %vm298, %v234, %v362
  %v427 = vsel %vm299, %v235, %v363
  %v428 = vsel %vm300, %v236, %v364
  %v429 = vsel %vm301, %v237, %v365
  %v430 = vsel %vm302, %v238, %v366
  %v431 = vsel %vm303, %v239, %v367
  %v432 = vsel %vm304, %v240, %v368
  %v433 = vsel %vm305, %v241, %v369
  %v434 = vsel %vm306, %v242, %v370
  %v435 = vsel %vm307, %v243, %v371
  %v436 = vsel %vm308, %v244, %v372
  %v437 = vsel %vm309, %v245, %v373
  %v438 = vsel %vm310, %v246, %v374
  %v439 = vsel %vm311, %v247, %v375
  %v440 = vsel %vm312, %v248, %v376
  %v441 = vsel %vm313, %v249, %v377
  %v442 = vsel %vm314, %v250, %v378
  %v443 = vsel %vm315, %v251, %v379
  %v444 = vsel %vm316, %v252, %v380
  %v445 = vsel %vm317, %v253, %v381
  %v446 = vsel %vm318, %v254, %v382
  %v447 = vsel %vm319, %v255, %v383
  %v448 = vsel %vm320, %v256, %v384
  %v449 = vsel %vm321, %v257, %v385
  %v450 = vsel %vm322, %v258, %v386
  %v451 = vsel %vm323, %v259, %v387
  %v452 = vsel %vm324, %v260, %v388
  %v453 = vsel %vm325, %v261, %v389
  %v454 = vsel %vm326, %v262, %v390
  %v455 = vsel %vm327, %v263, %v391
  %v456 = vsel %vm328, %v264, %v392
  %v457 = vsel %vm329, %v265, %v393
  %v458 = vsel %vm330, %v266, %v394
  %v459 = vsel %vm331, %v267, %v395
  %v460 = vsel %vm332, %v268, %v396
  %v461 = vsel %vm333, %v269, %v397
  %v462 = vsel %vm334, %v270, %v398
  %v463 = vsel %vm335, %v271, %v399
  %v464 = vsel %vm336, %v272, %v400
  %v465 = vsel %vm337, %v273, %v401
  %v466 = vsel %vm338, %v274, %v402
  %v467 = vsel %vm339, %v275, %v403
  %v468 = vsel %vm340, %v276, %v404
  %v469 = vsel %vm341, %v277, %v405
  %v470 = vsel %vm342, %v278, %v406
  %v471 = vsel %vm343, %v279, %v407
  %v472 = vsel %vm344, %v280, %v408
  %v473 = vsel %vm345, %v281, %v409
  %v474 = vsel %vm346, %v282, %v410
  %v475 = vsel %vm347, %v283, %v411
  %v476 = vpack.c.bf16 %v413, %v412
  %v477 = vpack.c.bf16 %v415, %v414
  %v478 = vpack.c.bf16 %v417, %v416
  %v479 = vpack.c.bf16 %v419, %v418
  %v480 = vpack.c.bf16 %v421, %v420
  %v481 = vpack.c.bf16 %v423, %v422
  %v482 = vpack.c.bf16 %v425, %v424
  %v483 = vpack.c.bf16 %v427, %v426
  %v484 = vpack.c.bf16 %v429, %v428
  %v485 = vpack.c.bf16 %v431, %v430
  %v486 = vpack.c.bf16 %v433, %v432
  %v487 = vpack.c.bf16 %v435, %v434
  %v488 = vpack.c.bf16 %v437, %v436
  %v489 = vpack.c.bf16 %v439, %v438
  %v490 = vpack.c.bf16 %v441, %v440
  %v491 = vpack.c.bf16 %v443, %v442
  %v492 = vpack.c.bf16 %v445, %v444
  %v493 = vpack.c.bf16 %v447, %v446
  %v494 = vpack.c.bf16 %v449, %v448
  %v495 = vpack.c.bf16 %v451, %v450
  %v496 = vpack.c.bf16 %v453, %v452
  %v497 = vpack.c.bf16 %v455, %v454
  %v498 = vpack.c.bf16 %v457, %v456
  %v499 = vpack.c.bf16 %v459, %v458
  %v500 = vpack.c.bf16 %v461, %v460
  %v501 = vpack.c.bf16 %v463, %v462
  %v502 = vpack.c.bf16 %v465, %v464
  %v503 = vpack.c.bf16 %v467, %v466
  %v504 = vpack.c.bf16 %v469, %v468
  %v505 = vpack.c.bf16 %v471, %v470
  %v506 = vpack.c.bf16 %v473, %v472
  %v507 = vpack.c.bf16 %v475, %v474
  %v540 = vunpack.c.l.b16 %v476
  %v541 = vunpack.c.h.b16 %v476
  %v542 = vunpack.c.l.b16 %v477
  %v543 = vunpack.c.h.b16 %v477
  %v544 = vunpack.c.l.b16 %v478
  %v545 = vunpack.c.h.b16 %v478
  %v546 = vunpack.c.l.b16 %v479
  %v547 = vunpack.c.h.b16 %v479
  %v548 = vunpack.c.l.b16 %v480
  %v549 = vunpack.c.h.b16 %v480
  %v550 = vunpack.c.l.b16 %v481
  %v551 = vunpack.c.h.b16 %v481
  %v552 = vunpack.c.l.b16 %v482
  %v553 = vunpack.c.h.b16 %v482
  %v554 = vunpack.c.l.b16 %v483
  %v555 = vunpack.c.h.b16 %v483
  %v556 = vunpack.c.l.b16 %v484
  %v557 = vunpack.c.h.b16 %v484
  %v558 = vunpack.c.l.b16 %v485
  %v559 = vunpack.c.h.b16 %v485
  %v560 = vunpack.c.l.b16 %v486
  %v561 = vunpack.c.h.b16 %v486
  %v562 = vunpack.c.l.b16 %v487
  %v563 = vunpack.c.h.b16 %v487
  %v564 = vunpack.c.l.b16 %v488
  %v565 = vunpack.c.h.b16 %v488
  %v566 = vunpack.c.l.b16 %v489
  %v567 = vunpack.c.h.b16 %v489
  %v568 = vunpack.c.l.b16 %v490
  %v569 = vunpack.c.h.b16 %v490
  %v570 = vunpack.c.l.b16 %v491
  %v571 = vunpack.c.h.b16 %v491
  %v572 = vunpack.c.l.b16 %v492
  %v573 = vunpack.c.h.b16 %v492
  %v574 = vunpack.c.l.b16 %v493
  %v575 = vunpack.c.h.b16 %v493
  %v576 = vunpack.c.l.b16 %v494
  %v577 = vunpack.c.h.b16 %v494
  %v578 = vunpack.c.l.b16 %v495
  %v579 = vunpack.c.h.b16 %v495
  %v580 = vunpack.c.l.b16 %v496
  %v581 = vunpack.c.h.b16 %v496
  %v582 = vunpack.c.l.b16 %v497
  %v583 = vunpack.c.h.b16 %v497
  %v584 = vunpack.c.l.b16 %v498
  %v585 = vunpack.c.h.b16 %v498
  %v586 = vunpack.c.l.b16 %v499
  %v587 = vunpack.c.h.b16 %v499
  %v588 = vunpack.c.l.b16 %v500
  %v589 = vunpack.c.h.b16 %v500
  %v590 = vunpack.c.l.b16 %v501
  %v591 = vunpack.c.h.b16 %v501
  %v592 = vunpack.c.l.b16 %v502
  %v593 = vunpack.c.h.b16 %v502
  %v594 = vunpack.c.l.b16 %v503
  %v595 = vunpack.c.h.b16 %v503
  %v596 = vunpack.c.l.b16 %v504
  %v597 = vunpack.c.h.b16 %v504
  %v598 = vunpack.c.l.b16 %v505
  %v599 = vunpack.c.h.b16 %v505
  %v600 = vunpack.c.l.b16 %v506
  %v601 = vunpack.c.h.b16 %v506
  %v602 = vunpack.c.l.b16 %v507
  %v603 = vunpack.c.h.b16 %v507
  %v604 = vpack.c.b16 %v540, %v540
  %v605 = vpack.c.b16 %v541, %v541
  %v606 = vpack.c.b16 %v542, %v542
  %v607 = vpack.c.b16 %v543, %v543
  %v608 = vpack.c.b16 %v544, %v544
  %v609 = vpack.c.b16 %v545, %v545
  %v610 = vpack.c.b16 %v546, %v546
  %v611 = vpack.c.b16 %v547, %v547
  %v612 = vpack.c.b16 %v548, %v548
  %v613 = vpack.c.b16 %v549, %v549
  %v614 = vpack.c.b16 %v550, %v550
  %v615 = vpack.c.b16 %v551, %v551
  %v616 = vpack.c.b16 %v552, %v552
  %v617 = vpack.c.b16 %v553, %v553
  %v618 = vpack.c.b16 %v554, %v554
  %v619 = vpack.c.b16 %v555, %v555
  %v620 = vpack.c.b16 %v556, %v556
  %v621 = vpack.c.b16 %v557, %v557
  %v622 = vpack.c.b16 %v558, %v558
  %v623 = vpack.c.b16 %v559, %v559
  %v624 = vpack.c.b16 %v560, %v560
  %v625 = vpack.c.b16 %v561, %v561
  %v626 = vpack.c.b16 %v562, %v562
  %v627 = vpack.c.b16 %v563, %v563
  %v628 = vpack.c.b16 %v564, %v564
  %v629 = vpack.c.b16 %v565, %v565
  %v630 = vpack.c.b16 %v566, %v566
  %v631 = vpack.c.b16 %v567, %v567
  %v632 = vpack.c.b16 %v568, %v568
  %v633 = vpack.c.b16 %v569, %v569
  %v634 = vpack.c.b16 %v570, %v570
  %v635 = vpack.c.b16 %v571, %v571
  %v636 = vpack.c.b16 %v572, %v572
  %v637 = vpack.c.b16 %v573, %v573
  %v638 = vpack.c.b16 %v574, %v574
  %v639 = vpack.c.b16 %v575, %v575
  %v640 = vpack.c.b16 %v576, %v576
  %v641 = vpack.c.b16 %v577, %v577
  %v642 = vpack.c.b16 %v578, %v578
  %v643 = vpack.c.b16 %v579, %v579
  %v644 = vpack.c.b16 %v580, %v580
  %v645 = vpack.c.b16 %v581, %v581
  %v646 = vpack.c.b16 %v582, %v582
  %v647 = vpack.c.b16 %v583, %v583
  %v648 = vpack.c.b16 %v584, %v584
  %v649 = vpack.c.b16 %v585, %v585
  %v650 = vpack.c.b16 %v586, %v586
  %v651 = vpack.c.b16 %v587, %v587
  %v652 = vpack.c.b16 %v588, %v588
  %v653 = vpack.c.b16 %v589, %v589
  %v654 = vpack.c.b16 %v590, %v590
  %v655 = vpack.c.b16 %v591, %v591
  %v656 = vpack.c.b16 %v592, %v592
  %v657 = vpack.c.b16 %v593, %v593
  %v658 = vpack.c.b16 %v594, %v594
  %v659 = vpack.c.b16 %v595, %v595
  %v660 = vpack.c.b16 %v596, %v596
  %v661 = vpack.c.b16 %v597, %v597
  %v662 = vpack.c.b16 %v598, %v598
  %v663 = vpack.c.b16 %v599, %v599
  %v664 = vpack.c.b16 %v600, %v600
  %v665 = vpack.c.b16 %v601, %v601
  %v666 = vpack.c.b16 %v602, %v602
  %v667 = vpack.c.b16 %v603, %v603
  %732 = vst [vmem:[%s3] sm:$0xf] %v604
  %733 = vst [vmem:[%s3 + $0x4] sm:$0xf] %v605
  %734 = vst [vmem:[%s3 + $0x8] sm:$0xf] %v606
  %735 = vst [vmem:[%s3 + $0xc] sm:$0xf] %v607
  %736 = vst [vmem:[%s3 + $0x10] sm:$0xf] %v608
  %737 = vst [vmem:[%s3 + $0x14] sm:$0xf] %v609
  %738 = vst [vmem:[%s3 + $0x18] sm:$0xf] %v610
  %739 = vst [vmem:[%s3 + $0x1c] sm:$0xf] %v611
  %740 = vst [vmem:[%s3 + $0x20] sm:$0xf] %v612
  %741 = vst [vmem:[%s3 + $0x24] sm:$0xf] %v613
  %742 = vst [vmem:[%s3 + $0x28] sm:$0xf] %v614
  %743 = vst [vmem:[%s3 + $0x2c] sm:$0xf] %v615
  %744 = vst [vmem:[%s3 + $0x30] sm:$0xf] %v616
  %745 = vst [vmem:[%s3 + $0x34] sm:$0xf] %v617
  %746 = vst [vmem:[%s3 + $0x38] sm:$0xf] %v618
  %747 = vst [vmem:[%s3 + $0x3c] sm:$0xf] %v619
  %748 = vst [vmem:[%s3 + $0x40] sm:$0xf] %v620
  %749 = vst [vmem:[%s3 + $0x44] sm:$0xf] %v621
  %750 = vst [vmem:[%s3 + $0x48] sm:$0xf] %v622
  %751 = vst [vmem:[%s3 + $0x4c] sm:$0xf] %v623
  %752 = vst [vmem:[%s3 + $0x50] sm:$0xf] %v624
  %753 = vst [vmem:[%s3 + $0x54] sm:$0xf] %v625
  %754 = vst [vmem:[%s3 + $0x58] sm:$0xf] %v626
  %755 = vst [vmem:[%s3 + $0x5c] sm:$0xf] %v627
  %756 = vst [vmem:[%s3 + $0x60] sm:$0xf] %v628
  %757 = vst [vmem:[%s3 + $0x64] sm:$0xf] %v629
  %758 = vst [vmem:[%s3 + $0x68] sm:$0xf] %v630
  %759 = vst [vmem:[%s3 + $0x6c] sm:$0xf] %v631
  %760 = vst [vmem:[%s3 + $0x70] sm:$0xf] %v632
  %761 = vst [vmem:[%s3 + $0x74] sm:$0xf] %v633
  %762 = vst [vmem:[%s3 + $0x78] sm:$0xf] %v634
  %763 = vst [vmem:[%s3 + $0x7c] sm:$0xf] %v635
  %764 = vst [vmem:[%s3 + $0x80] sm:$0xf] %v636
  %765 = vst [vmem:[%s3 + $0x84] sm:$0xf] %v637
  %766 = vst [vmem:[%s3 + $0x88] sm:$0xf] %v638
  %767 = vst [vmem:[%s3 + $0x8c] sm:$0xf] %v639
  %768 = vst [vmem:[%s3 + $0x90] sm:$0xf] %v640
  %769 = vst [vmem:[%s3 + $0x94] sm:$0xf] %v641
  %770 = vst [vmem:[%s3 + $0x98] sm:$0xf] %v642
  %771 = vst [vmem:[%s3 + $0x9c] sm:$0xf] %v643
  %772 = vst [vmem:[%s3 + $0xa0] sm:$0xf] %v644
  %773 = vst [vmem:[%s3 + $0xa4] sm:$0xf] %v645
  %774 = vst [vmem:[%s3 + $0xa8] sm:$0xf] %v646
  %775 = vst [vmem:[%s3 + $0xac] sm:$0xf] %v647
  %776 = vst [vmem:[%s3 + $0xb0] sm:$0xf] %v648
  %777 = vst [vmem:[%s3 + $0xb4] sm:$0xf] %v649
  %778 = vst [vmem:[%s3 + $0xb8] sm:$0xf] %v650
  %779 = vst [vmem:[%s3 + $0xbc] sm:$0xf] %v651
  %780 = vst [vmem:[%s3 + $0xc0] sm:$0xf] %v652
  %781 = vst [vmem:[%s3 + $0xc4] sm:$0xf] %v653
  %782 = vst [vmem:[%s3 + $0xc8] sm:$0xf] %v654
  %783 = vst [vmem:[%s3 + $0xcc] sm:$0xf] %v655
  %784 = vst [vmem:[%s3 + $0xd0] sm:$0xf] %v656
  %785 = vst [vmem:[%s3 + $0xd4] sm:$0xf] %v657
  %786 = vst [vmem:[%s3 + $0xd8] sm:$0xf] %v658
  %787 = vst [vmem:[%s3 + $0xdc] sm:$0xf] %v659
  %788 = vst [vmem:[%s3 + $0xe0] sm:$0xf] %v660
  %789 = vst [vmem:[%s3 + $0xe4] sm:$0xf] %v661
  %790 = vst [vmem:[%s3 + $0xe8] sm:$0xf] %v662
  %791 = vst [vmem:[%s3 + $0xec] sm:$0xf] %v663
  %792 = vst [vmem:[%s3 + $0xf0] sm:$0xf] %v664
  %793 = vst [vmem:[%s3 + $0xf4] sm:$0xf] %v665
  %794 = vst [vmem:[%s3 + $0xf8] sm:$0xf] %v666
  %795 = vst [vmem:[%s3 + $0xfc] sm:$0xf] %v667
  // Predicated region
  $region14: #{discriminator_forward.9} parent=0 // pred_check
    _
  $region15: #{discriminator_forward.9} parent=0 // pred_check_branch
    %797 = sbr.rel (0) target = $region17
  $region16: #{discriminator_forward.9} parent=0 // pred_region
    _
  $region17: #{discriminator_forward.9} parent=0 // pred_fallthru
    _
  // Predicated region
  $region18: #{discriminator_forward.9} parent=0 // pred_check
    _
  $region19: #{discriminator_forward.9} parent=0 // pred_check_branch
    %799 = sbr.rel (0) target = $region21
  $region20: #{discriminator_forward.9} parent=0 // pred_region
    _
  $region21: #{discriminator_forward.9} parent=0 // pred_fallthru
    _

// kernel: discriminator_forward.11
$region0: #{discriminator_forward.11}
  #allocation0 [shape = 'u32[]', space=smem, size = 0x4, offset = 0x4, fixed_abs, tag = 'smem constant byte address 0x4 - core index']
  #allocation1 [shape = 'u32[144,128]{1,0:T(1,128)}', space=vmem, size = 0x12000, scoped, tag = 'internal scratch']
  %s0 = inlined_call_operand.vmem [shape: bf16[128,128], index: 0, kind: input, shape index: {}]
  %s1 = inlined_call_operand.vmem [shape: f32[1,128], index: 1, kind: input, shape index: {}]
  %s2 = inlined_call_operand.vmem [shape: f32[1,128], index: 2, kind: input, shape index: {}]
  %s3 = inlined_call_operand.vmem [shape: bf16[128,128], index: 3, kind: output, shape index: {}]
  %s4 = sld [smem:[#allocation0]]
  $region22: #{discriminator_forward.11} parent=0
    _
  %s6 = ssub.s32 1, %s4
  %s7 = scalar_select 0, %s6, %s4
  // Predicated region
  $region2: #{discriminator_forward.11} parent=0 // pred_check
    _
  $region3: #{discriminator_forward.11} parent=0 // pred_check_branch
    %9 = sbr.rel (0) target = $region5
  $region4: #{discriminator_forward.11} parent=0 // pred_region
    _
  $region5: #{discriminator_forward.11} parent=0 // pred_fallthru
    _
  // Predicated region
  $region6: #{discriminator_forward.11} parent=0 // pred_check
    _
  $region7: #{discriminator_forward.11} parent=0 // pred_check_branch
    %11 = sbr.rel (0) target = $region9
  $region8: #{discriminator_forward.11} parent=0 // pred_region
    _
  $region9: #{discriminator_forward.11} parent=0 // pred_fallthru
    _
  // Predicated region
  $region10: #{discriminator_forward.11} parent=0 // pred_check
    _
  $region11: #{discriminator_forward.11} parent=0 // pred_check_branch
    %13 = sbr.rel (0) target = $region13
  $region12: #{discriminator_forward.11} parent=0 // pred_region
    _
  $region13: #{discriminator_forward.11} parent=0 // pred_fallthru
    _
  %v14 = vld [vmem:[%s0] sm:$0xf]
  %v15 = vld [vmem:[%s0 + $0x4] sm:$0xf]
  %v16 = vld [vmem:[%s0 + $0x8] sm:$0xf]
  %v17 = vld [vmem:[%s0 + $0xc] sm:$0xf]
  %v18 = vld [vmem:[%s0 + $0x10] sm:$0xf]
  %v19 = vld [vmem:[%s0 + $0x14] sm:$0xf]
  %v20 = vld [vmem:[%s0 + $0x18] sm:$0xf]
  %v21 = vld [vmem:[%s0 + $0x1c] sm:$0xf]
  %v22 = vld [vmem:[%s0 + $0x20] sm:$0xf]
  %v23 = vld [vmem:[%s0 + $0x24] sm:$0xf]
  %v24 = vld [vmem:[%s0 + $0x28] sm:$0xf]
  %v25 = vld [vmem:[%s0 + $0x2c] sm:$0xf]
  %v26 = vld [vmem:[%s0 + $0x30] sm:$0xf]
  %v27 = vld [vmem:[%s0 + $0x34] sm:$0xf]
  %v28 = vld [vmem:[%s0 + $0x38] sm:$0xf]
  %v29 = vld [vmem:[%s0 + $0x3c] sm:$0xf]
  %v30 = vunpack.c.l.bf16 %v14
  %v31 = vunpack.c.l.bf16 %v15
  %v32 = vunpack.c.l.bf16 %v16
  %v33 = vunpack.c.l.bf16 %v17
  %v34 = vunpack.c.l.bf16 %v18
  %v35 = vunpack.c.l.bf16 %v19
  %v36 = vunpack.c.l.bf16 %v20
  %v37 = vunpack.c.l.bf16 %v21
  %v38 = vunpack.c.l.bf16 %v22
  %v39 = vunpack.c.l.bf16 %v23
  %v40 = vunpack.c.l.bf16 %v24
  %v41 = vunpack.c.l.bf16 %v25
  %v42 = vunpack.c.l.bf16 %v26
  %v43 = vunpack.c.l.bf16 %v27
  %v44 = vunpack.c.l.bf16 %v28
  %v45 = vunpack.c.l.bf16 %v29
  %v46 = vld [vmem:[%s1] sm:$0x1]
  %v48 = vlaneseq
  %v49 = vshrl.u32 %v48, 7
  %v50 = vsub.s32 0, %v49
  %v51 = vrot.slane %v46, %v50
  %v53 = vmul.f32 %v30, %v51
  %v54 = vmul.f32 %v31, %v51
  %v55 = vmul.f32 %v32, %v51
  %v56 = vmul.f32 %v33, %v51
  %v57 = vmul.f32 %v34, %v51
  %v58 = vmul.f32 %v35, %v51
  %v59 = vmul.f32 %v36, %v51
  %v60 = vmul.f32 %v37, %v51
  %v61 = vmul.f32 %v38, %v51
  %v62 = vmul.f32 %v39, %v51
  %v63 = vmul.f32 %v40, %v51
  %v64 = vmul.f32 %v41, %v51
  %v65 = vmul.f32 %v42, %v51
  %v66 = vmul.f32 %v43, %v51
  %v67 = vmul.f32 %v44, %v51
  %v68 = vmul.f32 %v45, %v51
  %v69 = vld [vmem:[%s2] sm:$0x1]
  %v71 = vlaneseq
  %v72 = vshrl.u32 %v71, 7
  %v73 = vsub.s32 0, %v72
  %v74 = vrot.slane %v69, %v73
  %v76 = vadd.f32 %v53, %v74
  %v77 = vadd.f32 %v54, %v74
  %v78 = vadd.f32 %v55, %v74
  %v79 = vadd.f32 %v56, %v74
  %v80 = vadd.f32 %v57, %v74
  %v81 = vadd.f32 %v58, %v74
  %v82 = vadd.f32 %v59, %v74
  %v83 = vadd.f32 %v60, %v74
  %v84 = vadd.f32 %v61, %v74
  %v85 = vadd.f32 %v62, %v74
  %v86 = vadd.f32 %v63, %v74
  %v87 = vadd.f32 %v64, %v74
  %v88 = vadd.f32 %v65, %v74
  %v89 = vadd.f32 %v66, %v74
  %v90 = vadd.f32 %v67, %v74
  %v91 = vadd.f32 %v68, %v74
  %vm92 = vcmp.gt.f32.partialorder %v76, 0.0
  %vm93 = vcmp.gt.f32.partialorder %v77, 0.0
  %vm94 = vcmp.gt.f32.partialorder %v78, 0.0
  %vm95 = vcmp.gt.f32.partialorder %v79, 0.0
  %vm96 = vcmp.gt.f32.partialorder %v80, 0.0
  %vm97 = vcmp.gt.f32.partialorder %v81, 0.0
  %vm98 = vcmp.gt.f32.partialorder %v82, 0.0
  %vm99 = vcmp.gt.f32.partialorder %v83, 0.0
  %vm100 = vcmp.gt.f32.partialorder %v84, 0.0
  %vm101 = vcmp.gt.f32.partialorder %v85, 0.0
  %vm102 = vcmp.gt.f32.partialorder %v86, 0.0
  %vm103 = vcmp.gt.f32.partialorder %v87, 0.0
  %vm104 = vcmp.gt.f32.partialorder %v88, 0.0
  %vm105 = vcmp.gt.f32.partialorder %v89, 0.0
  %vm106 = vcmp.gt.f32.partialorder %v90, 0.0
  %vm107 = vcmp.gt.f32.partialorder %v91, 0.0
  %v108 = vmul.f32 %v76, 0.2
  %v109 = vmul.f32 %v77, 0.2
  %v110 = vmul.f32 %v78, 0.2
  %v111 = vmul.f32 %v79, 0.2
  %v112 = vmul.f32 %v80, 0.2
  %v113 = vmul.f32 %v81, 0.2
  %v114 = vmul.f32 %v82, 0.2
  %v115 = vmul.f32 %v83, 0.2
  %v116 = vmul.f32 %v84, 0.2
  %v117 = vmul.f32 %v85, 0.2
  %v118 = vmul.f32 %v86, 0.2
  %v119 = vmul.f32 %v87, 0.2
  %v120 = vmul.f32 %v88, 0.2
  %v121 = vmul.f32 %v89, 0.2
  %v122 = vmul.f32 %v90, 0.2
  %v123 = vmul.f32 %v91, 0.2
  %v124 = vsel %vm92, %v76, %v108
  %v125 = vsel %vm93, %v77, %v109
  %v126 = vsel %vm94, %v78, %v110
  %v127 = vsel %vm95, %v79, %v111
  %v128 = vsel %vm96, %v80, %v112
  %v129 = vsel %vm97, %v81, %v113
  %v130 = vsel %vm98, %v82, %v114
  %v131 = vsel %vm99, %v83, %v115
  %v132 = vsel %vm100, %v84, %v116
  %v133 = vsel %vm101, %v85, %v117
  %v134 = vsel %vm102, %v86, %v118
  %v135 = vsel %vm103, %v87, %v119
  %v136 = vsel %vm104, %v88, %v120
  %v137 = vsel %vm105, %v89, %v121
  %v138 = vsel %vm106, %v90, %v122
  %v139 = vsel %vm107, %v91, %v123
  %v140 = vpack.c.bf16 %v125, %v124
  %v141 = vpack.c.bf16 %v127, %v126
  %v142 = vpack.c.bf16 %v129, %v128
  %v143 = vpack.c.bf16 %v131, %v130
  %v144 = vpack.c.bf16 %v133, %v132
  %v145 = vpack.c.bf16 %v135, %v134
  %v146 = vpack.c.bf16 %v137, %v136
  %v147 = vpack.c.bf16 %v139, %v138
  %v156 = vunpack.c.l.b16 %v140
  %v157 = vunpack.c.h.b16 %v140
  %v158 = vunpack.c.l.b16 %v141
  %v159 = vunpack.c.h.b16 %v141
  %v160 = vunpack.c.l.b16 %v142
  %v161 = vunpack.c.h.b16 %v142
  %v162 = vunpack.c.l.b16 %v143
  %v163 = vunpack.c.h.b16 %v143
  %v164 = vunpack.c.l.b16 %v144
  %v165 = vunpack.c.h.b16 %v144
  %v166 = vunpack.c.l.b16 %v145
  %v167 = vunpack.c.h.b16 %v145
  %v168 = vunpack.c.l.b16 %v146
  %v169 = vunpack.c.h.b16 %v146
  %v170 = vunpack.c.l.b16 %v147
  %v171 = vunpack.c.h.b16 %v147
  %v172 = vpack.c.b16 %v156, %v156
  %v173 = vpack.c.b16 %v157, %v157
  %v174 = vpack.c.b16 %v158, %v158
  %v175 = vpack.c.b16 %v159, %v159
  %v176 = vpack.c.b16 %v160, %v160
  %v177 = vpack.c.b16 %v161, %v161
  %v178 = vpack.c.b16 %v162, %v162
  %v179 = vpack.c.b16 %v163, %v163
  %v180 = vpack.c.b16 %v164, %v164
  %v181 = vpack.c.b16 %v165, %v165
  %v182 = vpack.c.b16 %v166, %v166
  %v183 = vpack.c.b16 %v167, %v167
  %v184 = vpack.c.b16 %v168, %v168
  %v185 = vpack.c.b16 %v169, %v169
  %v186 = vpack.c.b16 %v170, %v170
  %v187 = vpack.c.b16 %v171, %v171
  %204 = vst [vmem:[%s3] sm:$0xf] %v172
  %205 = vst [vmem:[%s3 + $0x4] sm:$0xf] %v173
  %206 = vst [vmem:[%s3 + $0x8] sm:$0xf] %v174
  %207 = vst [vmem:[%s3 + $0xc] sm:$0xf] %v175
  %208 = vst [vmem:[%s3 + $0x10] sm:$0xf] %v176
  %209 = vst [vmem:[%s3 + $0x14] sm:$0xf] %v177
  %210 = vst [vmem:[%s3 + $0x18] sm:$0xf] %v178
  %211 = vst [vmem:[%s3 + $0x1c] sm:$0xf] %v179
  %212 = vst [vmem:[%s3 + $0x20] sm:$0xf] %v180
  %213 = vst [vmem:[%s3 + $0x24] sm:$0xf] %v181
  %214 = vst [vmem:[%s3 + $0x28] sm:$0xf] %v182
  %215 = vst [vmem:[%s3 + $0x2c] sm:$0xf] %v183
  %216 = vst [vmem:[%s3 + $0x30] sm:$0xf] %v184
  %217 = vst [vmem:[%s3 + $0x34] sm:$0xf] %v185
  %218 = vst [vmem:[%s3 + $0x38] sm:$0xf] %v186
  %219 = vst [vmem:[%s3 + $0x3c] sm:$0xf] %v187
  // Predicated region
  $region14: #{discriminator_forward.11} parent=0 // pred_check
    _
  $region15: #{discriminator_forward.11} parent=0 // pred_check_branch
    %221 = sbr.rel (0) target = $region17
  $region16: #{discriminator_forward.11} parent=0 // pred_region
    _
  $region17: #{discriminator_forward.11} parent=0 // pred_fallthru
    _
  // Predicated region
  $region18: #{discriminator_forward.11} parent=0 // pred_check
    _
  $region19: #{discriminator_forward.11} parent=0 // pred_check_branch
    %223 = sbr.rel (0) target = $region21
  $region20: #{discriminator_forward.11} parent=0 // pred_region
    _
  $region21: #{discriminator_forward.11} parent=0 // pred_fallthru
    _

// kernel: discriminator_forward.10
$region0: #{discriminator_forward.10}
  #allocation0 [shape = 'u32[]', space=smem, size = 0x4, offset = 0x4, fixed_abs, tag = 'smem constant byte address 0x4 - core index']
  #allocation1 [shape = 'u32[144,128]{1,0:T(1,128)}', space=vmem, size = 0x12000, scoped, tag = 'internal scratch']
  %s0 = inlined_call_operand.vmem [shape: bf16[128,256], index: 0, kind: input, shape index: {}]
  %s1 = inlined_call_operand.vmem [shape: bf16[256,128], index: 1, kind: input, shape index: {}]
  %s2 = inlined_call_operand.vmem [shape: bf16[128,128], index: 2, kind: output, shape index: {0}]
  %s3 = inlined_call_operand.vmem [shape: f32[1,128], index: 3, kind: output, shape index: {1}]
  %s4 = inlined_call_operand.vmem [shape: f32[1,128], index: 4, kind: output, shape index: {2}]
  %5 = xla_tuple %s2, %s3, %s4
  %s6 = sld [smem:[#allocation0]]
  $region38: #{discriminator_forward.10} parent=0
    _
  %s8 = ssub.s32 1, %s6
  %s9 = scalar_select 0, %s8, %s6
  // Predicated region
  $region2: #{discriminator_forward.10} parent=0 // pred_check
    _
  $region3: #{discriminator_forward.10} parent=0 // pred_check_branch
    %11 = sbr.rel (0) target = $region5
  $region4: #{discriminator_forward.10} parent=0 // pred_region
    _
  $region5: #{discriminator_forward.10} parent=0 // pred_fallthru
    _
  // Predicated region
  $region6: #{discriminator_forward.10} parent=0 // pred_check
    _
  $region7: #{discriminator_forward.10} parent=0 // pred_check_branch
    %13 = sbr.rel (0) target = $region9
  $region8: #{discriminator_forward.10} parent=0 // pred_region
    _
  $region9: #{discriminator_forward.10} parent=0 // pred_fallthru
    _
  %v15 = vld [vmem:[%s0] sm:$0xff]
  %v16 = vld [vmem:[%s0 + $0x8] sm:$0xff]
  %v17 = vld [vmem:[%s0 + $0x10] sm:$0xff]
  %v18 = vld [vmem:[%s0 + $0x18] sm:$0xff]
  %v19 = vld [vmem:[%s0 + $0x20] sm:$0xff]
  %v20 = vld [vmem:[%s0 + $0x28] sm:$0xff]
  %v21 = vld [vmem:[%s0 + $0x30] sm:$0xff]
  %v22 = vld [vmem:[%s0 + $0x38] sm:$0xff]
  %v23 = vld [vmem:[%s0 + $0x40] sm:$0xff]
  %v24 = vld [vmem:[%s0 + $0x48] sm:$0xff]
  %v25 = vld [vmem:[%s0 + $0x50] sm:$0xff]
  %v26 = vld [vmem:[%s0 + $0x58] sm:$0xff]
  %v27 = vld [vmem:[%s0 + $0x60] sm:$0xff]
  %v28 = vld [vmem:[%s0 + $0x68] sm:$0xff]
  %v29 = vld [vmem:[%s0 + $0x70] sm:$0xff]
  %v30 = vld [vmem:[%s0 + $0x78] sm:$0xff]
  %v31 = vld [vmem:[%s1] sm:$0xf]
  %v32 = vld [vmem:[%s1 + $0x4] sm:$0xf]
  %v33 = vld [vmem:[%s1 + $0x8] sm:$0xf]
  %v34 = vld [vmem:[%s1 + $0xc] sm:$0xf]
  %v35 = vld [vmem:[%s1 + $0x10] sm:$0xf]
  %v36 = vld [vmem:[%s1 + $0x14] sm:$0xf]
  %v37 = vld [vmem:[%s1 + $0x18] sm:$0xf]
  %v38 = vld [vmem:[%s1 + $0x1c] sm:$0xf]
  %v39 = vld [vmem:[%s1 + $0x20] sm:$0xf]
  %v40 = vld [vmem:[%s1 + $0x24] sm:$0xf]
  %v41 = vld [vmem:[%s1 + $0x28] sm:$0xf]
  %v42 = vld [vmem:[%s1 + $0x2c] sm:$0xf]
  %v43 = vld [vmem:[%s1 + $0x30] sm:$0xf]
  %v44 = vld [vmem:[%s1 + $0x34] sm:$0xf]
  %v45 = vld [vmem:[%s1 + $0x38] sm:$0xf]
  %v46 = vld [vmem:[%s1 + $0x3c] sm:$0xf]
  %v47 = vld [vmem:[%s1 + $0x40] sm:$0xf]
  %v48 = vld [vmem:[%s1 + $0x44] sm:$0xf]
  %v49 = vld [vmem:[%s1 + $0x48] sm:$0xf]
  %v50 = vld [vmem:[%s1 + $0x4c] sm:$0xf]
  %v51 = vld [vmem:[%s1 + $0x50] sm:$0xf]
  %v52 = vld [vmem:[%s1 + $0x54] sm:$0xf]
  %v53 = vld [vmem:[%s1 + $0x58] sm:$0xf]
  %v54 = vld [vmem:[%s1 + $0x5c] sm:$0xf]
  %v55 = vld [vmem:[%s1 + $0x60] sm:$0xf]
  %v56 = vld [vmem:[%s1 + $0x64] sm:$0xf]
  %v57 = vld [vmem:[%s1 + $0x68] sm:$0xf]
  %v58 = vld [vmem:[%s1 + $0x6c] sm:$0xf]
  %v59 = vld [vmem:[%s1 + $0x70] sm:$0xf]
  %v60 = vld [vmem:[%s1 + $0x74] sm:$0xf]
  %v61 = vld [vmem:[%s1 + $0x78] sm:$0xf]
  %v62 = vld [vmem:[%s1 + $0x7c] sm:$0xf]
  %v79 = vunpack.c.l.b16 %v15
  %v80 = vunpack.c.h.b16 %v15
  %v81 = vunpack.c.l.b16 %v16
  %v82 = vunpack.c.h.b16 %v16
  %v83 = vunpack.c.l.b16 %v17
  %v84 = vunpack.c.h.b16 %v17
  %v85 = vunpack.c.l.b16 %v18
  %v86 = vunpack.c.h.b16 %v18
  %v87 = vunpack.c.l.b16 %v19
  %v88 = vunpack.c.h.b16 %v19
  %v89 = vunpack.c.l.b16 %v20
  %v90 = vunpack.c.h.b16 %v20
  %v91 = vunpack.c.l.b16 %v21
  %v92 = vunpack.c.h.b16 %v21
  %v93 = vunpack.c.l.b16 %v22
  %v94 = vunpack.c.h.b16 %v22
  %v95 = vunpack.c.l.b16 %v23
  %v96 = vunpack.c.h.b16 %v23
  %v97 = vunpack.c.l.b16 %v24
  %v98 = vunpack.c.h.b16 %v24
  %v99 = vunpack.c.l.b16 %v25
  %v100 = vunpack.c.h.b16 %v25
  %v101 = vunpack.c.l.b16 %v26
  %v102 = vunpack.c.h.b16 %v26
  %v103 = vunpack.c.l.b16 %v27
  %v104 = vunpack.c.h.b16 %v27
  %v105 = vunpack.c.l.b16 %v28
  %v106 = vunpack.c.h.b16 %v28
  %v107 = vunpack.c.l.b16 %v29
  %v108 = vunpack.c.h.b16 %v29
  %v109 = vunpack.c.l.b16 %v30
  %v110 = vunpack.c.h.b16 %v30
  %v111 = vpack.c.b16 %v81, %v79
  %v112 = vpack.c.b16 %v82, %v80
  %v113 = vpack.c.b16 %v85, %v83
  %v114 = vpack.c.b16 %v86, %v84
  %v115 = vpack.c.b16 %v89, %v87
  %v116 = vpack.c.b16 %v90, %v88
  %v117 = vpack.c.b16 %v93, %v91
  %v118 = vpack.c.b16 %v94, %v92
  %v119 = vpack.c.b16 %v97, %v95
  %v120 = vpack.c.b16 %v98, %v96
  %v121 = vpack.c.b16 %v101, %v99
  %v122 = vpack.c.b16 %v102, %v100
  %v123 = vpack.c.b16 %v105, %v103
  %v124 = vpack.c.b16 %v106, %v104
  %v125 = vpack.c.b16 %v109, %v107
  %v126 = vpack.c.b16 %v110, %v108
  %v175 = vunpack.c.l.b16 %v31
  %v176 = vunpack.c.l.b16 %v32
  %v177 = vunpack.c.l.b16 %v33
  %v178 = vunpack.c.l.b16 %v34
  %v179 = vunpack.c.l.b16 %v35
  %v180 = vunpack.c.l.b16 %v36
  %v181 = vunpack.c.l.b16 %v37
  %v182 = vunpack.c.l.b16 %v38
  %v183 = vunpack.c.l.b16 %v39
  %v184 = vunpack.c.l.b16 %v40
  %v185 = vunpack.c.l.b16 %v41
  %v186 = vunpack.c.l.b16 %v42
  %v187 = vunpack.c.l.b16 %v43
  %v188 = vunpack.c.l.b16 %v44
  %v189 = vunpack.c.l.b16 %v45
  %v190 = vunpack.c.l.b16 %v46
  %v191 = vunpack.c.l.b16 %v47
  %v192 = vunpack.c.l.b16 %v48
  %v193 = vunpack.c.l.b16 %v49
  %v194 = vunpack.c.l.b16 %v50
  %v195 = vunpack.c.l.b16 %v51
  %v196 = vunpack.c.l.b16 %v52
  %v197 = vunpack.c.l.b16 %v53
  %v198 = vunpack.c.l.b16 %v54
  %v199 = vunpack.c.l.b16 %v55
  %v200 = vunpack.c.l.b16 %v56
  %v201 = vunpack.c.l.b16 %v57
  %v202 = vunpack.c.l.b16 %v58
  %v203 = vunpack.c.l.b16 %v59
  %v204 = vunpack.c.l.b16 %v60
  %v205 = vunpack.c.l.b16 %v61
  %v206 = vunpack.c.l.b16 %v62
  %v207 = vpack.c.b16 %v176, %v175
  %v208 = vpack.c.b16 %v178, %v177
  %v209 = vpack.c.b16 %v180, %v179
  %v210 = vpack.c.b16 %v182, %v181
  %v211 = vpack.c.b16 %v184, %v183
  %v212 = vpack.c.b16 %v186, %v185
  %v213 = vpack.c.b16 %v188, %v187
  %v214 = vpack.c.b16 %v190, %v189
  %v215 = vpack.c.b16 %v192, %v191
  %v216 = vpack.c.b16 %v194, %v193
  %v217 = vpack.c.b16 %v196, %v195
  %v218 = vpack.c.b16 %v198, %v197
  %v219 = vpack.c.b16 %v200, %v199
  %v220 = vpack.c.b16 %v202, %v201
  %v221 = vpack.c.b16 %v204, %v203
  %v222 = vpack.c.b16 %v206, %v205
  %239 = vmatprep.subr.bf16.mxu0 0
  %240 = vmatpush1.bf16.msra.mxu0 %v207
  %241 = vmatprep.subr.bf16.mxu0 0
  %242 = vmatpush1.bf16.msra.mxu0 %v208
  %243 = vmatprep.subr.bf16.mxu0 0
  %244 = vmatpush1.bf16.msra.mxu0 %v209
  %245 = vmatprep.subr.bf16.mxu0 0
  %246 = vmatpush1.bf16.msra.mxu0 %v210
  %247 = vmatprep.subr.bf16.mxu0 0
  %248 = vmatpush1.bf16.msra.mxu0 %v211
  %249 = vmatprep.subr.bf16.mxu0 0
  %250 = vmatpush1.bf16.msra.mxu0 %v212
  %251 = vmatprep.subr.bf16.mxu0 0
  %252 = vmatpush1.bf16.msra.mxu0 %v213
  %253 = vmatprep.subr.bf16.mxu0 0
  %254 = vmatpush1.bf16.msra.mxu0 %v214
  %255 = vmatprep.subr.bf16.mxu0 0
  %256 = vmatpush1.bf16.msra.mxu0 %v215
  %257 = vmatprep.subr.bf16.mxu0 0
  %258 = vmatpush1.bf16.msra.mxu0 %v216
  %259 = vmatprep.subr.bf16.mxu0 0
  %260 = vmatpush1.bf16.msra.mxu0 %v217
  %261 = vmatprep.subr.bf16.mxu0 0
  %262 = vmatpush1.bf16.msra.mxu0 %v218
  %263 = vmatprep.subr.bf16.mxu0 0
  %264 = vmatpush1.bf16.msra.mxu0 %v219
  %265 = vmatprep.subr.bf16.mxu0 0
  %266 = vmatpush1.bf16.msra.mxu0 %v220
  %267 = vmatprep.subr.bf16.mxu0 0
  %268 = vmatpush1.bf16.msra.mxu0 %v221
  %269 = vmatprep.subr.bf16.mxu0 0
  %270 = vmatpush1.bf16.msra.mxu0 %v222
  %271 = vmatprep.mubr.bf16.mxu0 %v112
  %272 = vmatmul.mubr.bf16.gmra.mrb[0].mxu0 %v111
  %v273 = vpop.f32.mrb[0].mxu0
  %v274 = vadd.f32 0.0, %v273
  %v275 = vpop.f32.mrb[0].mxu0
  %v276 = vpop.f32.mrb[0].mxu0
  %v277 = vadd.f32 0.0, %v276
  %v278 = vpop.f32.mrb[0].mxu0
  %279 = vmatprep.mubr.bf16.mxu0 %v114
  %280 = vmatmul.mubr.bf16.gmra.mrb[0].mxu0 %v113
  %v281 = vpop.f32.mrb[0].mxu0
  %v282 = vadd.f32 0.0, %v281
  %v283 = vpop.f32.mrb[0].mxu0
  %v284 = vpop.f32.mrb[0].mxu0
  %v285 = vadd.f32 0.0, %v284
  %v286 = vpop.f32.mrb[0].mxu0
  %287 = vmatprep.mubr.bf16.mxu0 %v116
  %288 = vmatmul.mubr.bf16.gmra.mrb[0].mxu0 %v115
  %v289 = vpop.f32.mrb[0].mxu0
  %v290 = vadd.f32 0.0, %v289
  %v291 = vpop.f32.mrb[0].mxu0
  %v292 = vpop.f32.mrb[0].mxu0
  %v293 = vadd.f32 0.0, %v292
  %v294 = vpop.f32.mrb[0].mxu0
  %295 = vmatprep.mubr.bf16.mxu0 %v118
  %296 = vmatmul.mubr.bf16.gmra.mrb[0].mxu0 %v117
  %v297 = vpop.f32.mrb[0].mxu0
  %v298 = vadd.f32 0.0, %v297
  %v299 = vpop.f32.mrb[0].mxu0
  %v300 = vpop.f32.mrb[0].mxu0
  %v301 = vadd.f32 0.0, %v300
  %v302 = vpop.f32.mrb[0].mxu0
  %303 = vmatprep.mubr.bf16.mxu0 %v120
  %304 = vmatmul.mubr.bf16.gmra.mrb[0].mxu0 %v119
  %v305 = vpop.f32.mrb[0].mxu0
  %v306 = vadd.f32 0.0, %v305
  %v307 = vpop.f32.mrb[0].mxu0
  %v308 = vpop.f32.mrb[0].mxu0
  %v309 = vadd.f32 0.0, %v308
  %v310 = vpop.f32.mrb[0].mxu0
  %311 = vmatprep.mubr.bf16.mxu0 %v122
  %312 = vmatmul.mubr.bf16.gmra.mrb[0].mxu0 %v121
  %v313 = vpop.f32.mrb[0].mxu0
  %v314 = vadd.f32 0.0, %v313
  %v315 = vpop.f32.mrb[0].mxu0
  %v316 = vpop.f32.mrb[0].mxu0
  %v317 = vadd.f32 0.0, %v316
  %v318 = vpop.f32.mrb[0].mxu0
  %319 = vmatprep.mubr.bf16.mxu0 %v124
  %320 = vmatmul.mubr.bf16.gmra.mrb[0].mxu0 %v123
  %v321 = vpop.f32.mrb[0].mxu0
  %v322 = vadd.f32 0.0, %v321
  %v323 = vpop.f32.mrb[0].mxu0
  %v324 = vpop.f32.mrb[0].mxu0
  %v325 = vadd.f32 0.0, %v324
  %v326 = vpop.f32.mrb[0].mxu0
  %327 = vmatprep.mubr.bf16.mxu0 %v126
  %328 = vmatmul.mubr.bf16.gmra.mrb[0].mxu0 %v125
  %v329 = vpop.f32.mrb[0].mxu0
  %v330 = vadd.f32 0.0, %v329
  %v331 = vpop.f32.mrb[0].mxu0
  %v332 = vpop.f32.mrb[0].mxu0
  %v333 = vadd.f32 0.0, %v332
  %v334 = vpop.f32.mrb[0].mxu0
  %335 = vdwg.mxu0
  %p336 = scmp.eq.s32.totalorder 0, 0
  // Predicated region
  $region10: #{discriminator_forward.10} parent=0 // pred_check
    %p337 = pneg %p336
  $region11: #{discriminator_forward.10} parent=0 // pred_check_branch
    %339 = sbr.rel (%p337) target = $region13
  $region12: #{discriminator_forward.10} parent=0 // pred_region
    %340 = vst [vmem:[%s3] sm:$0x1] 0.0
    %341 = vst [vmem:[%s4] sm:$0x1] 0.0
  $region13: #{discriminator_forward.10} parent=0 // pred_fallthru
    _
  %v342 = vld [vmem:[%s3] sm:$0x1]
  %v343 = vadd.f32 %v274, %v277
  %v344 = vadd.f32 %v343, %v282
  %v345 = vadd.f32 %v344, %v285
  %v346 = vadd.f32 %v345, %v290
  %v347 = vadd.f32 %v346, %v293
  %v348 = vadd.f32 %v347, %v298
  %v349 = vadd.f32 %v348, %v301
  %v350 = vadd.f32 %v349, %v306
  %v351 = vadd.f32 %v350, %v309
  %v352 = vadd.f32 %v351, %v314
  %v353 = vadd.f32 %v352, %v317
  %v354 = vadd.f32 %v353, %v322
  %v355 = vadd.f32 %v354, %v325
  %v356 = vadd.f32 %v355, %v330
  %v357 = vadd.f32 %v356, %v333
  %v358 = vrot.slane %v357, 4
  %v359 = vadd.f32 %v357, %v358
  %v360 = vrot.slane %v359, 2
  %v361 = vadd.f32 %v359, %v360
  %v362 = vrot.slane %v361, 1
  %v363 = vadd.f32 %v361, %v362
  %v364 = vadd.f32 %v342, %v363
  %365 = vst [vmem:[%s3] sm:$0x1] %v364
  %v366 = vld [vmem:[%s4] sm:$0x1]
  %v367 = vmul.f32 %v274, %v274
  %v368 = vmul.f32 %v277, %v277
  %v369 = vmul.f32 %v282, %v282
  %v370 = vmul.f32 %v285, %v285
  %v371 = vmul.f32 %v290, %v290
  %v372 = vmul.f32 %v293, %v293
  %v373 = vmul.f32 %v298, %v298
  %v374 = vmul.f32 %v301, %v301
  %v375 = vmul.f32 %v306, %v306
  %v376 = vmul.f32 %v309, %v309
  %v377 = vmul.f32 %v314, %v314
  %v378 = vmul.f32 %v317, %v317
  %v379 = vmul.f32 %v322, %v322
  %v380 = vmul.f32 %v325, %v325
  %v381 = vmul.f32 %v330, %v330
  %v382 = vmul.f32 %v333, %v333
  %v383 = vadd.f32 %v367, %v368
  %v384 = vadd.f32 %v383, %v369
  %v385 = vadd.f32 %v384, %v370
  %v386 = vadd.f32 %v385, %v371
  %v387 = vadd.f32 %v386, %v372
  %v388 = vadd.f32 %v387, %v373
  %v389 = vadd.f32 %v388, %v374
  %v390 = vadd.f32 %v389, %v375
  %v391 = vadd.f32 %v390, %v376
  %v392 = vadd.f32 %v391, %v377
  %v393 = vadd.f32 %v392, %v378
  %v394 = vadd.f32 %v393, %v379
  %v395 = vadd.f32 %v394, %v380
  %v396 = vadd.f32 %v395, %v381
  %v397 = vadd.f32 %v396, %v382
  %v398 = vrot.slane %v397, 4
  %v399 = vadd.f32 %v397, %v398
  %v400 = vrot.slane %v399, 2
  %v401 = vadd.f32 %v399, %v400
  %v402 = vrot.slane %v401, 1
  %v403 = vadd.f32 %v401, %v402
  %v404 = vadd.f32 %v366, %v403
  %405 = vst [vmem:[%s4] sm:$0x1] %v404
  %v406 = vpack.c.bf16 %v277, %v274
  %v407 = vpack.c.bf16 %v285, %v282
  %v408 = vpack.c.bf16 %v293, %v290
  %v409 = vpack.c.bf16 %v301, %v298
  %v410 = vpack.c.bf16 %v309, %v306
  %v411 = vpack.c.bf16 %v317, %v314
  %v412 = vpack.c.bf16 %v325, %v322
  %v413 = vpack.c.bf16 %v333, %v330
  %v422 = vunpack.c.l.b16 %v406
  %v423 = vunpack.c.h.b16 %v406
  %v424 = vunpack.c.l.b16 %v407
  %v425 = vunpack.c.h.b16 %v407
  %v426 = vunpack.c.l.b16 %v408
  %v427 = vunpack.c.h.b16 %v408
  %v428 = vunpack.c.l.b16 %v409
  %v429 = vunpack.c.h.b16 %v409
  %v430 = vunpack.c.l.b16 %v410
  %v431 = vunpack.c.h.b16 %v410
  %v432 = vunpack.c.l.b16 %v411
  %v433 = vunpack.c.h.b16 %v411
  %v434 = vunpack.c.l.b16 %v412
  %v435 = vunpack.c.h.b16 %v412
  %v436 = vunpack.c.l.b16 %v413
  %v437 = vunpack.c.h.b16 %v413
  %v438 = vpack.c.b16 %v422, %v422
  %v439 = vpack.c.b16 %v423, %v423
  %v440 = vpack.c.b16 %v424, %v424
  %v441 = vpack.c.b16 %v425, %v425
  %v442 = vpack.c.b16 %v426, %v426
  %v443 = vpack.c.b16 %v427, %v427
  %v444 = vpack.c.b16 %v428, %v428
  %v445 = vpack.c.b16 %v429, %v429
  %v446 = vpack.c.b16 %v430, %v430
  %v447 = vpack.c.b16 %v431, %v431
  %v448 = vpack.c.b16 %v432, %v432
  %v449 = vpack.c.b16 %v433, %v433
  %v450 = vpack.c.b16 %v434, %v434
  %v451 = vpack.c.b16 %v435, %v435
  %v452 = vpack.c.b16 %v436, %v436
  %v453 = vpack.c.b16 %v437, %v437
  %470 = vst [vmem:[%s2] sm:$0xf] %v438
  %471 = vst [vmem:[%s2 + $0x4] sm:$0xf] %v439
  %472 = vst [vmem:[%s2 + $0x8] sm:$0xf] %v440
  %473 = vst [vmem:[%s2 + $0xc] sm:$0xf] %v441
  %474 = vst [vmem:[%s2 + $0x10] sm:$0xf] %v442
  %475 = vst [vmem:[%s2 + $0x14] sm:$0xf] %v443
  %476 = vst [vmem:[%s2 + $0x18] sm:$0xf] %v444
  %477 = vst [vmem:[%s2 + $0x1c] sm:$0xf] %v445
  %478 = vst [vmem:[%s2 + $0x20] sm:$0xf] %v446
  %479 = vst [vmem:[%s2 + $0x24] sm:$0xf] %v447
  %480 = vst [vmem:[%s2 + $0x28] sm:$0xf] %v448
  %481 = vst [vmem:[%s2 + $0x2c] sm:$0xf] %v449
  %482 = vst [vmem:[%s2 + $0x30] sm:$0xf] %v450
  %483 = vst [vmem:[%s2 + $0x34] sm:$0xf] %v451
  %484 = vst [vmem:[%s2 + $0x38] sm:$0xf] %v452
  %485 = vst [vmem:[%s2 + $0x3c] sm:$0xf] %v453
  // Predicated region
  $region14: #{discriminator_forward.10} parent=0 // pred_check
    _
  $region15: #{discriminator_forward.10} parent=0 // pred_check_branch
    %487 = sbr.rel (0) target = $region17
  $region16: #{discriminator_forward.10} parent=0 // pred_region
    _
  $region17: #{discriminator_forward.10} parent=0 // pred_fallthru
    _
  // Predicated region
  $region18: #{discriminator_forward.10} parent=0 // pred_check
    _
  $region19: #{discriminator_forward.10} parent=0 // pred_check_branch
    %489 = sbr.rel (0) target = $region21
  $region20: #{discriminator_forward.10} parent=0 // pred_region
    _
  $region21: #{discriminator_forward.10} parent=0 // pred_fallthru
    _
  // Predicated region
  $region22: #{discriminator_forward.10} parent=0 // pred_check
    _
  $region23: #{discriminator_forward.10} parent=0 // pred_check_branch
    %491 = sbr.rel (0) target = $region25
  $region24: #{discriminator_forward.10} parent=0 // pred_region
    _
  $region25: #{discriminator_forward.10} parent=0 // pred_fallthru
    _
  // Predicated region
  $region26: #{discriminator_forward.10} parent=0 // pred_check
    _
  $region27: #{discriminator_forward.10} parent=0 // pred_check_branch
    %493 = sbr.rel (0) target = $region29
  $region28: #{discriminator_forward.10} parent=0 // pred_region
    _
  $region29: #{discriminator_forward.10} parent=0 // pred_fallthru
    _
  // Predicated region
  $region30: #{discriminator_forward.10} parent=0 // pred_check
    _
  $region31: #{discriminator_forward.10} parent=0 // pred_check_branch
    %495 = sbr.rel (0) target = $region33
  $region32: #{discriminator_forward.10} parent=0 // pred_region
    _
  $region33: #{discriminator_forward.10} parent=0 // pred_fallthru
    _
  // Predicated region
  $region34: #{discriminator_forward.10} parent=0 // pred_check
    _
  $region35: #{discriminator_forward.10} parent=0 // pred_check_branch
    %497 = sbr.rel (0) target = $region37
  $region36: #{discriminator_forward.10} parent=0 // pred_region
    _
  $region37: #{discriminator_forward.10} parent=0 // pred_fallthru
    _

// kernel: discriminator_forward.13
$region0: #{discriminator_forward.13}
  #allocation0 [shape = 'u32[]', space=smem, size = 0x4, offset = 0x4, fixed_abs, tag = 'smem constant byte address 0x4 - core index']
  #allocation1 [shape = 'u32[144,128]{1,0:T(1,128)}', space=vmem, size = 0x12000, scoped, tag = 'internal scratch']
  %s0 = inlined_call_operand.vmem [shape: bf16[32,128], index: 0, kind: input, shape index: {}]
  %s1 = inlined_call_operand.vmem [shape: f32[1,128], index: 1, kind: input, shape index: {}]
  %s2 = inlined_call_operand.vmem [shape: f32[1,128], index: 2, kind: input, shape index: {}]
  %s3 = inlined_call_operand.vmem [shape: bf16[32,128], index: 3, kind: output, shape index: {}]
  %s4 = sld [smem:[#allocation0]]
  $region22: #{discriminator_forward.13} parent=0
    _
  %s6 = ssub.s32 1, %s4
  %s7 = scalar_select 0, %s6, %s4
  // Predicated region
  $region2: #{discriminator_forward.13} parent=0 // pred_check
    _
  $region3: #{discriminator_forward.13} parent=0 // pred_check_branch
    %9 = sbr.rel (0) target = $region5
  $region4: #{discriminator_forward.13} parent=0 // pred_region
    _
  $region5: #{discriminator_forward.13} parent=0 // pred_fallthru
    _
  // Predicated region
  $region6: #{discriminator_forward.13} parent=0 // pred_check
    _
  $region7: #{discriminator_forward.13} parent=0 // pred_check_branch
    %11 = sbr.rel (0) target = $region9
  $region8: #{discriminator_forward.13} parent=0 // pred_region
    _
  $region9: #{discriminator_forward.13} parent=0 // pred_fallthru
    _
  // Predicated region
  $region10: #{discriminator_forward.13} parent=0 // pred_check
    _
  $region11: #{discriminator_forward.13} parent=0 // pred_check_branch
    %13 = sbr.rel (0) target = $region13
  $region12: #{discriminator_forward.13} parent=0 // pred_region
    _
  $region13: #{discriminator_forward.13} parent=0 // pred_fallthru
    _
  %v14 = vld [vmem:[%s0] sm:$0xf]
  %v15 = vld [vmem:[%s0 + $0x4] sm:$0xf]
  %v16 = vld [vmem:[%s0 + $0x8] sm:$0xf]
  %v17 = vld [vmem:[%s0 + $0xc] sm:$0xf]
  %v18 = vunpack.c.l.bf16 %v14
  %v19 = vunpack.c.l.bf16 %v15
  %v20 = vunpack.c.l.bf16 %v16
  %v21 = vunpack.c.l.bf16 %v17
  %v22 = vld [vmem:[%s1] sm:$0x1]
  %v24 = vlaneseq
  %v25 = vshrl.u32 %v24, 7
  %v26 = vsub.s32 0, %v25
  %v27 = vrot.slane %v22, %v26
  %v29 = vmul.f32 %v18, %v27
  %v30 = vmul.f32 %v19, %v27
  %v31 = vmul.f32 %v20, %v27
  %v32 = vmul.f32 %v21, %v27
  %v33 = vld [vmem:[%s2] sm:$0x1]
  %v35 = vlaneseq
  %v36 = vshrl.u32 %v35, 7
  %v37 = vsub.s32 0, %v36
  %v38 = vrot.slane %v33, %v37
  %v40 = vadd.f32 %v29, %v38
  %v41 = vadd.f32 %v30, %v38
  %v42 = vadd.f32 %v31, %v38
  %v43 = vadd.f32 %v32, %v38
  %vm44 = vcmp.gt.f32.partialorder %v40, 0.0
  %vm45 = vcmp.gt.f32.partialorder %v41, 0.0
  %vm46 = vcmp.gt.f32.partialorder %v42, 0.0
  %vm47 = vcmp.gt.f32.partialorder %v43, 0.0
  %v48 = vmul.f32 %v40, 0.2
  %v49 = vmul.f32 %v41, 0.2
  %v50 = vmul.f32 %v42, 0.2
  %v51 = vmul.f32 %v43, 0.2
  %v52 = vsel %vm44, %v40, %v48
  %v53 = vsel %vm45, %v41, %v49
  %v54 = vsel %vm46, %v42, %v50
  %v55 = vsel %vm47, %v43, %v51
  %v56 = vpack.c.bf16 %v53, %v52
  %v57 = vpack.c.bf16 %v55, %v54
  %v60 = vunpack.c.l.b16 %v56
  %v61 = vunpack.c.h.b16 %v56
  %v62 = vunpack.c.l.b16 %v57
  %v63 = vunpack.c.h.b16 %v57
  %v64 = vpack.c.b16 %v60, %v60
  %v65 = vpack.c.b16 %v61, %v61
  %v66 = vpack.c.b16 %v62, %v62
  %v67 = vpack.c.b16 %v63, %v63
  %72 = vst [vmem:[%s3] sm:$0xf] %v64
  %73 = vst [vmem:[%s3 + $0x4] sm:$0xf] %v65
  %74 = vst [vmem:[%s3 + $0x8] sm:$0xf] %v66
  %75 = vst [vmem:[%s3 + $0xc] sm:$0xf] %v67
  // Predicated region
  $region14: #{discriminator_forward.13} parent=0 // pred_check
    _
  $region15: #{discriminator_forward.13} parent=0 // pred_check_branch
    %77 = sbr.rel (0) target = $region17
  $region16: #{discriminator_forward.13} parent=0 // pred_region
    _
  $region17: #{discriminator_forward.13} parent=0 // pred_fallthru
    _
  // Predicated region
  $region18: #{discriminator_forward.13} parent=0 // pred_check
    _
  $region19: #{discriminator_forward.13} parent=0 // pred_check_branch
    %79 = sbr.rel (0) target = $region21
  $region20: #{discriminator_forward.13} parent=0 // pred_region
    _
  $region21: #{discriminator_forward.13} parent=0 // pred_fallthru
    _

// kernel: discriminator_forward.12
$region0: #{discriminator_forward.12}
  #allocation0 [shape = 'u32[]', space=smem, size = 0x4, offset = 0x4, fixed_abs, tag = 'smem constant byte address 0x4 - core index']
  #allocation1 [shape = 'u32[144,128]{1,0:T(1,128)}', space=vmem, size = 0x12000, scoped, tag = 'internal scratch']
  %s0 = inlined_call_operand.vmem [shape: bf16[32,512], index: 0, kind: input, shape index: {}]
  %s1 = inlined_call_operand.vmem [shape: bf16[512,128], index: 1, kind: input, shape index: {}]
  %s2 = inlined_call_operand.vmem [shape: bf16[32,128], index: 2, kind: output, shape index: {0}]
  %s3 = inlined_call_operand.vmem [shape: f32[1,128], index: 3, kind: output, shape index: {1}]
  %s4 = inlined_call_operand.vmem [shape: f32[1,128], index: 4, kind: output, shape index: {2}]
  %5 = xla_tuple %s2, %s3, %s4
  %s6 = sld [smem:[#allocation0]]
  $region38: #{discriminator_forward.12} parent=0
    _
  %s8 = ssub.s32 1, %s6
  %s9 = scalar_select 0, %s8, %s6
  // Predicated region
  $region2: #{discriminator_forward.12} parent=0 // pred_check
    _
  $region3: #{discriminator_forward.12} parent=0 // pred_check_branch
    %11 = sbr.rel (0) target = $region5
  $region4: #{discriminator_forward.12} parent=0 // pred_region
    _
  $region5: #{discriminator_forward.12} parent=0 // pred_fallthru
    _
  // Predicated region
  $region6: #{discriminator_forward.12} parent=0 // pred_check
    _
  $region7: #{discriminator_forward.12} parent=0 // pred_check_branch
    %13 = sbr.rel (0) target = $region9
  $region8: #{discriminator_forward.12} parent=0 // pred_region
    _
  $region9: #{discriminator_forward.12} parent=0 // pred_fallthru
    _
  %v15 = vld [vmem:[%s0] sm:$0xff]
  %v16 = vld [vmem:[%s0 + $0x8] sm:$0xff]
  %v17 = vld [vmem:[%s0 + $0x10] sm:$0xff]
  %v18 = vld [vmem:[%s0 + $0x18] sm:$0xff]
  %v19 = vld [vmem:[%s0 + $0x20] sm:$0xff]
  %v20 = vld [vmem:[%s0 + $0x28] sm:$0xff]
  %v21 = vld [vmem:[%s0 + $0x30] sm:$0xff]
  %v22 = vld [vmem:[%s0 + $0x38] sm:$0xff]
  %v23 = vld [vmem:[%s1] sm:$0xf]
  %v24 = vld [vmem:[%s1 + $0x4] sm:$0xf]
  %v25 = vld [vmem:[%s1 + $0x8] sm:$0xf]
  %v26 = vld [vmem:[%s1 + $0xc] sm:$0xf]
  %v27 = vld [vmem:[%s1 + $0x10] sm:$0xf]
  %v28 = vld [vmem:[%s1 + $0x14] sm:$0xf]
  %v29 = vld [vmem:[%s1 + $0x18] sm:$0xf]
  %v30 = vld [vmem:[%s1 + $0x1c] sm:$0xf]
  %v31 = vld [vmem:[%s1 + $0x20] sm:$0xf]
  %v32 = vld [vmem:[%s1 + $0x24] sm:$0xf]
  %v33 = vld [vmem:[%s1 + $0x28] sm:$0xf]
  %v34 = vld [vmem:[%s1 + $0x2c] sm:$0xf]
  %v35 = vld [vmem:[%s1 + $0x30] sm:$0xf]
  %v36 = vld [vmem:[%s1 + $0x34] sm:$0xf]
  %v37 = vld [vmem:[%s1 + $0x38] sm:$0xf]
  %v38 = vld [vmem:[%s1 + $0x3c] sm:$0xf]
  %v39 = vld [vmem:[%s1 + $0x40] sm:$0xf]
  %v40 = vld [vmem:[%s1 + $0x44] sm:$0xf]
  %v41 = vld [vmem:[%s1 + $0x48] sm:$0xf]
  %v42 = vld [vmem:[%s1 + $0x4c] sm:$0xf]
  %v43 = vld [vmem:[%s1 + $0x50] sm:$0xf]
  %v44 = vld [vmem:[%s1 + $0x54] sm:$0xf]
  %v45 = vld [vmem:[%s1 + $0x58] sm:$0xf]
  %v46 = vld [vmem:[%s1 + $0x5c] sm:$0xf]
  %v47 = vld [vmem:[%s1 + $0x60] sm:$0xf]
  %v48 = vld [vmem:[%s1 + $0x64] sm:$0xf]
  %v49 = vld [vmem:[%s1 + $0x68] sm:$0xf]
  %v50 = vld [vmem:[%s1 + $0x6c] sm:$0xf]
  %v51 = vld [vmem:[%s1 + $0x70] sm:$0xf]
  %v52 = vld [vmem:[%s1 + $0x74] sm:$0xf]
  %v53 = vld [vmem:[%s1 + $0x78] sm:$0xf]
  %v54 = vld [vmem:[%s1 + $0x7c] sm:$0xf]
  %v55 = vld [vmem:[%s1 + $0x80] sm:$0xf]
  %v56 = vld [vmem:[%s1 + $0x84] sm:$0xf]
  %v57 = vld [vmem:[%s1 + $0x88] sm:$0xf]
  %v58 = vld [vmem:[%s1 + $0x8c] sm:$0xf]
  %v59 = vld [vmem:[%s1 + $0x90] sm:$0xf]
  %v60 = vld [vmem:[%s1 + $0x94] sm:$0xf]
  %v61 = vld [vmem:[%s1 + $0x98] sm:$0xf]
  %v62 = vld [vmem:[%s1 + $0x9c] sm:$0xf]
  %v63 = vld [vmem:[%s1 + $0xa0] sm:$0xf]
  %v64 = vld [vmem:[%s1 + $0xa4] sm:$0xf]
  %v65 = vld [vmem:[%s1 + $0xa8] sm:$0xf]
  %v66 = vld [vmem:[%s1 + $0xac] sm:$0xf]
  %v67 = vld [vmem:[%s1 + $0xb0] sm:$0xf]
  %v68 = vld [vmem:[%s1 + $0xb4] sm:$0xf]
  %v69 = vld [vmem:[%s1 + $0xb8] sm:$0xf]
  %v70 = vld [vmem:[%s1 + $0xbc] sm:$0xf]
  %v71 = vld [vmem:[%s1 + $0xc0] sm:$0xf]
  %v72 = vld [vmem:[%s1 + $0xc4] sm:$0xf]
  %v73 = vld [vmem:[%s1 + $0xc8] sm:$0xf]
  %v74 = vld [vmem:[%s1 + $0xcc] sm:$0xf]
  %v75 = vld [vmem:[%s1 + $0xd0] sm:$0xf]
  %v76 = vld [vmem:[%s1 + $0xd4] sm:$0xf]
  %v77 = vld [vmem:[%s1 + $0xd8] sm:$0xf]
  %v78 = vld [vmem:[%s1 + $0xdc] sm:$0xf]
  %v79 = vld [vmem:[%s1 + $0xe0] sm:$0xf]
  %v80 = vld [vmem:[%s1 + $0xe4] sm:$0xf]
  %v81 = vld [vmem:[%s1 + $0xe8] sm:$0xf]
  %v82 = vld [vmem:[%s1 + $0xec] sm:$0xf]
  %v83 = vld [vmem:[%s1 + $0xf0] sm:$0xf]
  %v84 = vld [vmem:[%s1 + $0xf4] sm:$0xf]
  %v85 = vld [vmem:[%s1 + $0xf8] sm:$0xf]
  %v86 = vld [vmem:[%s1 + $0xfc] sm:$0xf]
  %v95 = vunpack.c.l.b16 %v15
  %v96 = vunpack.c.h.b16 %v15
  %v97 = vunpack.c.l.b16 %v16
  %v98 = vunpack.c.h.b16 %v16
  %v99 = vunpack.c.l.b16 %v17
  %v100 = vunpack.c.h.b16 %v17
  %v101 = vunpack.c.l.b16 %v18
  %v102 = vunpack.c.h.b16 %v18
  %v103 = vunpack.c.l.b16 %v19
  %v104 = vunpack.c.h.b16 %v19
  %v105 = vunpack.c.l.b16 %v20
  %v106 = vunpack.c.h.b16 %v20
  %v107 = vunpack.c.l.b16 %v21
  %v108 = vunpack.c.h.b16 %v21
  %v109 = vunpack.c.l.b16 %v22
  %v110 = vunpack.c.h.b16 %v22
  %v111 = vpack.c.b16 %v99, %v95
  %v112 = vpack.c.b16 %v100, %v96
  %v113 = vpack.c.b16 %v101, %v97
  %v114 = vpack.c.b16 %v102, %v98
  %v115 = vpack.c.b16 %v107, %v103
  %v116 = vpack.c.b16 %v108, %v104
  %v117 = vpack.c.b16 %v109, %v105
  %v118 = vpack.c.b16 %v110, %v106
  %v191 = vunpack.c.l.b16 %v23
  %v192 = vunpack.c.l.b16 %v24
  %v193 = vunpack.c.l.b16 %v25
  %v194 = vunpack.c.l.b16 %v26
  %v195 = vunpack.c.l.b16 %v27
  %v196 = vunpack.c.l.b16 %v28
  %v197 = vunpack.c.l.b16 %v29
  %v198 = vunpack.c.l.b16 %v30
  %v199 = vunpack.c.l.b16 %v31
  %v200 = vunpack.c.l.b16 %v32
  %v201 = vunpack.c.l.b16 %v33
  %v202 = vunpack.c.l.b16 %v34
  %v203 = vunpack.c.l.b16 %v35
  %v204 = vunpack.c.l.b16 %v36
  %v205 = vunpack.c.l.b16 %v37
  %v206 = vunpack.c.l.b16 %v38
  %v207 = vunpack.c.l.b16 %v39
  %v208 = vunpack.c.l.b16 %v40
  %v209 = vunpack.c.l.b16 %v41
  %v210 = vunpack.c.l.b16 %v42
  %v211 = vunpack.c.l.b16 %v43
  %v212 = vunpack.c.l.b16 %v44
  %v213 = vunpack.c.l.b16 %v45
  %v214 = vunpack.c.l.b16 %v46
  %v215 = vunpack.c.l.b16 %v47
  %v216 = vunpack.c.l.b16 %v48
  %v217 = vunpack.c.l.b16 %v49
  %v218 = vunpack.c.l.b16 %v50
  %v219 = vunpack.c.l.b16 %v51
  %v220 = vunpack.c.l.b16 %v52
  %v221 = vunpack.c.l.b16 %v53
  %v222 = vunpack.c.l.b16 %v54
  %v223 = vunpack.c.l.b16 %v55
  %v224 = vunpack.c.l.b16 %v56
  %v225 = vunpack.c.l.b16 %v57
  %v226 = vunpack.c.l.b16 %v58
  %v227 = vunpack.c.l.b16 %v59
  %v228 = vunpack.c.l.b16 %v60
  %v229 = vunpack.c.l.b16 %v61
  %v230 = vunpack.c.l.b16 %v62
  %v231 = vunpack.c.l.b16 %v63
  %v232 = vunpack.c.l.b16 %v64
  %v233 = vunpack.c.l.b16 %v65
  %v234 = vunpack.c.l.b16 %v66
  %v235 = vunpack.c.l.b16 %v67
  %v236 = vunpack.c.l.b16 %v68
  %v237 = vunpack.c.l.b16 %v69
  %v238 = vunpack.c.l.b16 %v70
  %v239 = vunpack.c.l.b16 %v71
  %v240 = vunpack.c.l.b16 %v72
  %v241 = vunpack.c.l.b16 %v73
  %v242 = vunpack.c.l.b16 %v74
  %v243 = vunpack.c.l.b16 %v75
  %v244 = vunpack.c.l.b16 %v76
  %v245 = vunpack.c.l.b16 %v77
  %v246 = vunpack.c.l.b16 %v78
  %v247 = vunpack.c.l.b16 %v79
  %v248 = vunpack.c.l.b16 %v80
  %v249 = vunpack.c.l.b16 %v81
  %v250 = vunpack.c.l.b16 %v82
  %v251 = vunpack.c.l.b16 %v83
  %v252 = vunpack.c.l.b16 %v84
  %v253 = vunpack.c.l.b16 %v85
  %v254 = vunpack.c.l.b16 %v86
  %v255 = vpack.c.b16 %v192, %v191
  %v256 = vpack.c.b16 %v194, %v193
  %v257 = vpack.c.b16 %v196, %v195
  %v258 = vpack.c.b16 %v198, %v197
  %v259 = vpack.c.b16 %v200, %v199
  %v260 = vpack.c.b16 %v202, %v201
  %v261 = vpack.c.b16 %v204, %v203
  %v262 = vpack.c.b16 %v206, %v205
  %v263 = vpack.c.b16 %v208, %v207
  %v264 = vpack.c.b16 %v210, %v209
  %v265 = vpack.c.b16 %v212, %v211
  %v266 = vpack.c.b16 %v214, %v213
  %v267 = vpack.c.b16 %v216, %v215
  %v268 = vpack.c.b16 %v218, %v217
  %v269 = vpack.c.b16 %v220, %v219
  %v270 = vpack.c.b16 %v222, %v221
  %v271 = vpack.c.b16 %v224, %v223
  %v272 = vpack.c.b16 %v226, %v225
  %v273 = vpack.c.b16 %v228, %v227
  %v274 = vpack.c.b16 %v230, %v229
  %v275 = vpack.c.b16 %v232, %v231
  %v276 = vpack.c.b16 %v234, %v233
  %v277 = vpack.c.b16 %v236, %v235
  %v278 = vpack.c.b16 %v238, %v237
  %v279 = vpack.c.b16 %v240, %v239
  %v280 = vpack.c.b16 %v242, %v241
  %v281 = vpack.c.b16 %v244, %v243
  %v282 = vpack.c.b16 %v246, %v245
  %v283 = vpack.c.b16 %v248, %v247
  %v284 = vpack.c.b16 %v250, %v249
  %v285 = vpack.c.b16 %v252, %v251
  %v286 = vpack.c.b16 %v254, %v253
  %319 = vmatprep.subr.bf16.mxu0 0
  %320 = vmatpush1.bf16.msra.mxu0 %v255
  %321 = vmatprep.subr.bf16.mxu0 0
  %322 = vmatpush1.bf16.msra.mxu0 %v256
  %323 = vmatprep.subr.bf16.mxu0 0
  %324 = vmatpush1.bf16.msra.mxu0 %v257
  %325 = vmatprep.subr.bf16.mxu0 0
  %326 = vmatpush1.bf16.msra.mxu0 %v258
  %327 = vmatprep.subr.bf16.mxu0 0
  %328 = vmatpush1.bf16.msra.mxu0 %v259
  %329 = vmatprep.subr.bf16.mxu0 0
  %330 = vmatpush1.bf16.msra.mxu0 %v260
  %331 = vmatprep.subr.bf16.mxu0 0
  %332 = vmatpush1.bf16.msra.mxu0 %v261
  %333 = vmatprep.subr.bf16.mxu0 0
  %334 = vmatpush1.bf16.msra.mxu0 %v262
  %335 = vmatprep.subr.bf16.mxu0 0
  %336 = vmatpush1.bf16.msra.mxu0 %v263
  %337 = vmatprep.subr.bf16.mxu0 0
  %338 = vmatpush1.bf16.msra.mxu0 %v264
  %339 = vmatprep.subr.bf16.mxu0 0
  %340 = vmatpush1.bf16.msra.mxu0 %v265
  %341 = vmatprep.subr.bf16.mxu0 0
  %342 = vmatpush1.bf16.msra.mxu0 %v266
  %343 = vmatprep.subr.bf16.mxu0 0
  %344 = vmatpush1.bf16.msra.mxu0 %v267
  %345 = vmatprep.subr.bf16.mxu0 0
  %346 = vmatpush1.bf16.msra.mxu0 %v268
  %347 = vmatprep.subr.bf16.mxu0 0
  %348 = vmatpush1.bf16.msra.mxu0 %v269
  %349 = vmatprep.subr.bf16.mxu0 0
  %350 = vmatpush1.bf16.msra.mxu0 %v270
  %351 = vmatprep.mubr.bf16.mxu0 %v112
  %352 = vmatmul.mubr.bf16.gmra.mrb[0].mxu0 %v111
  %v353 = vpop.f32.mrb[0].mxu0
  %v354 = vadd.f32 0.0, %v353
  %v355 = vpop.f32.mrb[0].mxu0
  %v356 = vpop.f32.mrb[0].mxu0
  %v357 = vadd.f32 0.0, %v356
  %v358 = vpop.f32.mrb[0].mxu0
  %359 = vmatprep.mubr.bf16.mxu0 %v116
  %360 = vmatmul.mubr.bf16.gmra.mrb[0].mxu0 %v115
  %v361 = vpop.f32.mrb[0].mxu0
  %v362 = vadd.f32 0.0, %v361
  %v363 = vpop.f32.mrb[0].mxu0
  %v364 = vpop.f32.mrb[0].mxu0
  %v365 = vadd.f32 0.0, %v364
  %v366 = vpop.f32.mrb[0].mxu0
  %367 = vdwg.mxu0
  %368 = vmatprep.subr.bf16.mxu0 0
  %369 = vmatpush1.bf16.msra.mxu0 %v271
  %370 = vmatprep.subr.bf16.mxu0 0
  %371 = vmatpush1.bf16.msra.mxu0 %v272
  %372 = vmatprep.subr.bf16.mxu0 0
  %373 = vmatpush1.bf16.msra.mxu0 %v273
  %374 = vmatprep.subr.bf16.mxu0 0
  %375 = vmatpush1.bf16.msra.mxu0 %v274
  %376 = vmatprep.subr.bf16.mxu0 0
  %377 = vmatpush1.bf16.msra.mxu0 %v275
  %378 = vmatprep.subr.bf16.mxu0 0
  %379 = vmatpush1.bf16.msra.mxu0 %v276
  %380 = vmatprep.subr.bf16.mxu0 0
  %381 = vmatpush1.bf16.msra.mxu0 %v277
  %382 = vmatprep.subr.bf16.mxu0 0
  %383 = vmatpush1.bf16.msra.mxu0 %v278
  %384 = vmatprep.subr.bf16.mxu0 0
  %385 = vmatpush1.bf16.msra.mxu0 %v279
  %386 = vmatprep.subr.bf16.mxu0 0
  %387 = vmatpush1.bf16.msra.mxu0 %v280
  %388 = vmatprep.subr.bf16.mxu0 0
  %389 = vmatpush1.bf16.msra.mxu0 %v281
  %390 = vmatprep.subr.bf16.mxu0 0
  %391 = vmatpush1.bf16.msra.mxu0 %v282
  %392 = vmatprep.subr.bf16.mxu0 0
  %393 = vmatpush1.bf16.msra.mxu0 %v283
  %394 = vmatprep.subr.bf16.mxu0 0
  %395 = vmatpush1.bf16.msra.mxu0 %v284
  %396 = vmatprep.subr.bf16.mxu0 0
  %397 = vmatpush1.bf16.msra.mxu0 %v285
  %398 = vmatprep.subr.bf16.mxu0 0
  %399 = vmatpush1.bf16.msra.mxu0 %v286
  %400 = vmatprep.mubr.bf16.mxu0 %v114
  %401 = vmatmul.mubr.bf16.gmra.mrb[0].mxu0 %v113
  %v402 = vpop.f32.mrb[0].mxu0
  %v403 = vadd.f32 %v354, %v402
  %v404 = vpop.f32.mrb[0].mxu0
  %v405 = vpop.f32.mrb[0].mxu0
  %v406 = vadd.f32 %v357, %v405
  %v407 = vpop.f32.mrb[0].mxu0
  %408 = vmatprep.mubr.bf16.mxu0 %v118
  %409 = vmatmul.mubr.bf16.gmra.mrb[0].mxu0 %v117
  %v410 = vpop.f32.mrb[0].mxu0
  %v411 = vadd.f32 %v362, %v410
  %v412 = vpop.f32.mrb[0].mxu0
  %v413 = vpop.f32.mrb[0].mxu0
  %v414 = vadd.f32 %v365, %v413
  %v415 = vpop.f32.mrb[0].mxu0
  %416 = vdwg.mxu0
  %p417 = scmp.eq.s32.totalorder 0, 0
  // Predicated region
  $region10: #{discriminator_forward.12} parent=0 // pred_check
    %p418 = pneg %p417
  $region11: #{discriminator_forward.12} parent=0 // pred_check_branch
    %420 = sbr.rel (%p418) target = $region13
  $region12: #{discriminator_forward.12} parent=0 // pred_region
    %421 = vst [vmem:[%s3] sm:$0x1] 0.0
    %422 = vst [vmem:[%s4] sm:$0x1] 0.0
  $region13: #{discriminator_forward.12} parent=0 // pred_fallthru
    _
  %v423 = vld [vmem:[%s3] sm:$0x1]
  %v424 = vadd.f32 %v403, %v406
  %v425 = vadd.f32 %v424, %v411
  %v426 = vadd.f32 %v425, %v414
  %v427 = vrot.slane %v426, 4
  %v428 = vadd.f32 %v426, %v427
  %v429 = vrot.slane %v428, 2
  %v430 = vadd.f32 %v428, %v429
  %v431 = vrot.slane %v430, 1
  %v432 = vadd.f32 %v430, %v431
  %v433 = vadd.f32 %v423, %v432
  %434 = vst [vmem:[%s3] sm:$0x1] %v433
  %v435 = vld [vmem:[%s4] sm:$0x1]
  %v436 = vmul.f32 %v403, %v403
  %v437 = vmul.f32 %v406, %v406
  %v438 = vmul.f32 %v411, %v411
  %v439 = vmul.f32 %v414, %v414
  %v440 = vadd.f32 %v436, %v437
  %v441 = vadd.f32 %v440, %v438
  %v442 = vadd.f32 %v441, %v439
  %v443 = vrot.slane %v442, 4
  %v444 = vadd.f32 %v442, %v443
  %v445 = vrot.slane %v444, 2
  %v446 = vadd.f32 %v444, %v445
  %v447 = vrot.slane %v446, 1
  %v448 = vadd.f32 %v446, %v447
  %v449 = vadd.f32 %v435, %v448
  %450 = vst [vmem:[%s4] sm:$0x1] %v449
  %v451 = vpack.c.bf16 %v406, %v403
  %v452 = vpack.c.bf16 %v414, %v411
  %v455 = vunpack.c.l.b16 %v451
  %v456 = vunpack.c.h.b16 %v451
  %v457 = vunpack.c.l.b16 %v452
  %v458 = vunpack.c.h.b16 %v452
  %v459 = vpack.c.b16 %v455, %v455
  %v460 = vpack.c.b16 %v456, %v456
  %v461 = vpack.c.b16 %v457, %v457
  %v462 = vpack.c.b16 %v458, %v458
  %467 = vst [vmem:[%s2] sm:$0xf] %v459
  %468 = vst [vmem:[%s2 + $0x4] sm:$0xf] %v460
  %469 = vst [vmem:[%s2 + $0x8] sm:$0xf] %v461
  %470 = vst [vmem:[%s2 + $0xc] sm:$0xf] %v462
  // Predicated region
  $region14: #{discriminator_forward.12} parent=0 // pred_check
    _
  $region15: #{discriminator_forward.12} parent=0 // pred_check_branch
    %472 = sbr.rel (0) target = $region17
  $region16: #{discriminator_forward.12} parent=0 // pred_region
    _
  $region17: #{discriminator_forward.12} parent=0 // pred_fallthru
    _
  // Predicated region
  $region18: #{discriminator_forward.12} parent=0 // pred_check
    _
  $region19: #{discriminator_forward.12} parent=0 // pred_check_branch
    %474 = sbr.rel (0) target = $region21
  $region20: #{discriminator_forward.12} parent=0 // pred_region
    _
  $region21: #{discriminator_forward.12} parent=0 // pred_fallthru
    _
  // Predicated region
  $region22: #{discriminator_forward.12} parent=0 // pred_check
    _
  $region23: #{discriminator_forward.12} parent=0 // pred_check_branch
    %476 = sbr.rel (0) target = $region25
  $region24: #{discriminator_forward.12} parent=0 // pred_region
    _
  $region25: #{discriminator_forward.12} parent=0 // pred_fallthru
    _
  // Predicated region
  $region26: #{discriminator_forward.12} parent=0 // pred_check
    _
  $region27: #{discriminator_forward.12} parent=0 // pred_check_branch
    %478 = sbr.rel (0) target = $region29
  $region28: #{discriminator_forward.12} parent=0 // pred_region
    _
  $region29: #{discriminator_forward.12} parent=0 // pred_fallthru
    _
  // Predicated region
  $region30: #{discriminator_forward.12} parent=0 // pred_check
    _
  $region31: #{discriminator_forward.12} parent=0 // pred_check_branch
    %480 = sbr.rel (0) target = $region33
  $region32: #{discriminator_forward.12} parent=0 // pred_region
    _
  $region33: #{discriminator_forward.12} parent=0 // pred_fallthru
    _
  // Predicated region
  $region34: #{discriminator_forward.12} parent=0 // pred_check
    _
  $region35: #{discriminator_forward.12} parent=0 // pred_check_branch
    %482 = sbr.rel (0) target = $region37
  $region36: #{discriminator_forward.12} parent=0 // pred_region
    _
  $region37: #{discriminator_forward.12} parent=0 // pred_fallthru
    _

</llo_original>
